<compile_context>
chip_gen: v7x
topology: tpu7x:2x2x1
jax: 0.10.0
libtpu: 0.0.40
codegen_flags: <defaults>
</compile_context>

<pallas_src>
import functools
import math

import jax
import jax.numpy as jnp
from jax import lax
from jax.experimental import pallas as pl
from jax.experimental.pallas import tpu as pltpu

BN_EPS = 1e-5
BN_SCALE = 1.0 / math.sqrt(1.0 + BN_EPS)   # eval-mode BatchNorm folded into weights
ACT_DT = jnp.bfloat16                      # inter-kernel activation dtype
_ROW_TILE = 1024                           # row tile for pointwise kernels
_SEQ_K_TILE = 4096                         # K tile for the seq-memory contraction


def _round_up(x, m):
    return -(-x // m) * m


# ----------------------------- Pallas kernels ------------------------------

def _softmax_rows(s):
    s = s - jnp.max(s, axis=-1, keepdims=True)
    e = jnp.exp(s)
    return e / jnp.sum(e, axis=-1, keepdims=True)


def _fc_stack_kernel(*refs, acts, scalar_in):
    """Fused stack of pointwise FC layers (BN folded into w).  cin==1 layers
    use a VPU broadcast-scale instead of a depth-1 MXU matmul."""
    x_ref, o_ref = refs[0], refs[-1]
    y = x_ref[...]
    for i, (act, sc) in enumerate(zip(acts, scalar_in)):
        w = refs[1 + 2 * i][...]
        b = refs[2 + 2 * i][...].astype(jnp.float32)
        if sc:
            y = y.astype(jnp.float32) * w.astype(jnp.float32) + b
        else:
            y = jnp.dot(y.astype(jnp.bfloat16), w,
                        preferred_element_type=jnp.float32) + b
        if act:
            y = jnp.maximum(y, 0.0)
    o_ref[...] = y.astype(o_ref.dtype)


def _self_attn_kernel(x_ref, ste_ref, wx_ref, ws_ref, b_ref, wo_ref, bo_ref,
                      o_ref, qkv_s, att_s, *, S, L, K, d, scale):
    """Fused multi-head self attention for one batch element.

    x_ref:   (1, R, Cx) with R = S*L, rows grouped into S contiguous segments
             of length L (attention runs within each segment).
    ste_ref: (R, D) batch-independent spatio-temporal embedding (same order).
    The QKV projection and the output FC run once over all R rows.
    """
    D = K * d
    x = x_ref[0]
    ste = ste_ref[...]
    qkv = jnp.dot(x.astype(jnp.bfloat16), wx_ref[...],
                  preferred_element_type=jnp.float32)
    qkv = qkv + jnp.dot(ste, ws_ref[...], preferred_element_type=jnp.float32)
    qkv = jnp.maximum(qkv + b_ref[...], 0.0)                  # (R, 3D) f32
    qkv_s[...] = qkv.astype(qkv_s.dtype)

    def seg_body(i, carry):
        rows = pl.ds(i * L, L)
        seg = qkv_s[rows, :]                                  # (L, 3D) bf16
        for h in range(K):
            q = seg[:, h * d:(h + 1) * d]
            kh = seg[:, D + h * d:D + (h + 1) * d]
            v = seg[:, 2 * D + h * d:2 * D + (h + 1) * d]
            s = lax.dot_general(q, kh, (((1,), (1,)), ((), ())),
                                preferred_element_type=jnp.float32) * scale
            p = _softmax_rows(s)
            att_s[h, rows, :] = jnp.dot(
                p.astype(jnp.bfloat16), v,
                preferred_element_type=jnp.float32).astype(att_s.dtype)
        return carry

    lax.fori_loop(0, S, seg_body, 0, unroll=S <= 16)

    wo = wo_ref[...]
    y = bo_ref[...].astype(jnp.float32)
    for h in range(K):                                        # no head concat
        y = y + jnp.dot(att_s[h], wo[h * d:(h + 1) * d, :],
                        preferred_element_type=jnp.float32)
    o_ref[0] = jnp.maximum(y, 0.0).astype(o_ref.dtype)


def _transform_probs_kernel(sp_ref, sh_ref, wq_ref, bq_ref, wk_ref, bk_ref,
                            o_ref, q_s, k_s, *, N, P, T, K, d, scale):
    """Batch-independent transform-attention probabilities (computed once)."""
    q = jnp.maximum(jnp.dot(sp_ref[...], wq_ref[...],
                            preferred_element_type=jnp.float32) + bq_ref[...], 0.0)
    k = jnp.maximum(jnp.dot(sh_ref[...], wk_ref[...],
                            preferred_element_type=jnp.float32) + bk_ref[...], 0.0)
    q_s[...] = q.astype(q_s.dtype)
    k_s[...] = k.astype(k_s.dtype)

    def body(n, carry):
        qn = q_s[pl.ds(n * P, P), :]
        kn = k_s[pl.ds(n * T, T), :]
        for h in range(K):
            s = lax.dot_general(qn[:, h * d:(h + 1) * d],
                                kn[:, h * d:(h + 1) * d],
                                (((1,), (1,)), ((), ())),
                                preferred_element_type=jnp.float32) * scale
            o_ref[n, h] = _softmax_rows(s).astype(o_ref.dtype)
        return carry

    lax.fori_loop(0, N, body, 0, unroll=N <= 16)


def _transform_apply_kernel(x_ref, probs_ref, wv_ref, bv_ref, wo_ref, bo_ref,
                            o_ref, v_s, att_s, *, N, T, P, K, d):
    """Per-batch part of transform attention: value projection (hoisted over
    all N*T rows), prob @ V per vertex/head, accumulated output FC."""
    D = K * d
    v = jnp.dot(x_ref[0], wv_ref[...], preferred_element_type=jnp.float32)
    v = jnp.maximum(v + bv_ref[...], 0.0)                     # (N*T, D)
    v_s[...] = v.astype(v_s.dtype)

    def body(n, carry):
        vn = v_s[pl.ds(n * T, T), :]                          # (T, D) bf16
        for h in range(K):
            pnh = probs_ref[n, h]                             # (P, T) bf16
            oh = jnp.dot(pnh, vn[:, h * d:(h + 1) * d],
                         preferred_element_type=jnp.float32)
            att_s[h, pl.ds(n * P, P), :] = oh.astype(att_s.dtype)
        return carry

    lax.fori_loop(0, N, body, 0, unroll=N <= 16)

    wo = wo_ref[...]
    y = bo_ref[...].astype(jnp.float32)
    for h in range(K):
        y = y + jnp.dot(att_s[h], wo[h * d:(h + 1) * d, :],
                        preferred_element_type=jnp.float32)
    o_ref[0] = jnp.maximum(y, 0.0).astype(o_ref.dtype)


def _gated_fusion_kernel(hs_ref, ht_ref, xres_ref, wxs_ref, wxt_ref, bxt_ref,
                         wh1_ref, bh1_ref, wh2_ref, bh2_ref, o_ref):
    """Fused gatedFusion + STAttBlock residual add."""
    hs = hs_ref[...]
    ht = ht_ref[...]
    xs = jnp.dot(hs, wxs_ref[...], preferred_element_type=jnp.float32)
    xt = jnp.dot(ht, wxt_ref[...], preferred_element_type=jnp.float32) + bxt_ref[...]
    z = jax.nn.sigmoid(xs + xt)
    hfuse = z * hs.astype(jnp.float32) + (1.0 - z) * ht.astype(jnp.float32)
    h1 = jnp.maximum(
        jnp.dot(hfuse.astype(jnp.bfloat16), wh1_ref[...],
                preferred_element_type=jnp.float32) + bh1_ref[...], 0.0)
    h2 = jnp.dot(h1.astype(jnp.bfloat16), wh2_ref[...],
                 preferred_element_type=jnp.float32) + bh2_ref[...]
    o_ref[...] = (xres_ref[...].astype(jnp.float32) + h2).astype(o_ref.dtype)


def _seq_memory_kernel(h_ref, wa_ref, mem_ref, fc_ref, o_ref, acc_s):
    """K-tiled h @ Wa accumulation, then softmax memory read-out."""
    k = pl.program_id(0)

    @pl.when(k == 0)
    def _():
        acc_s[...] = jnp.zeros_like(acc_s)

    acc_s[...] += jnp.dot(h_ref[...], wa_ref[...],
                          preferred_element_type=jnp.float32)

    @pl.when(k == pl.num_programs(0) - 1)
    def _():
        mem = mem_ref[...]                                    # (mn, md) bf16
        q = acc_s[...]                                        # (B, md) f32
        s = lax.dot_general(q.astype(jnp.bfloat16), mem,
                            (((1,), (1,)), ((), ())),
                            preferred_element_type=jnp.float32)
        p = _softmax_rows(s)
        proto = jnp.dot(p.astype(jnp.bfloat16), mem,
                        preferred_element_type=jnp.float32)
        o_ref[...] = jnp.dot(proto.astype(jnp.bfloat16), fc_ref[...],
                             preferred_element_type=jnp.float32).astype(o_ref.dtype)


def _st_memory_kernel(x_ref, wa_ref, mem_ref, fc_ref, o_ref):
    """Per-vertex memory query, all (batch, pred-step) rows at once."""
    x = x_ref[0]                                              # (B*P, D) bf16
    mem = mem_ref[0]                                          # (mn, md) bf16
    q = jnp.dot(x, wa_ref[...], preferred_element_type=jnp.float32)
    s = lax.dot_general(q.astype(jnp.bfloat16), mem,
                        (((1,), (1,)), ((), ())),
                        preferred_element_type=jnp.float32)
    p = _softmax_rows(s)
    proto = jnp.dot(p.astype(jnp.bfloat16), mem,
                    preferred_element_type=jnp.float32)
    o_ref[0] = jnp.dot(proto.astype(jnp.bfloat16), fc_ref[...],
                       preferred_element_type=jnp.float32).astype(o_ref.dtype)


def _mem_gate_kernel(x_ref, st_ref, seq_ref, o_ref, *, D):
    # X_new = concat([X, mem_st]) * sigmoid(concat([X, mem_seq]))
    x = x_ref[...].astype(jnp.float32)
    st = st_ref[...].astype(jnp.float32)
    sq = seq_ref[...].astype(jnp.float32)
    o_ref[:, :D] = (x * jax.nn.sigmoid(x)).astype(o_ref.dtype)
    o_ref[:, D:] = (st * jax.nn.sigmoid(sq)).astype(o_ref.dtype)


def _fc2_kernel(x_ref, w1_ref, b1_ref, w2r_ref, b2_ref, o_ref):
    """Final FC ([D+md -> D relu, D -> 1]); emits a lane-major (1, N) row."""
    x = x_ref[0]                                              # (N, Cin) bf16
    h1 = jnp.maximum(jnp.dot(x, w1_ref[...],
                             preferred_element_type=jnp.float32) + b1_ref[...], 0.0)
    y = lax.dot_general(w2r_ref[...], h1.astype(jnp.bfloat16),
                        (((1,), (1,)), ((), ())),
                        preferred_element_type=jnp.float32)   # (1, N)
    o_ref[0] = (y + b2_ref[...]).astype(o_ref.dtype)


# ------------------------------ kernel wrappers -----------------------------

def fc_stack(x, layers, acts, out_dtype=ACT_DT):
    cin = x.shape[-1]
    lead = x.shape[:-1]
    m = int(math.prod(lead))
    cout = layers[-1]['w'].shape[1]
    bm = min(_ROW_TILE, _round_up(m, 8))
    scalar_in = tuple(int(l['w'].shape[0]) == 1 for l in layers)
    xf = x.reshape(m, cin)
    operands = [xf]
    in_specs = [pl.BlockSpec((bm, cin), lambda i: (i, 0))]
    for lyr in layers:
        operands += [lyr['w'], lyr['b']]
        in_specs += [pl.BlockSpec(lyr['w'].shape, lambda i: (0, 0)),
                     pl.BlockSpec(lyr['b'].shape, lambda i: (0, 0))]
    out = pl.pallas_call(
        functools.partial(_fc_stack_kernel, acts=tuple(acts), scalar_in=scalar_in),
        out_shape=jax.ShapeDtypeStruct((m, cout), out_dtype),
        grid=(pl.cdiv(m, bm),),
        in_specs=in_specs,
        out_specs=pl.BlockSpec((bm, cout), lambda i: (i, 0)),
        compiler_params=pltpu.CompilerParams(dimension_semantics=("parallel",)),
    )(*operands)
    return out.reshape(*lead, cout)


def self_attention(p, x_rows, ste_rows, S, L, K, d):
    """x_rows: (B, S*L, Cx); attention within S contiguous segments of length L."""
    B, R, Cx = x_rows.shape
    D = K * d
    kern = functools.partial(_self_attn_kernel, S=S, L=L, K=K, d=d,
                             scale=1.0 / math.sqrt(d))
    return pl.pallas_call(
        kern,
        out_shape=jax.ShapeDtypeStruct((B, R, D), ACT_DT),
        grid=(B,),
        in_specs=[
            pl.BlockSpec((1, R, Cx), lambda b: (b, 0, 0)),
            pl.BlockSpec((R, D), lambda b: (0, 0)),
            pl.BlockSpec(p['wx'].shape, lambda b: (0, 0)),
            pl.BlockSpec(p['ws'].shape, lambda b: (0, 0)),
            pl.BlockSpec(p['b'].shape, lambda b: (0, 0)),
            pl.BlockSpec(p['wo'].shape, lambda b: (0, 0)),
            pl.BlockSpec(p['bo'].shape, lambda b: (0, 0)),
        ],
        out_specs=pl.BlockSpec((1, R, D), lambda b: (b, 0, 0)),
        scratch_shapes=[pltpu.VMEM((R, 3 * D), jnp.bfloat16),
                        pltpu.VMEM((K, R, d), jnp.bfloat16)],
        compiler_params=pltpu.CompilerParams(dimension_semantics=("parallel",)),
    )(x_rows, ste_rows, p['wx'], p['ws'], p['b'], p['wo'], p['bo'])


def gated_fusion(p, HS, HT, Xres):
    """Fused gatedFusion + residual add (row-tiled)."""
    B, R, D = HS.shape
    Dout = Xres.shape[-1]
    m = B * R
    bm = min(_ROW_TILE, _round_up(m, 8))
    out = pl.pallas_call(
        _gated_fusion_kernel,
        out_shape=jax.ShapeDtypeStruct((m, Dout), ACT_DT),
        grid=(pl.cdiv(m, bm),),
        in_specs=[pl.BlockSpec((bm, D), lambda i: (i, 0)),
                  pl.BlockSpec((bm, D), lambda i: (i, 0)),
                  pl.BlockSpec((bm, Dout), lambda i: (i, 0)),
                  pl.BlockSpec(p['wxs'].shape, lambda i: (0, 0)),
                  pl.BlockSpec(p['wxt'].shape, lambda i: (0, 0)),
                  pl.BlockSpec(p['bxt'].shape, lambda i: (0, 0)),
                  pl.BlockSpec(p['wh1'].shape, lambda i: (0, 0)),
                  pl.BlockSpec(p['bh1'].shape, lambda i: (0, 0)),
                  pl.BlockSpec(p['wh2'].shape, lambda i: (0, 0)),
                  pl.BlockSpec(p['bh2'].shape, lambda i: (0, 0))],
        out_specs=pl.BlockSpec((bm, Dout), lambda i: (i, 0)),
        compiler_params=pltpu.CompilerParams(dimension_semantics=("parallel",)),
    )(HS.reshape(m, D), HT.reshape(m, D), Xres.reshape(m, Dout),
      p['wxs'], p['wxt'], p['bxt'], p['wh1'], p['bh1'], p['wh2'], p['bh2'])
    return out.reshape(B, R, Dout)


def st_att_block(p, X, ste_tn, ste_nt, K, d):
    """spatial attn + temporal attn + gated fusion (+residual)."""
    B, T, N, Cx = X.shape
    D = K * d
    HS = self_attention(p['spatial'], X.reshape(B, T * N, Cx), ste_tn,
                        S=T, L=N, K=K, d=d)                       # (B, T*N, D)
    Xp = jnp.transpose(X, (0, 2, 1, 3)).reshape(B, N * T, Cx)     # (n,t) order
    HT = self_attention(p['temporal'], Xp, ste_nt, S=N, L=T, K=K, d=d)
    HT = jnp.transpose(HT.reshape(B, N, T, D), (0, 2, 1, 3)).reshape(B, T * N, D)
    out = gated_fusion(p['gated'], HS, HT, X.reshape(B, T * N, Cx))
    return out.reshape(B, T, N, Cx)


def transform_probs(p, ste_pred_nt, ste_his_nt, N, P, T, K, d):
    """Batch-independent transform-attention probabilities (setup time)."""
    D = K * d
    kern = functools.partial(_transform_probs_kernel, N=N, P=P, T=T, K=K, d=d,
                             scale=1.0 / math.sqrt(d))
    return pl.pallas_call(
        kern,
        out_shape=jax.ShapeDtypeStruct((N, K, P, T), jnp.bfloat16),
        grid=(1,),
        in_specs=[pl.BlockSpec((N * P, D), lambda i: (0, 0)),
                  pl.BlockSpec((N * T, D), lambda i: (0, 0)),
                  pl.BlockSpec(p['wq'].shape, lambda i: (0, 0)),
                  pl.BlockSpec(p['bq'].shape, lambda i: (0, 0)),
                  pl.BlockSpec(p['wk'].shape, lambda i: (0, 0)),
                  pl.BlockSpec(p['bk'].shape, lambda i: (0, 0))],
        out_specs=pl.BlockSpec((N, K, P, T), lambda i: (0, 0, 0, 0)),
        scratch_shapes=[pltpu.VMEM((N * P, D), jnp.bfloat16),
                        pltpu.VMEM((N * T, D), jnp.bfloat16)],
        compiler_params=pltpu.CompilerParams(dimension_semantics=("arbitrary",)),
    )(ste_pred_nt, ste_his_nt, p['wq'], p['bq'], p['wk'], p['bk'])


def transform_attention(p, X, probs, K, d):
    B, T, N, D = X.shape
    P = probs.shape[2]
    Xp = jnp.transpose(X, (0, 2, 1, 3)).reshape(B, N * T, D)      # (n,t) order
    kern = functools.partial(_transform_apply_kernel, N=N, T=T, P=P, K=K, d=d)
    out = pl.pallas_call(
        kern,
        out_shape=jax.ShapeDtypeStruct((B, N * P, D), ACT_DT),
        grid=(B,),
        in_specs=[pl.BlockSpec((1, N * T, D), lambda b: (b, 0, 0)),
                  pl.BlockSpec(probs.shape, lambda b: (0, 0, 0, 0)),
                  pl.BlockSpec(p['wv'].shape, lambda b: (0, 0)),
                  pl.BlockSpec(p['bv'].shape, lambda b: (0, 0)),
                  pl.BlockSpec(p['wo'].shape, lambda b: (0, 0)),
                  pl.BlockSpec(p['bo'].shape, lambda b: (0, 0))],
        out_specs=pl.BlockSpec((1, N * P, D), lambda b: (b, 0, 0)),
        scratch_shapes=[pltpu.VMEM((N * T, D), jnp.bfloat16),
                        pltpu.VMEM((K, N * P, d), jnp.bfloat16)],
        compiler_params=pltpu.CompilerParams(dimension_semantics=("parallel",)),
    )(Xp, probs, p['wv'], p['bv'], p['wo'], p['bo'])
    return jnp.transpose(out.reshape(B, N, P, D), (0, 2, 1, 3))   # (B, P, N, D)


def seq_memory(p, X, P, N, md):
    B = X.shape[0]
    D = X.shape[-1]
    pnd = P * N * D
    h = X.reshape(B, pnd)
    kt = pnd if pnd <= _SEQ_K_TILE else _SEQ_K_TILE
    pad = (-pnd) % kt
    wa = p['Wa']
    if pad:
        h = jnp.pad(h, ((0, 0), (0, pad)))
        wa = jnp.pad(wa, ((0, pad), (0, 0)))
    nk = (pnd + pad) // kt
    out_w = md * N * P
    out = pl.pallas_call(
        _seq_memory_kernel,
        out_shape=jax.ShapeDtypeStruct((B, out_w), ACT_DT),
        grid=(nk,),
        in_specs=[pl.BlockSpec((B, kt), lambda k: (0, k)),
                  pl.BlockSpec((kt, md), lambda k: (k, 0)),
                  pl.BlockSpec(p['memory'].shape, lambda k: (0, 0)),
                  pl.BlockSpec(p['fc'].shape, lambda k: (0, 0))],
        out_specs=pl.BlockSpec((B, out_w), lambda k: (0, 0)),
        scratch_shapes=[pltpu.VMEM((B, md), jnp.float32)],
        compiler_params=pltpu.CompilerParams(dimension_semantics=("arbitrary",)),
    )(h, wa, p['memory'], p['fc'])
    return out.reshape(B, P, N, md)


def st_memory(p, X, md):
    B, P, N, D = X.shape
    Xt = jnp.transpose(X, (2, 0, 1, 3)).reshape(N, B * P, D)
    out = pl.pallas_call(
        _st_memory_kernel,
        out_shape=jax.ShapeDtypeStruct((N, B * P, md), ACT_DT),
        grid=(N,),
        in_specs=[pl.BlockSpec((1, B * P, D), lambda n: (n, 0, 0)),
                  pl.BlockSpec(p['Wa'].shape, lambda n: (0, 0)),
                  pl.BlockSpec((1,) + p['memory'].shape[1:], lambda n: (n, 0, 0)),
                  pl.BlockSpec(p['fc'].shape, lambda n: (0, 0))],
        out_specs=pl.BlockSpec((1, B * P, md), lambda n: (n, 0, 0)),
        compiler_params=pltpu.CompilerParams(dimension_semantics=("parallel",)),
    )(Xt, p['Wa'], p['memory'], p['fc'])
    return jnp.transpose(out.reshape(N, B, P, md), (1, 2, 0, 3))  # (B,P,N,md)


def mem_gate(X, mem_st, mem_seq):
    B, P, N, D = X.shape
    md = mem_st.shape[-1]
    m = B * P * N
    bm = min(_ROW_TILE, _round_up(m, 8))
    out = pl.pallas_call(
        functools.partial(_mem_gate_kernel, D=D),
        out_shape=jax.ShapeDtypeStruct((m, D + md), ACT_DT),
        grid=(pl.cdiv(m, bm),),
        in_specs=[pl.BlockSpec((bm, D), lambda i: (i, 0)),
                  pl.BlockSpec((bm, md), lambda i: (i, 0)),
                  pl.BlockSpec((bm, md), lambda i: (i, 0))],
        out_specs=pl.BlockSpec((bm, D + md), lambda i: (i, 0)),
        compiler_params=pltpu.CompilerParams(dimension_semantics=("parallel",)),
    )(X.reshape(m, D), mem_st.reshape(m, md), mem_seq.reshape(m, md))
    return out.reshape(B, P, N, D + md)


def fc_out(layers, X):
    """FC_2: (B,P,N,D+md) -> (B,P,N), output stored lane-major per (b,p)."""
    B, P, N, Cin = X.shape
    D = layers[0]['w'].shape[1]
    X3 = X.reshape(B * P, N, Cin)
    w2r = layers[1]['w'].reshape(1, D)               # (D,1) -> (1,D)
    out = pl.pallas_call(
        _fc2_kernel,
        out_shape=jax.ShapeDtypeStruct((B * P, 1, N), jnp.float32),
        grid=(B * P,),
        in_specs=[pl.BlockSpec((1, N, Cin), lambda i: (i, 0, 0)),
                  pl.BlockSpec(layers[0]['w'].shape, lambda i: (0, 0)),
                  pl.BlockSpec(layers[0]['b'].shape, lambda i: (0, 0)),
                  pl.BlockSpec((1, D), lambda i: (0, 0)),
                  pl.BlockSpec(layers[1]['b'].shape, lambda i: (0, 0))],
        out_specs=pl.BlockSpec((1, 1, N), lambda i: (i, 0, 0)),
        compiler_params=pltpu.CompilerParams(dimension_semantics=("parallel",)),
    )(X3, layers[0]['w'], layers[0]['b'], w2r, layers[1]['b'])
    return out.reshape(B, P, N)


# ------------------------------ parameter init ------------------------------

def _xavier_uniform(key, cin, cout):
    a = math.sqrt(6.0 / (cin + cout))
    return jax.random.uniform(key, (cin, cout), jnp.float32, minval=-a, maxval=a)


def _xavier_normal(key, shape, fan_in, fan_out):
    std = math.sqrt(2.0 / (fan_in + fan_out))
    return std * jax.random.normal(key, shape, jnp.float32)


def _w(key, cin, cout):
    return (_xavier_uniform(key, cin, cout) * BN_SCALE).astype(jnp.bfloat16)


def make_fc(key, in_dims, units):
    keys = jax.random.split(key, len(units))
    return [dict(w=_w(k, cin, cout), b=jnp.zeros((1, cout), jnp.float32))
            for k, cin, cout in zip(keys, in_dims, units)]


def self_attn_params(key, cx, K, d):
    D = K * d
    kq, kk, kv, ko = jax.random.split(key, 4)
    cin = cx + D                                     # channels of concat([X, STE])
    wq = _xavier_uniform(kq, cin, D) * BN_SCALE
    wk = _xavier_uniform(kk, cin, D) * BN_SCALE
    wv = _xavier_uniform(kv, cin, D) * BN_SCALE
    wqkv = jnp.concatenate([wq, wk, wv], axis=1).astype(jnp.bfloat16)
    return dict(wx=wqkv[:cx], ws=wqkv[cx:],
                b=jnp.zeros((1, 3 * D), jnp.float32),
                wo=_w(ko, D, D),
                bo=jnp.zeros((1, D), jnp.float32))


def cross_attn_params(key, K, d):
    D = K * d
    kq, kk, kv, ko = jax.random.split(key, 4)
    z = lambda n: jnp.zeros((1, n), jnp.float32)
    return dict(wq=_w(kq, D, D), bq=z(D),
                wk=_w(kk, D, D), bk=z(D),
                wv=_w(kv, D, D), bv=z(D),
                wo=_w(ko, D, D), bo=z(D))


def gated_params(key, D, m):
    ks = jax.random.split(key, 4)
    z = lambda n: jnp.zeros((1, n), jnp.float32)
    return dict(wxs=_w(ks[0], D, D),                 # FC_xs: use_bias=False
                wxt=_w(ks[1], D, D), bxt=z(D),
                wh1=_w(ks[2], D, D), bh1=z(D),
                wh2=_w(ks[3], D, D + m), bh2=z(D + m))


def init_params(key, cfg):
    K, d = cfg['K'], cfg['d']
    D = K * d
    N, P = cfg['N'], cfg['num_pred']
    md, mn = cfg['mem_dim'], cfg['mem_num']
    SE_dim = cfg['SE_dim']
    TE_dim = cfg['num_his'] + cfg['num_pred']
    kit = iter(jax.random.split(key, 64))
    nk = lambda: next(kit)

    def block_params(cx, m):
        return dict(spatial=self_attn_params(nk(), cx, K, d),
                    temporal=self_attn_params(nk(), cx, K, d),
                    gated=gated_params(nk(), D, m))

    bf = lambda a: a.astype(jnp.bfloat16)
    return dict(
        FC_1=make_fc(nk(), [1, D], [D, D]),
        FC_tw=make_fc(nk(), [1, D], [D, D]),
        STE=dict(FC_se=make_fc(nk(), [SE_dim, D], [D, D]),
                 FC_te=make_fc(nk(), [TE_dim, D], [D, D])),
        STAttBlock_1=[block_params(D, 0) for _ in range(cfg['L'])],
        STAttBlock_2=[block_params(D + md, md) for _ in range(cfg['L'])],
        transformAttention=cross_attn_params(nk(), K, d),
        FC_2=make_fc(nk(), [D + md, D], [D, 1]),
        seq_memory=dict(
            memory=bf(_xavier_normal(nk(), (mn, md), md, mn)),
            Wa=bf(_xavier_normal(nk(), (P * N * D, md), md, P * N * D)),
            fc=bf(_xavier_normal(nk(), (md, md * N * P), md * N * P, md))),
        st_memory=dict(
            memory=bf(_xavier_normal(nk(), (N, mn, md), mn * md, N * md)),
            Wa=bf(_xavier_normal(nk(), (D, md), md, D)),
            fc=bf(_xavier_normal(nk(), (md, md), md, md))),
    )


# --------------------------- input-independent setup ------------------------

def prepare_static(params, SE, cfg):
    """STE (SE / one-hot TE are input independent) and the batch-independent
    transform-attention probabilities, computed once at setup."""
    K, d = cfg['K'], cfg['d']
    D = K * d
    Th, P, N = cfg['num_his'], cfg['num_pred'], cfg['N']
    se = fc_stack(SE, params['STE']['FC_se'], (True, False))          # (N, D)
    te = fc_stack(jnp.eye(Th + P, dtype=jnp.float32),
                  params['STE']['FC_te'], (True, False))              # (Th+P, D)
    STE = (te[:, None, :].astype(jnp.float32)
           + se[None, :, :].astype(jnp.float32)).astype(ACT_DT)       # (Th+P, N, D)
    STE_his, STE_pred = STE[:Th], STE[Th:]
    ste = dict(
        his_tn=STE_his.reshape(Th * N, D),
        his_nt=jnp.transpose(STE_his, (1, 0, 2)).reshape(N * Th, D),
        pred_tn=STE_pred.reshape(P * N, D),
        pred_nt=jnp.transpose(STE_pred, (1, 0, 2)).reshape(N * P, D),
    )
    probs = transform_probs(params['transformAttention'],
                            ste['pred_nt'], ste['his_nt'],
                            N=N, P=P, T=Th, K=K, d=d)
    return dict(ste=ste, probs=probs)


# ------------------------------- forward pass -------------------------------

def memory_gman_forward(params, static, X_in, TE, cfg):
    K, d = cfg['K'], cfg['d']
    P = cfg['num_pred']
    md = cfg['mem_dim']
    B, _, N, _ = X_in.shape
    ste = static['ste']
    # TE contents are unused: the torch module overwrites them with a fixed
    # one-hot time encoding, which is folded into the precomputed STE.
    del TE

    X = fc_stack(X_in[..., 0:1], params['FC_1'], (True, False))       # (B,Th,N,D)
    # computed-but-unused in the torch forward as well; DCE'd under jax.jit
    _TW = fc_stack(X_in[..., -1:], params['FC_tw'], (True, False))

    for blk in params['STAttBlock_1']:
        X = st_att_block(blk, X, ste['his_tn'], ste['his_nt'], K, d)

    X = transform_attention(params['transformAttention'], X,
                            static['probs'], K, d)                    # (B,P,N,D)

    mem_seq = seq_memory(params['seq_memory'], X, P, N, md)           # (B,P,N,md)
    mem_st = st_memory(params['st_memory'], X, md)                    # (B,P,N,md)
    X = mem_gate(X, mem_st, mem_seq)                                  # (B,P,N,D+md)

    for blk in params['STAttBlock_2']:
        X = st_att_block(blk, X, ste['pred_tn'], ste['pred_nt'], K, d)

    return fc_out(params['FC_2'], X)                                  # (B,P,N)


# ----------------------------------- main -----------------------------------

if __name__ == "__main__":
    cfg = dict(B=2, num_his=4, num_pred=3, N=10, SE_dim=16,
               K=2, d=8, mem_num=6, mem_dim=8, L=1)

    key = jax.random.PRNGKey(0)
    k_param, k_x, k_te, k_se = jax.random.split(key, 4)

    params = init_params(k_param, cfg)
    # X: [batch, num_his, num_vertex, 2] (feature 0 = value, feature -1 = time weight)
    X = jax.random.normal(k_x, (cfg['B'], cfg['num_his'], cfg['N'], 2), jnp.float32)
    # TE: [batch, num_his + num_pred, 2] (shape-only; contents unused by forward)
    TE = jax.random.randint(k_te, (cfg['B'], cfg['num_his'] + cfg['num_pred'], 2),
                            0, 7).astype(jnp.float32)
    # SE: [num_vertex, SE_dim]
    SE = jax.random.normal(k_se, (cfg['N'], cfg['SE_dim']), jnp.float32)

    static = jax.jit(functools.partial(prepare_static, cfg=cfg))(params, SE)
    fwd = jax.jit(functools.partial(memory_gman_forward, cfg=cfg))
    out = jax.block_until_ready(fwd(params, static, X, TE))

    assert out.shape == (cfg['B'], cfg['num_pred'], cfg['N'])
    assert bool(jnp.all(jnp.isfinite(out)))
    print("KERNEL_OK")
</pallas_src>

<mosaic_0001>
module attributes {stable_mosaic.version = 11 : i64} {
  func.func @_fc_stack_kernel(%arg0: i32, %arg1: memref<16x16xf32, #tpu.memory_space<vmem>>, %arg2: memref<16x16xbf16, #tpu.memory_space<vmem>>, %arg3: memref<1x16xf32, #tpu.memory_space<vmem>>, %arg4: memref<16x16xbf16, #tpu.memory_space<vmem>>, %arg5: memref<1x16xf32, #tpu.memory_space<vmem>>, %arg6: memref<16x16xbf16, #tpu.memory_space<vmem>>) attributes {dimension_semantics = [#tpu.dimension_semantics<parallel>], iteration_bounds = array<i64: 1>, scalar_prefetch = 0 : i64, scratch_operands = 0 : i64, tpu.core_type = #tpu.core_type<tc>, window_params = [{transform_indices = @transform_0, window_bounds = array<i64: 16, 16>}, {pipeline_mode = #tpu.pipeline_mode<synchronous>, transform_indices = @transform_1, window_bounds = array<i64: 16, 16>}, {pipeline_mode = #tpu.pipeline_mode<synchronous>, transform_indices = @transform_2, window_bounds = array<i64: 1, 16>}, {pipeline_mode = #tpu.pipeline_mode<synchronous>, transform_indices = @transform_3, window_bounds = array<i64: 16, 16>}, {pipeline_mode = #tpu.pipeline_mode<synchronous>, transform_indices = @transform_4, window_bounds = array<i64: 1, 16>}, {transform_indices = @transform_5, window_bounds = array<i64: 16, 16>}]} {
    %c0 = arith.constant 0 : index
    %c0_0 = arith.constant 0 : index
    %0 = vector.load %arg1[%c0, %c0_0] : memref<16x16xf32, #tpu.memory_space<vmem>>, vector<16x16xf32>
    %c0_1 = arith.constant 0 : index
    %c0_2 = arith.constant 0 : index
    %1 = vector.load %arg2[%c0_1, %c0_2] : memref<16x16xbf16, #tpu.memory_space<vmem>>, vector<16x16xbf16>
    %c0_3 = arith.constant 0 : index
    %c0_4 = arith.constant 0 : index
    %2 = vector.load %arg3[%c0_3, %c0_4] : memref<1x16xf32, #tpu.memory_space<vmem>>, vector<1x16xf32>
    %3 = arith.truncf %0 : vector<16x16xf32> to vector<16x16xbf16>
    %cst = arith.constant dense<0.000000e+00> : vector<16x16xf32>
    %4 = tpu.matmul %3, %1, %cst {dimension_numbers = #tpu.dot_dimension_numbers<[1], [0], [0], [1], [0, 0, 1, 1], [], []>} : vector<16x16xbf16>, vector<16x16xbf16>, vector<16x16xf32> -> vector<16x16xf32>
    %5 = vector.broadcast %2 : vector<1x16xf32> to vector<16x16xf32>
    %6 = arith.addf %4, %5 : vector<16x16xf32>
    %cst_5 = arith.constant 0.000000e+00 : f32
    %7 = vector.broadcast %cst_5 : f32 to vector<16x16xf32>
    %8 = arith.maximumf %6, %7 : vector<16x16xf32>
    %c0_6 = arith.constant 0 : index
    %c0_7 = arith.constant 0 : index
    %9 = vector.load %arg4[%c0_6, %c0_7] : memref<16x16xbf16, #tpu.memory_space<vmem>>, vector<16x16xbf16>
    %c0_8 = arith.constant 0 : index
    %c0_9 = arith.constant 0 : index
    %10 = vector.load %arg5[%c0_8, %c0_9] : memref<1x16xf32, #tpu.memory_space<vmem>>, vector<1x16xf32>
    %11 = arith.truncf %8 : vector<16x16xf32> to vector<16x16xbf16>
    %cst_10 = arith.constant dense<0.000000e+00> : vector<16x16xf32>
    %12 = tpu.matmul %11, %9, %cst_10 {dimension_numbers = #tpu.dot_dimension_numbers<[1], [0], [0], [1], [0, 0, 1, 1], [], []>} : vector<16x16xbf16>, vector<16x16xbf16>, vector<16x16xf32> -> vector<16x16xf32>
    %13 = vector.broadcast %10 : vector<1x16xf32> to vector<16x16xf32>
    %14 = arith.addf %12, %13 : vector<16x16xf32>
    %15 = arith.truncf %14 : vector<16x16xf32> to vector<16x16xbf16>
    %c0_11 = arith.constant 0 : index
    %c0_12 = arith.constant 0 : index
    %16 = vector.load %arg6[%c0_11, %c0_12] : memref<16x16xbf16, #tpu.memory_space<vmem>>, vector<16x16xbf16>
    tpu.vector_store %arg6[%c0_11, %c0_12], %15 {strides = array<i32>} : memref<16x16xbf16, #tpu.memory_space<vmem>>, vector<16x16xbf16>,
    return
  }
  func.func @transform_0(%arg0: i32) -> (i32, i32) {
    %c0_i32 = arith.constant 0 : i32
    %c0_i32_0 = arith.constant 0 : i32
    return %arg0, %c0_i32 : i32, i32
  }
  func.func @transform_1(%arg0: i32) -> (i32, i32) {
    %c0_i32 = arith.constant 0 : i32
    %c0_i32_0 = arith.constant 0 : i32
    %c0_i32_1 = arith.constant 0 : i32
    return %c0_i32, %c0_i32_0 : i32, i32
  }
  func.func @transform_2(%arg0: i32) -> (i32, i32) {
    %c0_i32 = arith.constant 0 : i32
    %c0_i32_0 = arith.constant 0 : i32
    %c0_i32_1 = arith.constant 0 : i32
    return %c0_i32, %c0_i32_0 : i32, i32
  }
  func.func @transform_3(%arg0: i32) -> (i32, i32) {
    %c0_i32 = arith.constant 0 : i32
    %c0_i32_0 = arith.constant 0 : i32
    %c0_i32_1 = arith.constant 0 : i32
    return %c0_i32, %c0_i32_0 : i32, i32
  }
  func.func @transform_4(%arg0: i32) -> (i32, i32) {
    %c0_i32 = arith.constant 0 : i32
    %c0_i32_0 = arith.constant 0 : i32
    %c0_i32_1 = arith.constant 0 : i32
    return %c0_i32, %c0_i32_0 : i32, i32
  }
  func.func @transform_5(%arg0: i32) -> (i32, i32) {
    %c0_i32 = arith.constant 0 : i32
    %c0_i32_0 = arith.constant 0 : i32
    return %arg0, %c0_i32 : i32, i32
  }
}

module attributes {stable_mosaic.version = 11 : i64} {
  func.func @_fc_stack_kernel(%arg0: i32, %arg1: memref<8x7xf32, #tpu.memory_space<vmem>>, %arg2: memref<7x16xbf16, #tpu.memory_space<vmem>>, %arg3: memref<1x16xf32, #tpu.memory_space<vmem>>, %arg4: memref<16x16xbf16, #tpu.memory_space<vmem>>, %arg5: memref<1x16xf32, #tpu.memory_space<vmem>>, %arg6: memref<8x16xbf16, #tpu.memory_space<vmem>>) attributes {dimension_semantics = [#tpu.dimension_semantics<parallel>], iteration_bounds = array<i64: 1>, scalar_prefetch = 0 : i64, scratch_operands = 0 : i64, tpu.core_type = #tpu.core_type<tc>, window_params = [{transform_indices = @transform_0, window_bounds = array<i64: 8, 7>}, {pipeline_mode = #tpu.pipeline_mode<synchronous>, transform_indices = @transform_1, window_bounds = array<i64: 7, 16>}, {pipeline_mode = #tpu.pipeline_mode<synchronous>, transform_indices = @transform_2, window_bounds = array<i64: 1, 16>}, {pipeline_mode = #tpu.pipeline_mode<synchronous>, transform_indices = @transform_3, window_bounds = array<i64: 16, 16>}, {pipeline_mode = #tpu.pipeline_mode<synchronous>, transform_indices = @transform_4, window_bounds = array<i64: 1, 16>}, {transform_indices = @transform_5, window_bounds = array<i64: 8, 16>}]} {
    %c0 = arith.constant 0 : index
    %c0_0 = arith.constant 0 : index
    %0 = vector.load %arg1[%c0, %c0_0] : memref<8x7xf32, #tpu.memory_space<vmem>>, vector<8x7xf32>
    %c0_1 = arith.constant 0 : index
    %c0_2 = arith.constant 0 : index
    %1 = vector.load %arg2[%c0_1, %c0_2] : memref<7x16xbf16, #tpu.memory_space<vmem>>, vector<7x16xbf16>
    %c0_3 = arith.constant 0 : index
    %c0_4 = arith.constant 0 : index
    %2 = vector.load %arg3[%c0_3, %c0_4] : memref<1x16xf32, #tpu.memory_space<vmem>>, vector<1x16xf32>
    %3 = arith.truncf %0 : vector<8x7xf32> to vector<8x7xbf16>
    %cst = arith.constant dense<0.000000e+00> : vector<8x16xf32>
    %4 = tpu.matmul %3, %1, %cst {dimension_numbers = #tpu.dot_dimension_numbers<[1], [0], [0], [1], [0, 0, 1, 1], [], []>} : vector<8x7xbf16>, vector<7x16xbf16>, vector<8x16xf32> -> vector<8x16xf32>
    %5 = vector.broadcast %2 : vector<1x16xf32> to vector<8x16xf32>
    %6 = arith.addf %4, %5 : vector<8x16xf32>
    %cst_5 = arith.constant 0.000000e+00 : f32
    %7 = vector.broadcast %cst_5 : f32 to vector<8x16xf32>
    %8 = arith.maximumf %6, %7 : vector<8x16xf32>
    %c0_6 = arith.constant 0 : index
    %c0_7 = arith.constant 0 : index
    %9 = vector.load %arg4[%c0_6, %c0_7] : memref<16x16xbf16, #tpu.memory_space<vmem>>, vector<16x16xbf16>
    %c0_8 = arith.constant 0 : index
    %c0_9 = arith.constant 0 : index
    %10 = vector.load %arg5[%c0_8, %c0_9] : memref<1x16xf32, #tpu.memory_space<vmem>>, vector<1x16xf32>
    %11 = arith.truncf %8 : vector<8x16xf32> to vector<8x16xbf16>
    %cst_10 = arith.constant dense<0.000000e+00> : vector<8x16xf32>
    %12 = tpu.matmul %11, %9, %cst_10 {dimension_numbers = #tpu.dot_dimension_numbers<[1], [0], [0], [1], [0, 0, 1, 1], [], []>} : vector<8x16xbf16>, vector<16x16xbf16>, vector<8x16xf32> -> vector<8x16xf32>
    %13 = vector.broadcast %10 : vector<1x16xf32> to vector<8x16xf32>
    %14 = arith.addf %12, %13 : vector<8x16xf32>
    %15 = arith.truncf %14 : vector<8x16xf32> to vector<8x16xbf16>
    %c0_11 = arith.constant 0 : index
    %c0_12 = arith.constant 0 : index
    %16 = vector.load %arg6[%c0_11, %c0_12] : memref<8x16xbf16, #tpu.memory_space<vmem>>, vector<8x16xbf16>
    tpu.vector_store %arg6[%c0_11, %c0_12], %15 {strides = array<i32>} : memref<8x16xbf16, #tpu.memory_space<vmem>>, vector<8x16xbf16>,
    return
  }
  func.func @transform_0(%arg0: i32) -> (i32, i32) {
    %c0_i32 = arith.constant 0 : i32
    %c0_i32_0 = arith.constant 0 : i32
    return %arg0, %c0_i32 : i32, i32
  }
  func.func @transform_1(%arg0: i32) -> (i32, i32) {
    %c0_i32 = arith.constant 0 : i32
    %c0_i32_0 = arith.constant 0 : i32
    %c0_i32_1 = arith.constant 0 : i32
    return %c0_i32, %c0_i32_0 : i32, i32
  }
  func.func @transform_2(%arg0: i32) -> (i32, i32) {
    %c0_i32 = arith.constant 0 : i32
    %c0_i32_0 = arith.constant 0 : i32
    %c0_i32_1 = arith.constant 0 : i32
    return %c0_i32, %c0_i32_0 : i32, i32
  }
  func.func @transform_3(%arg0: i32) -> (i32, i32) {
    %c0_i32 = arith.constant 0 : i32
    %c0_i32_0 = arith.constant 0 : i32
    %c0_i32_1 = arith.constant 0 : i32
    return %c0_i32, %c0_i32_0 : i32, i32
  }
  func.func @transform_4(%arg0: i32) -> (i32, i32) {
    %c0_i32 = arith.constant 0 : i32
    %c0_i32_0 = arith.constant 0 : i32
    %c0_i32_1 = arith.constant 0 : i32
    return %c0_i32, %c0_i32_0 : i32, i32
  }
  func.func @transform_5(%arg0: i32) -> (i32, i32) {
    %c0_i32 = arith.constant 0 : i32
    %c0_i32_0 = arith.constant 0 : i32
    return %arg0, %c0_i32 : i32, i32
  }
}

module attributes {stable_mosaic.version = 11 : i64} {
  func.func @_transform_probs_kernel(%arg0: i32, %arg1: memref<30x16xbf16, #tpu.memory_space<vmem>>, %arg2: memref<40x16xbf16, #tpu.memory_space<vmem>>, %arg3: memref<16x16xbf16, #tpu.memory_space<vmem>>, %arg4: memref<1x16xf32, #tpu.memory_space<vmem>>, %arg5: memref<16x16xbf16, #tpu.memory_space<vmem>>, %arg6: memref<1x16xf32, #tpu.memory_space<vmem>>, %arg7: memref<10x2x3x4xbf16, #tpu.memory_space<vmem>>, %arg8: memref<30x16xbf16, #tpu.memory_space<vmem>>, %arg9: memref<40x16xbf16, #tpu.memory_space<vmem>>) attributes {dimension_semantics = [#tpu.dimension_semantics<arbitrary>], iteration_bounds = array<i64: 1>, scalar_prefetch = 0 : i64, scratch_operands = 2 : i64, tpu.core_type = #tpu.core_type<tc>, window_params = [{pipeline_mode = #tpu.pipeline_mode<synchronous>, transform_indices = @transform_0, window_bounds = array<i64: 30, 16>}, {pipeline_mode = #tpu.pipeline_mode<synchronous>, transform_indices = @transform_1, window_bounds = array<i64: 40, 16>}, {pipeline_mode = #tpu.pipeline_mode<synchronous>, transform_indices = @transform_2, window_bounds = array<i64: 16, 16>}, {pipeline_mode = #tpu.pipeline_mode<synchronous>, transform_indices = @transform_3, window_bounds = array<i64: 1, 16>}, {pipeline_mode = #tpu.pipeline_mode<synchronous>, transform_indices = @transform_4, window_bounds = array<i64: 16, 16>}, {pipeline_mode = #tpu.pipeline_mode<synchronous>, transform_indices = @transform_5, window_bounds = array<i64: 1, 16>}, {pipeline_mode = #tpu.pipeline_mode<synchronous>, transform_indices = @transform_6, window_bounds = array<i64: 10, 2, 3, 4>}]} {
    %c0 = arith.constant 0 : index
    %c0_0 = arith.constant 0 : index
    %0 = vector.load %arg1[%c0, %c0_0] : memref<30x16xbf16, #tpu.memory_space<vmem>>, vector<30x16xbf16>
    %c0_1 = arith.constant 0 : index
    %c0_2 = arith.constant 0 : index
    %1 = vector.load %arg3[%c0_1, %c0_2] : memref<16x16xbf16, #tpu.memory_space<vmem>>, vector<16x16xbf16>
    %cst = arith.constant dense<0.000000e+00> : vector<30x16xf32>
    %2 = tpu.matmul %0, %1, %cst {dimension_numbers = #tpu.dot_dimension_numbers<[1], [0], [0], [1], [0, 0, 1, 1], [], []>} : vector<30x16xbf16>, vector<16x16xbf16>, vector<30x16xf32> -> vector<30x16xf32>
    %c0_3 = arith.constant 0 : index
    %c0_4 = arith.constant 0 : index
    %3 = vector.load %arg4[%c0_3, %c0_4] : memref<1x16xf32, #tpu.memory_space<vmem>>, vector<1x16xf32>
    %4 = vector.broadcast %3 : vector<1x16xf32> to vector<30x16xf32>
    %5 = arith.addf %2, %4 : vector<30x16xf32>
    %cst_5 = arith.constant 0.000000e+00 : f32
    %6 = vector.broadcast %cst_5 : f32 to vector<30x16xf32>
    %7 = arith.maximumf %5, %6 : vector<30x16xf32>
    %c0_6 = arith.constant 0 : index
    %c0_7 = arith.constant 0 : index
    %8 = vector.load %arg2[%c0_6, %c0_7] : memref<40x16xbf16, #tpu.memory_space<vmem>>, vector<40x16xbf16>
    %c0_8 = arith.constant 0 : index
    %c0_9 = arith.constant 0 : index
    %9 = vector.load %arg5[%c0_8, %c0_9] : memref<16x16xbf16, #tpu.memory_space<vmem>>, vector<16x16xbf16>
    %cst_10 = arith.constant dense<0.000000e+00> : vector<40x16xf32>
    %10 = tpu.matmul %8, %9, %cst_10 {dimension_numbers = #tpu.dot_dimension_numbers<[1], [0], [0], [1], [0, 0, 1, 1], [], []>} : vector<40x16xbf16>, vector<16x16xbf16>, vector<40x16xf32> -> vector<40x16xf32>
    %c0_11 = arith.constant 0 : index
    %c0_12 = arith.constant 0 : index
    %11 = vector.load %arg6[%c0_11, %c0_12] : memref<1x16xf32, #tpu.memory_space<vmem>>, vector<1x16xf32>
    %12 = vector.broadcast %11 : vector<1x16xf32> to vector<40x16xf32>
    %13 = arith.addf %10, %12 : vector<40x16xf32>
    %cst_13 = arith.constant 0.000000e+00 : f32
    %14 = vector.broadcast %cst_13 : f32 to vector<40x16xf32>
    %15 = arith.maximumf %13, %14 : vector<40x16xf32>
    %16 = arith.truncf %7 : vector<30x16xf32> to vector<30x16xbf16>
    %c0_14 = arith.constant 0 : index
    %c0_15 = arith.constant 0 : index
    %17 = vector.load %arg8[%c0_14, %c0_15] : memref<30x16xbf16, #tpu.memory_space<vmem>>, vector<30x16xbf16>
    tpu.vector_store %arg8[%c0_14, %c0_15], %16 {strides = array<i32>} : memref<30x16xbf16, #tpu.memory_space<vmem>>, vector<30x16xbf16>,
    %18 = arith.truncf %15 : vector<40x16xf32> to vector<40x16xbf16>
    %c0_16 = arith.constant 0 : index
    %c0_17 = arith.constant 0 : index
    %19 = vector.load %arg9[%c0_16, %c0_17] : memref<40x16xbf16, #tpu.memory_space<vmem>>, vector<40x16xbf16>
    tpu.vector_store %arg9[%c0_16, %c0_17], %18 {strides = array<i32>} : memref<40x16xbf16, #tpu.memory_space<vmem>>, vector<40x16xbf16>,
    %c0_i32 = arith.constant 0 : i32
    %c3_i32 = arith.constant 3 : i32
    %20 = arith.muli %c0_i32, %c3_i32 : i32
    %21 = arith.index_cast %20 : i32 to index
    %c0_18 = arith.constant 0 : index
    %22 = vector.load %arg8[%21, %c0_18] : memref<30x16xbf16, #tpu.memory_space<vmem>>, vector<3x16xbf16>
    %c4_i32 = arith.constant 4 : i32
    %23 = arith.muli %c0_i32, %c4_i32 : i32
    %24 = arith.index_cast %23 : i32 to index
    %c0_19 = arith.constant 0 : index
    %25 = vector.load %arg9[%24, %c0_19] : memref<40x16xbf16, #tpu.memory_space<vmem>>, vector<4x16xbf16>
    %26 = vector.extract_strided_slice %22 {offsets = [0, 0], sizes = [3, 8], strides = [1, 1]} : vector<3x16xbf16> to vector<3x8xbf16>
    %27 = vector.extract_strided_slice %25 {offsets = [0, 0], sizes = [4, 8], strides = [1, 1]} : vector<4x16xbf16> to vector<4x8xbf16>
    %cst_20 = arith.constant dense<0.000000e+00> : vector<3x4xf32>
    %28 = tpu.matmul %26, %27, %cst_20 {dimension_numbers = #tpu.dot_dimension_numbers<[1], [1], [0], [0], [0, 0, 1, 0], [], []>} : vector<3x8xbf16>, vector<4x8xbf16>, vector<3x4xf32> -> vector<3x4xf32>
    %cst_21 = arith.constant 0.353553385 : f32
    %29 = vector.broadcast %cst_21 : f32 to vector<3x4xf32>
    %30 = arith.mulf %28, %29 : vector<3x4xf32>
    %cst_22 = arith.constant dense<0xFF800000> : vector<3xf32>
    %31 = vector.multi_reduction <maximumf>, %30, %cst_22 [1] : vector<3x4xf32> to vector<3xf32>
    %32 = vector.shape_cast %31 : vector<3xf32> to vector<3x1xf32>
    %33 = vector.broadcast %32 : vector<3x1xf32> to vector<3x4xf32>
    %34 = arith.subf %30, %33 : vector<3x4xf32>
    %35 = math.exp %34 : vector<3x4xf32>
    %cst_23 = arith.constant dense<0.000000e+00> : vector<3xf32>
    %36 = vector.multi_reduction <add>, %35, %cst_23 [1] : vector<3x4xf32> to vector<3xf32>
    %37 = vector.shape_cast %36 : vector<3xf32> to vector<3x1xf32>
    %38 = vector.broadcast %37 : vector<3x1xf32> to vector<3x4xf32>
    %39 = arith.divf %35, %38 : vector<3x4xf32>
    %40 = arith.truncf %39 : vector<3x4xf32> to vector<3x4xbf16>
    %41 = arith.index_cast %c0_i32 : i32 to index
    %c0_24 = arith.constant 0 : index
    %c0_25 = arith.constant 0 : index
    %c0_26 = arith.constant 0 : index
    %42 = vector.load %arg7[%41, %c0_24, %c0_25, %c0_26] : memref<10x2x3x4xbf16, #tpu.memory_space<vmem>>, vector<1x1x3x4xbf16>
    %43 = vector.shape_cast %42 : vector<1x1x3x4xbf16> to vector<3x4xbf16>
    %44 = vector.shape_cast %40 : vector<3x4xbf16> to vector<1x1x3x4xbf16>
    tpu.vector_store %arg7[%41, %c0_24, %c0_25, %c0_26], %44 {strides = array<i32>} : memref<10x2x3x4xbf16, #tpu.memory_space<vmem>>, vector<1x1x3x4xbf16>,
    %45 = vector.extract_strided_slice %22 {offsets = [0, 8], sizes = [3, 8], strides = [1, 1]} : vector<3x16xbf16> to vector<3x8xbf16>
    %46 = vector.extract_strided_slice %25 {offsets = [0, 8], sizes = [4, 8], strides = [1, 1]} : vector<4x16xbf16> to vector<4x8xbf16>
    %cst_27 = arith.constant dense<0.000000e+00> : vector<3x4xf32>
    %47 = tpu.matmul %45, %46, %cst_27 {dimension_numbers = #tpu.dot_dimension_numbers<[1], [1], [0], [0], [0, 0, 1, 0], [], []>} : vector<3x8xbf16>, vector<4x8xbf16>, vector<3x4xf32> -> vector<3x4xf32>
    %cst_28 = arith.constant 0.353553385 : f32
    %48 = vector.broadcast %cst_28 : f32 to vector<3x4xf32>
    %49 = arith.mulf %47, %48 : vector<3x4xf32>
    %cst_29 = arith.constant dense<0xFF800000> : vector<3xf32>
    %50 = vector.multi_reduction <maximumf>, %49, %cst_29 [1] : vector<3x4xf32> to vector<3xf32>
    %51 = vector.shape_cast %50 : vector<3xf32> to vector<3x1xf32>
    %52 = vector.broadcast %51 : vector<3x1xf32> to vector<3x4xf32>
    %53 = arith.subf %49, %52 : vector<3x4xf32>
    %54 = math.exp %53 : vector<3x4xf32>
    %cst_30 = arith.constant dense<0.000000e+00> : vector<3xf32>
    %55 = vector.multi_reduction <add>, %54, %cst_30 [1] : vector<3x4xf32> to vector<3xf32>
    %56 = vector.shape_cast %55 : vector<3xf32> to vector<3x1xf32>
    %57 = vector.broadcast %56 : vector<3x1xf32> to vector<3x4xf32>
    %58 = arith.divf %54, %57 : vector<3x4xf32>
    %59 = arith.truncf %58 : vector<3x4xf32> to vector<3x4xbf16>
    %60 = arith.index_cast %c0_i32 : i32 to index
    %c1 = arith.constant 1 : index
    %c0_31 = arith.constant 0 : index
    %c0_32 = arith.constant 0 : index
    %61 = vector.load %arg7[%60, %c1, %c0_31, %c0_32] : memref<10x2x3x4xbf16, #tpu.memory_space<vmem>>, vector<1x1x3x4xbf16>
    %62 = vector.shape_cast %61 : vector<1x1x3x4xbf16> to vector<3x4xbf16>
    %63 = vector.shape_cast %59 : vector<3x4xbf16> to vector<1x1x3x4xbf16>
    tpu.vector_store %arg7[%60, %c1, %c0_31, %c0_32], %63 {strides = array<i32>} : memref<10x2x3x4xbf16, #tpu.memory_space<vmem>>, vector<1x1x3x4xbf16>,
    %c1_i32 = arith.constant 1 : i32
    %c3_i32_33 = arith.constant 3 : i32
    %64 = arith.muli %c1_i32, %c3_i32_33 : i32
    %65 = arith.index_cast %64 : i32 to index
    %c0_34 = arith.constant 0 : index
    %66 = vector.load %arg8[%65, %c0_34] : memref<30x16xbf16, #tpu.memory_space<vmem>>, vector<3x16xbf16>
    %c4_i32_35 = arith.constant 4 : i32
    %67 = arith.muli %c1_i32, %c4_i32_35 : i32
    %68 = arith.index_cast %67 : i32 to index
    %c0_36 = arith.constant 0 : index
    %69 = vector.load %arg9[%68, %c0_36] : memref<40x16xbf16, #tpu.memory_space<vmem>>, vector<4x16xbf16>
    %70 = vector.extract_strided_slice %66 {offsets = [0, 0], sizes = [3, 8], strides = [1, 1]} : vector<3x16xbf16> to vector<3x8xbf16>
    %71 = vector.extract_strided_slice %69 {offsets = [0, 0], sizes = [4, 8], strides = [1, 1]} : vector<4x16xbf16> to vector<4x8xbf16>
    %cst_37 = arith.constant dense<0.000000e+00> : vector<3x4xf32>
    %72 = tpu.matmul %70, %71, %cst_37 {dimension_numbers = #tpu.dot_dimension_numbers<[1], [1], [0], [0], [0, 0, 1, 0], [], []>} : vector<3x8xbf16>, vector<4x8xbf16>, vector<3x4xf32> -> vector<3x4xf32>
    %cst_38 = arith.constant 0.353553385 : f32
    %73 = vector.broadcast %cst_38 : f32 to vector<3x4xf32>
    %74 = arith.mulf %72, %73 : vector<3x4xf32>
    %cst_39 = arith.constant dense<0xFF800000> : vector<3xf32>
    %75 = vector.multi_reduction <maximumf>, %74, %cst_39 [1] : vector<3x4xf32> to vector<3xf32>
    %76 = vector.shape_cast %75 : vector<3xf32> to vector<3x1xf32>
    %77 = vector.broadcast %76 : vector<3x1xf32> to vector<3x4xf32>
    %78 = arith.subf %74, %77 : vector<3x4xf32>
    %79 = math.exp %78 : vector<3x4xf32>
    %cst_40 = arith.constant dense<0.000000e+00> : vector<3xf32>
    %80 = vector.multi_reduction <add>, %79, %cst_40 [1] : vector<3x4xf32> to vector<3xf32>
    %81 = vector.shape_cast %80 : vector<3xf32> to vector<3x1xf32>
    %82 = vector.broadcast %81 : vector<3x1xf32> to vector<3x4xf32>
    %83 = arith.divf %79, %82 : vector<3x4xf32>
    %84 = arith.truncf %83 : vector<3x4xf32> to vector<3x4xbf16>
    %85 = arith.index_cast %c1_i32 : i32 to index
    %c0_41 = arith.constant 0 : index
    %c0_42 = arith.constant 0 : index
    %c0_43 = arith.constant 0 : index
    %86 = vector.load %arg7[%85, %c0_41, %c0_42, %c0_43] : memref<10x2x3x4xbf16, #tpu.memory_space<vmem>>, vector<1x1x3x4xbf16>
    %87 = vector.shape_cast %86 : vector<1x1x3x4xbf16> to vector<3x4xbf16>
    %88 = vector.shape_cast %84 : vector<3x4xbf16> to vector<1x1x3x4xbf16>
    tpu.vector_store %arg7[%85, %c0_41, %c0_42, %c0_43], %88 {strides = array<i32>} : memref<10x2x3x4xbf16, #tpu.memory_space<vmem>>, vector<1x1x3x4xbf16>,
    %89 = vector.extract_strided_slice %66 {offsets = [0, 8], sizes = [3, 8], strides = [1, 1]} : vector<3x16xbf16> to vector<3x8xbf16>
    %90 = vector.extract_strided_slice %69 {offsets = [0, 8], sizes = [4, 8], strides = [1, 1]} : vector<4x16xbf16> to vector<4x8xbf16>
    %cst_44 = arith.constant dense<0.000000e+00> : vector<3x4xf32>
    %91 = tpu.matmul %89, %90, %cst_44 {dimension_numbers = #tpu.dot_dimension_numbers<[1], [1], [0], [0], [0, 0, 1, 0], [], []>} : vector<3x8xbf16>, vector<4x8xbf16>, vector<3x4xf32> -> vector<3x4xf32>
    %cst_45 = arith.constant 0.353553385 : f32
    %92 = vector.broadcast %cst_45 : f32 to vector<3x4xf32>
    %93 = arith.mulf %91, %92 : vector<3x4xf32>
    %cst_46 = arith.constant dense<0xFF800000> : vector<3xf32>
    %94 = vector.multi_reduction <maximumf>, %93, %cst_46 [1] : vector<3x4xf32> to vector<3xf32>
    %95 = vector.shape_cast %94 : vector<3xf32> to vector<3x1xf32>
    %96 = vector.broadcast %95 : vector<3x1xf32> to vector<3x4xf32>
    %97 = arith.subf %93, %96 : vector<3x4xf32>
    %98 = math.exp %97 : vector<3x4xf32>
    %cst_47 = arith.constant dense<0.000000e+00> : vector<3xf32>
    %99 = vector.multi_reduction <add>, %98, %cst_47 [1] : vector<3x4xf32> to vector<3xf32>
    %100 = vector.shape_cast %99 : vector<3xf32> to vector<3x1xf32>
    %101 = vector.broadcast %100 : vector<3x1xf32> to vector<3x4xf32>
    %102 = arith.divf %98, %101 : vector<3x4xf32>
    %103 = arith.truncf %102 : vector<3x4xf32> to vector<3x4xbf16>
    %104 = arith.index_cast %c1_i32 : i32 to index
    %c1_48 = arith.constant 1 : index
    %c0_49 = arith.constant 0 : index
    %c0_50 = arith.constant 0 : index
    %105 = vector.load %arg7[%104, %c1_48, %c0_49, %c0_50] : memref<10x2x3x4xbf16, #tpu.memory_space<vmem>>, vector<1x1x3x4xbf16>
    %106 = vector.shape_cast %105 : vector<1x1x3x4xbf16> to vector<3x4xbf16>
    %107 = vector.shape_cast %103 : vector<3x4xbf16> to vector<1x1x3x4xbf16>
    tpu.vector_store %arg7[%104, %c1_48, %c0_49, %c0_50], %107 {strides = array<i32>} : memref<10x2x3x4xbf16, #tpu.memory_space<vmem>>, vector<1x1x3x4xbf16>,
    %c2_i32 = arith.constant 2 : i32
    %c3_i32_51 = arith.constant 3 : i32
    %108 = arith.muli %c2_i32, %c3_i32_51 : i32
    %109 = arith.index_cast %108 : i32 to index
    %c0_52 = arith.constant 0 : index
    %110 = vector.load %arg8[%109, %c0_52] : memref<30x16xbf16, #tpu.memory_space<vmem>>, vector<3x16xbf16>
    %c4_i32_53 = arith.constant 4 : i32
    %111 = arith.muli %c2_i32, %c4_i32_53 : i32
    %112 = arith.index_cast %111 : i32 to index
    %c0_54 = arith.constant 0 : index
    %113 = vector.load %arg9[%112, %c0_54] : memref<40x16xbf16, #tpu.memory_space<vmem>>, vector<4x16xbf16>
    %114 = vector.extract_strided_slice %110 {offsets = [0, 0], sizes = [3, 8], strides = [1, 1]} : vector<3x16xbf16> to vector<3x8xbf16>
    %115 = vector.extract_strided_slice %113 {offsets = [0, 0], sizes = [4, 8], strides = [1, 1]} : vector<4x16xbf16> to vector<4x8xbf16>
    %cst_55 = arith.constant dense<0.000000e+00> : vector<3x4xf32>
    %116 = tpu.matmul %114, %115, %cst_55 {dimension_numbers = #tpu.dot_dimension_numbers<[1], [1], [0], [0], [0, 0, 1, 0], [], []>} : vector<3x8xbf16>, vector<4x8xbf16>, vector<3x4xf32> -> vector<3x4xf32>
    %cst_56 = arith.constant 0.353553385 : f32
    %117 = vector.broadcast %cst_56 : f32 to vector<3x4xf32>
    %118 = arith.mulf %116, %117 : vector<3x4xf32>
    %cst_57 = arith.constant dense<0xFF800000> : vector<3xf32>
    %119 = vector.multi_reduction <maximumf>, %118, %cst_57 [1] : vector<3x4xf32> to vector<3xf32>
    %120 = vector.shape_cast %119 : vector<3xf32> to vector<3x1xf32>
    %121 = vector.broadcast %120 : vector<3x1xf32> to vector<3x4xf32>
    %122 = arith.subf %118, %121 : vector<3x4xf32>
    %123 = math.exp %122 : vector<3x4xf32>
    %cst_58 = arith.constant dense<0.000000e+00> : vector<3xf32>
    %124 = vector.multi_reduction <add>, %123, %cst_58 [1] : vector<3x4xf32> to vector<3xf32>
    %125 = vector.shape_cast %124 : vector<3xf32> to vector<3x1xf32>
    %126 = vector.broadcast %125 : vector<3x1xf32> to vector<3x4xf32>
    %127 = arith.divf %123, %126 : vector<3x4xf32>
    %128 = arith.truncf %127 : vector<3x4xf32> to vector<3x4xbf16>
    %129 = arith.index_cast %c2_i32 : i32 to index
    %c0_59 = arith.constant 0 : index
    %c0_60 = arith.constant 0 : index
    %c0_61 = arith.constant 0 : index
    %130 = vector.load %arg7[%129, %c0_59, %c0_60, %c0_61] : memref<10x2x3x4xbf16, #tpu.memory_space<vmem>>, vector<1x1x3x4xbf16>
    %131 = vector.shape_cast %130 : vector<1x1x3x4xbf16> to vector<3x4xbf16>
    %132 = vector.shape_cast %128 : vector<3x4xbf16> to vector<1x1x3x4xbf16>
    tpu.vector_store %arg7[%129, %c0_59, %c0_60, %c0_61], %132 {strides = array<i32>} : memref<10x2x3x4xbf16, #tpu.memory_space<vmem>>, vector<1x1x3x4xbf16>,
    %133 = vector.extract_strided_slice %110 {offsets = [0, 8], sizes = [3, 8], strides = [1, 1]} : vector<3x16xbf16> to vector<3x8xbf16>
    %134 = vector.extract_strided_slice %113 {offsets = [0, 8], sizes = [4, 8], strides = [1, 1]} : vector<4x16xbf16> to vector<4x8xbf16>
    %cst_62 = arith.constant dense<0.000000e+00> : vector<3x4xf32>
    %135 = tpu.matmul %133, %134, %cst_62 {dimension_numbers = #tpu.dot_dimension_numbers<[1], [1], [0], [0], [0, 0, 1, 0], [], []>} : vector<3x8xbf16>, vector<4x8xbf16>, vector<3x4xf32> -> vector<3x4xf32>
    %cst_63 = arith.constant 0.353553385 : f32
    %136 = vector.broadcast %cst_63 : f32 to vector<3x4xf32>
    %137 = arith.mulf %135, %136 : vector<3x4xf32>
    %cst_64 = arith.constant dense<0xFF800000> : vector<3xf32>
    %138 = vector.multi_reduction <maximumf>, %137, %cst_64 [1] : vector<3x4xf32> to vector<3xf32>
    %139 = vector.shape_cast %138 : vector<3xf32> to vector<3x1xf32>
    %140 = vector.broadcast %139 : vector<3x1xf32> to vector<3x4xf32>
    %141 = arith.subf %137, %140 : vector<3x4xf32>
    %142 = math.exp %141 : vector<3x4xf32>
    %cst_65 = arith.constant dense<0.000000e+00> : vector<3xf32>
    %143 = vector.multi_reduction <add>, %142, %cst_65 [1] : vector<3x4xf32> to vector<3xf32>
    %144 = vector.shape_cast %143 : vector<3xf32> to vector<3x1xf32>
    %145 = vector.broadcast %144 : vector<3x1xf32> to vector<3x4xf32>
    %146 = arith.divf %142, %145 : vector<3x4xf32>
    %147 = arith.truncf %146 : vector<3x4xf32> to vector<3x4xbf16>
    %148 = arith.index_cast %c2_i32 : i32 to index
    %c1_66 = arith.constant 1 : index
    %c0_67 = arith.constant 0 : index
    %c0_68 = arith.constant 0 : index
    %149 = vector.load %arg7[%148, %c1_66, %c0_67, %c0_68] : memref<10x2x3x4xbf16, #tpu.memory_space<vmem>>, vector<1x1x3x4xbf16>
    %150 = vector.shape_cast %149 : vector<1x1x3x4xbf16> to vector<3x4xbf16>
    %151 = vector.shape_cast %147 : vector<3x4xbf16> to vector<1x1x3x4xbf16>
    tpu.vector_store %arg7[%148, %c1_66, %c0_67, %c0_68], %151 {strides = array<i32>} : memref<10x2x3x4xbf16, #tpu.memory_space<vmem>>, vector<1x1x3x4xbf16>,
    %c3_i32_69 = arith.constant 3 : i32
    %c3_i32_70 = arith.constant 3 : i32
    %152 = arith.muli %c3_i32_69, %c3_i32_70 : i32
    %153 = arith.index_cast %152 : i32 to index
    %c0_71 = arith.constant 0 : index
    %154 = vector.load %arg8[%153, %c0_71] : memref<30x16xbf16, #tpu.memory_space<vmem>>, vector<3x16xbf16>
    %c4_i32_72 = arith.constant 4 : i32
    %155 = arith.muli %c3_i32_69, %c4_i32_72 : i32
    %156 = arith.index_cast %155 : i32 to index
    %c0_73 = arith.constant 0 : index
    %157 = vector.load %arg9[%156, %c0_73] : memref<40x16xbf16, #tpu.memory_space<vmem>>, vector<4x16xbf16>
    %158 = vector.extract_strided_slice %154 {offsets = [0, 0], sizes = [3, 8], strides = [1, 1]} : vector<3x16xbf16> to vector<3x8xbf16>
    %159 = vector.extract_strided_slice %157 {offsets = [0, 0], sizes = [4, 8], strides = [1, 1]} : vector<4x16xbf16> to vector<4x8xbf16>
    %cst_74 = arith.constant dense<0.000000e+00> : vector<3x4xf32>
    %160 = tpu.matmul %158, %159, %cst_74 {dimension_numbers = #tpu.dot_dimension_numbers<[1], [1], [0], [0], [0, 0, 1, 0], [], []>} : vector<3x8xbf16>, vector<4x8xbf16>, vector<3x4xf32> -> vector<3x4xf32>
    %cst_75 = arith.constant 0.353553385 : f32
    %161 = vector.broadcast %cst_75 : f32 to vector<3x4xf32>
    %162 = arith.mulf %160, %161 : vector<3x4xf32>
    %cst_76 = arith.constant dense<0xFF800000> : vector<3xf32>
    %163 = vector.multi_reduction <maximumf>, %162, %cst_76 [1] : vector<3x4xf32> to vector<3xf32>
    %164 = vector.shape_cast %163 : vector<3xf32> to vector<3x1xf32>
    %165 = vector.broadcast %164 : vector<3x1xf32> to vector<3x4xf32>
    %166 = arith.subf %162, %165 : vector<3x4xf32>
    %167 = math.exp %166 : vector<3x4xf32>
    %cst_77 = arith.constant dense<0.000000e+00> : vector<3xf32>
    %168 = vector.multi_reduction <add>, %167, %cst_77 [1] : vector<3x4xf32> to vector<3xf32>
    %169 = vector.shape_cast %168 : vector<3xf32> to vector<3x1xf32>
    %170 = vector.broadcast %169 : vector<3x1xf32> to vector<3x4xf32>
    %171 = arith.divf %167, %170 : vector<3x4xf32>
    %172 = arith.truncf %171 : vector<3x4xf32> to vector<3x4xbf16>
    %173 = arith.index_cast %c3_i32_69 : i32 to index
    %c0_78 = arith.constant 0 : index
    %c0_79 = arith.constant 0 : index
    %c0_80 = arith.constant 0 : index
    %174 = vector.load %arg7[%173, %c0_78, %c0_79, %c0_80] : memref<10x2x3x4xbf16, #tpu.memory_space<vmem>>, vector<1x1x3x4xbf16>
    %175 = vector.shape_cast %174 : vector<1x1x3x4xbf16> to vector<3x4xbf16>
    %176 = vector.shape_cast %172 : vector<3x4xbf16> to vector<1x1x3x4xbf16>
    tpu.vector_store %arg7[%173, %c0_78, %c0_79, %c0_80], %176 {strides = array<i32>} : memref<10x2x3x4xbf16, #tpu.memory_space<vmem>>, vector<1x1x3x4xbf16>,
    %177 = vector.extract_strided_slice %154 {offsets = [0, 8], sizes = [3, 8], strides = [1, 1]} : vector<3x16xbf16> to vector<3x8xbf16>
    %178 = vector.extract_strided_slice %157 {offsets = [0, 8], sizes = [4, 8], strides = [1, 1]} : vector<4x16xbf16> to vector<4x8xbf16>
    %cst_81 = arith.constant dense<0.000000e+00> : vector<3x4xf32>
    %179 = tpu.matmul %177, %178, %cst_81 {dimension_numbers = #tpu.dot_dimension_numbers<[1], [1], [0], [0], [0, 0, 1, 0], [], []>} : vector<3x8xbf16>, vector<4x8xbf16>, vector<3x4xf32> -> vector<3x4xf32>
    %cst_82 = arith.constant 0.353553385 : f32
    %180 = vector.broadcast %cst_82 : f32 to vector<3x4xf32>
    %181 = arith.mulf %179, %180 : vector<3x4xf32>
    %cst_83 = arith.constant dense<0xFF800000> : vector<3xf32>
    %182 = vector.multi_reduction <maximumf>, %181, %cst_83 [1] : vector<3x4xf32> to vector<3xf32>
    %183 = vector.shape_cast %182 : vector<3xf32> to vector<3x1xf32>
    %184 = vector.broadcast %183 : vector<3x1xf32> to vector<3x4xf32>
    %185 = arith.subf %181, %184 : vector<3x4xf32>
    %186 = math.exp %185 : vector<3x4xf32>
    %cst_84 = arith.constant dense<0.000000e+00> : vector<3xf32>
    %187 = vector.multi_reduction <add>, %186, %cst_84 [1] : vector<3x4xf32> to vector<3xf32>
    %188 = vector.shape_cast %187 : vector<3xf32> to vector<3x1xf32>
    %189 = vector.broadcast %188 : vector<3x1xf32> to vector<3x4xf32>
    %190 = arith.divf %186, %189 : vector<3x4xf32>
    %191 = arith.truncf %190 : vector<3x4xf32> to vector<3x4xbf16>
    %192 = arith.index_cast %c3_i32_69 : i32 to index
    %c1_85 = arith.constant 1 : index
    %c0_86 = arith.constant 0 : index
    %c0_87 = arith.constant 0 : index
    %193 = vector.load %arg7[%192, %c1_85, %c0_86, %c0_87] : memref<10x2x3x4xbf16, #tpu.memory_space<vmem>>, vector<1x1x3x4xbf16>
    %194 = vector.shape_cast %193 : vector<1x1x3x4xbf16> to vector<3x4xbf16>
    %195 = vector.shape_cast %191 : vector<3x4xbf16> to vector<1x1x3x4xbf16>
    tpu.vector_store %arg7[%192, %c1_85, %c0_86, %c0_87], %195 {strides = array<i32>} : memref<10x2x3x4xbf16, #tpu.memory_space<vmem>>, vector<1x1x3x4xbf16>,
    %c4_i32_88 = arith.constant 4 : i32
    %c3_i32_89 = arith.constant 3 : i32
    %196 = arith.muli %c4_i32_88, %c3_i32_89 : i32
    %197 = arith.index_cast %196 : i32 to index
    %c0_90 = arith.constant 0 : index
    %198 = vector.load %arg8[%197, %c0_90] : memref<30x16xbf16, #tpu.memory_space<vmem>>, vector<3x16xbf16>
    %c4_i32_91 = arith.constant 4 : i32
    %199 = arith.muli %c4_i32_88, %c4_i32_91 : i32
    %200 = arith.index_cast %199 : i32 to index
    %c0_92 = arith.constant 0 : index
    %201 = vector.load %arg9[%200, %c0_92] : memref<40x16xbf16, #tpu.memory_space<vmem>>, vector<4x16xbf16>
    %202 = vector.extract_strided_slice %198 {offsets = [0, 0], sizes = [3, 8], strides = [1, 1]} : vector<3x16xbf16> to vector<3x8xbf16>
    %203 = vector.extract_strided_slice %201 {offsets = [0, 0], sizes = [4, 8], strides = [1, 1]} : vector<4x16xbf16> to vector<4x8xbf16>
    %cst_93 = arith.constant dense<0.000000e+00> : vector<3x4xf32>
    %204 = tpu.matmul %202, %203, %cst_93 {dimension_numbers = #tpu.dot_dimension_numbers<[1], [1], [0], [0], [0, 0, 1, 0], [], []>} : vector<3x8xbf16>, vector<4x8xbf16>, vector<3x4xf32> -> vector<3x4xf32>
    %cst_94 = arith.constant 0.353553385 : f32
    %205 = vector.broadcast %cst_94 : f32 to vector<3x4xf32>
    %206 = arith.mulf %204, %205 : vector<3x4xf32>
    %cst_95 = arith.constant dense<0xFF800000> : vector<3xf32>
    %207 = vector.multi_reduction <maximumf>, %206, %cst_95 [1] : vector<3x4xf32> to vector<3xf32>
    %208 = vector.shape_cast %207 : vector<3xf32> to vector<3x1xf32>
    %209 = vector.broadcast %208 : vector<3x1xf32> to vector<3x4xf32>
    %210 = arith.subf %206, %209 : vector<3x4xf32>
    %211 = math.exp %210 : vector<3x4xf32>
    %cst_96 = arith.constant dense<0.000000e+00> : vector<3xf32>
    %212 = vector.multi_reduction <add>, %211, %cst_96 [1] : vector<3x4xf32> to vector<3xf32>
    %213 = vector.shape_cast %212 : vector<3xf32> to vector<3x1xf32>
    %214 = vector.broadcast %213 : vector<3x1xf32> to vector<3x4xf32>
    %215 = arith.divf %211, %214 : vector<3x4xf32>
    %216 = arith.truncf %215 : vector<3x4xf32> to vector<3x4xbf16>
    %217 = arith.index_cast %c4_i32_88 : i32 to index
    %c0_97 = arith.constant 0 : index
    %c0_98 = arith.constant 0 : index
    %c0_99 = arith.constant 0 : index
    %218 = vector.load %arg7[%217, %c0_97, %c0_98, %c0_99] : memref<10x2x3x4xbf16, #tpu.memory_space<vmem>>, vector<1x1x3x4xbf16>
    %219 = vector.shape_cast %218 : vector<1x1x3x4xbf16> to vector<3x4xbf16>
    %220 = vector.shape_cast %216 : vector<3x4xbf16> to vector<1x1x3x4xbf16>
    tpu.vector_store %arg7[%217, %c0_97, %c0_98, %c0_99], %220 {strides = array<i32>} : memref<10x2x3x4xbf16, #tpu.memory_space<vmem>>, vector<1x1x3x4xbf16>,
    %221 = vector.extract_strided_slice %198 {offsets = [0, 8], sizes = [3, 8], strides = [1, 1]} : vector<3x16xbf16> to vector<3x8xbf16>
    %222 = vector.extract_strided_slice %201 {offsets = [0, 8], sizes = [4, 8], strides = [1, 1]} : vector<4x16xbf16> to vector<4x8xbf16>
    %cst_100 = arith.constant dense<0.000000e+00> : vector<3x4xf32>
    %223 = tpu.matmul %221, %222, %cst_100 {dimension_numbers = #tpu.dot_dimension_numbers<[1], [1], [0], [0], [0, 0, 1, 0], [], []>} : vector<3x8xbf16>, vector<4x8xbf16>, vector<3x4xf32> -> vector<3x4xf32>
    %cst_101 = arith.constant 0.353553385 : f32
    %224 = vector.broadcast %cst_101 : f32 to vector<3x4xf32>
    %225 = arith.mulf %223, %224 : vector<3x4xf32>
    %cst_102 = arith.constant dense<0xFF800000> : vector<3xf32>
    %226 = vector.multi_reduction <maximumf>, %225, %cst_102 [1] : vector<3x4xf32> to vector<3xf32>
    %227 = vector.shape_cast %226 : vector<3xf32> to vector<3x1xf32>
    %228 = vector.broadcast %227 : vector<3x1xf32> to vector<3x4xf32>
    %229 = arith.subf %225, %228 : vector<3x4xf32>
    %230 = math.exp %229 : vector<3x4xf32>
    %cst_103 = arith.constant dense<0.000000e+00> : vector<3xf32>
    %231 = vector.multi_reduction <add>, %230, %cst_103 [1] : vector<3x4xf32> to vector<3xf32>
    %232 = vector.shape_cast %231 : vector<3xf32> to vector<3x1xf32>
    %233 = vector.broadcast %232 : vector<3x1xf32> to vector<3x4xf32>
    %234 = arith.divf %230, %233 : vector<3x4xf32>
    %235 = arith.truncf %234 : vector<3x4xf32> to vector<3x4xbf16>
    %236 = arith.index_cast %c4_i32_88 : i32 to index
    %c1_104 = arith.constant 1 : index
    %c0_105 = arith.constant 0 : index
    %c0_106 = arith.constant 0 : index
    %237 = vector.load %arg7[%236, %c1_104, %c0_105, %c0_106] : memref<10x2x3x4xbf16, #tpu.memory_space<vmem>>, vector<1x1x3x4xbf16>
    %238 = vector.shape_cast %237 : vector<1x1x3x4xbf16> to vector<3x4xbf16>
    %239 = vector.shape_cast %235 : vector<3x4xbf16> to vector<1x1x3x4xbf16>
    tpu.vector_store %arg7[%236, %c1_104, %c0_105, %c0_106], %239 {strides = array<i32>} : memref<10x2x3x4xbf16, #tpu.memory_space<vmem>>, vector<1x1x3x4xbf16>,
    %c5_i32 = arith.constant 5 : i32
    %c3_i32_107 = arith.constant 3 : i32
    %240 = arith.muli %c5_i32, %c3_i32_107 : i32
    %241 = arith.index_cast %240 : i32 to index
    %c0_108 = arith.constant 0 : index
    %242 = vector.load %arg8[%241, %c0_108] : memref<30x16xbf16, #tpu.memory_space<vmem>>, vector<3x16xbf16>
    %c4_i32_109 = arith.constant 4 : i32
    %243 = arith.muli %c5_i32, %c4_i32_109 : i32
    %244 = arith.index_cast %243 : i32 to index
    %c0_110 = arith.constant 0 : index
    %245 = vector.load %arg9[%244, %c0_110] : memref<40x16xbf16, #tpu.memory_space<vmem>>, vector<4x16xbf16>
    %246 = vector.extract_strided_slice %242 {offsets = [0, 0], sizes = [3, 8], strides = [1, 1]} : vector<3x16xbf16> to vector<3x8xbf16>
    %247 = vector.extract_strided_slice %245 {offsets = [0, 0], sizes = [4, 8], strides = [1, 1]} : vector<4x16xbf16> to vector<4x8xbf16>
    %cst_111 = arith.constant dense<0.000000e+00> : vector<3x4xf32>
    %248 = tpu.matmul %246, %247, %cst_111 {dimension_numbers = #tpu.dot_dimension_numbers<[1], [1], [0], [0], [0, 0, 1, 0], [], []>} : vector<3x8xbf16>, vector<4x8xbf16>, vector<3x4xf32> -> vector<3x4xf32>
    %cst_112 = arith.constant 0.353553385 : f32
    %249 = vector.broadcast %cst_112 : f32 to vector<3x4xf32>
    %250 = arith.mulf %248, %249 : vector<3x4xf32>
    %cst_113 = arith.constant dense<0xFF800000> : vector<3xf32>
    %251 = vector.multi_reduction <maximumf>, %250, %cst_113 [1] : vector<3x4xf32> to vector<3xf32>
    %252 = vector.shape_cast %251 : vector<3xf32> to vector<3x1xf32>
    %253 = vector.broadcast %252 : vector<3x1xf32> to vector<3x4xf32>
    %254 = arith.subf %250, %253 : vector<3x4xf32>
    %255 = math.exp %254 : vector<3x4xf32>
    %cst_114 = arith.constant dense<0.000000e+00> : vector<3xf32>
    %256 = vector.multi_reduction <add>, %255, %cst_114 [1] : vector<3x4xf32> to vector<3xf32>
    %257 = vector.shape_cast %256 : vector<3xf32> to vector<3x1xf32>
    %258 = vector.broadcast %257 : vector<3x1xf32> to vector<3x4xf32>
    %259 = arith.divf %255, %258 : vector<3x4xf32>
    %260 = arith.truncf %259 : vector<3x4xf32> to vector<3x4xbf16>
    %261 = arith.index_cast %c5_i32 : i32 to index
    %c0_115 = arith.constant 0 : index
    %c0_116 = arith.constant 0 : index
    %c0_117 = arith.constant 0 : index
    %262 = vector.load %arg7[%261, %c0_115, %c0_116, %c0_117] : memref<10x2x3x4xbf16, #tpu.memory_space<vmem>>, vector<1x1x3x4xbf16>
    %263 = vector.shape_cast %262 : vector<1x1x3x4xbf16> to vector<3x4xbf16>
    %264 = vector.shape_cast %260 : vector<3x4xbf16> to vector<1x1x3x4xbf16>
    tpu.vector_store %arg7[%261, %c0_115, %c0_116, %c0_117], %264 {strides = array<i32>} : memref<10x2x3x4xbf16, #tpu.memory_space<vmem>>, vector<1x1x3x4xbf16>,
    %265 = vector.extract_strided_slice %242 {offsets = [0, 8], sizes = [3, 8], strides = [1, 1]} : vector<3x16xbf16> to vector<3x8xbf16>
    %266 = vector.extract_strided_slice %245 {offsets = [0, 8], sizes = [4, 8], strides = [1, 1]} : vector<4x16xbf16> to vector<4x8xbf16>
    %cst_118 = arith.constant dense<0.000000e+00> : vector<3x4xf32>
    %267 = tpu.matmul %265, %266, %cst_118 {dimension_numbers = #tpu.dot_dimension_numbers<[1], [1], [0], [0], [0, 0, 1, 0], [], []>} : vector<3x8xbf16>, vector<4x8xbf16>, vector<3x4xf32> -> vector<3x4xf32>
    %cst_119 = arith.constant 0.353553385 : f32
    %268 = vector.broadcast %cst_119 : f32 to vector<3x4xf32>
    %269 = arith.mulf %267, %268 : vector<3x4xf32>
    %cst_120 = arith.constant dense<0xFF800000> : vector<3xf32>
    %270 = vector.multi_reduction <maximumf>, %269, %cst_120 [1] : vector<3x4xf32> to vector<3xf32>
    %271 = vector.shape_cast %270 : vector<3xf32> to vector<3x1xf32>
    %272 = vector.broadcast %271 : vector<3x1xf32> to vector<3x4xf32>
    %273 = arith.subf %269, %272 : vector<3x4xf32>
    %274 = math.exp %273 : vector<3x4xf32>
    %cst_121 = arith.constant dense<0.000000e+00> : vector<3xf32>
    %275 = vector.multi_reduction <add>, %274, %cst_121 [1] : vector<3x4xf32> to vector<3xf32>
    %276 = vector.shape_cast %275 : vector<3xf32> to vector<3x1xf32>
    %277 = vector.broadcast %276 : vector<3x1xf32> to vector<3x4xf32>
    %278 = arith.divf %274, %277 : vector<3x4xf32>
    %279 = arith.truncf %278 : vector<3x4xf32> to vector<3x4xbf16>
    %280 = arith.index_cast %c5_i32 : i32 to index
    %c1_122 = arith.constant 1 : index
    %c0_123 = arith.constant 0 : index
    %c0_124 = arith.constant 0 : index
    %281 = vector.load %arg7[%280, %c1_122, %c0_123, %c0_124] : memref<10x2x3x4xbf16, #tpu.memory_space<vmem>>, vector<1x1x3x4xbf16>
    %282 = vector.shape_cast %281 : vector<1x1x3x4xbf16> to vector<3x4xbf16>
    %283 = vector.shape_cast %279 : vector<3x4xbf16> to vector<1x1x3x4xbf16>
    tpu.vector_store %arg7[%280, %c1_122, %c0_123, %c0_124], %283 {strides = array<i32>} : memref<10x2x3x4xbf16, #tpu.memory_space<vmem>>, vector<1x1x3x4xbf16>,
    %c6_i32 = arith.constant 6 : i32
    %c3_i32_125 = arith.constant 3 : i32
    %284 = arith.muli %c6_i32, %c3_i32_125 : i32
    %285 = arith.index_cast %284 : i32 to index
    %c0_126 = arith.constant 0 : index
    %286 = vector.load %arg8[%285, %c0_126] : memref<30x16xbf16, #tpu.memory_space<vmem>>, vector<3x16xbf16>
    %c4_i32_127 = arith.constant 4 : i32
    %287 = arith.muli %c6_i32, %c4_i32_127 : i32
    %288 = arith.index_cast %287 : i32 to index
    %c0_128 = arith.constant 0 : index
    %289 = vector.load %arg9[%288, %c0_128] : memref<40x16xbf16, #tpu.memory_space<vmem>>, vector<4x16xbf16>
    %290 = vector.extract_strided_slice %286 {offsets = [0, 0], sizes = [3, 8], strides = [1, 1]} : vector<3x16xbf16> to vector<3x8xbf16>
    %291 = vector.extract_strided_slice %289 {offsets = [0, 0], sizes = [4, 8], strides = [1, 1]} : vector<4x16xbf16> to vector<4x8xbf16>
    %cst_129 = arith.constant dense<0.000000e+00> : vector<3x4xf32>
    %292 = tpu.matmul %290, %291, %cst_129 {dimension_numbers = #tpu.dot_dimension_numbers<[1], [1], [0], [0], [0, 0, 1, 0], [], []>} : vector<3x8xbf16>, vector<4x8xbf16>, vector<3x4xf32> -> vector<3x4xf32>
    %cst_130 = arith.constant 0.353553385 : f32
    %293 = vector.broadcast %cst_130 : f32 to vector<3x4xf32>
    %294 = arith.mulf %292, %293 : vector<3x4xf32>
    %cst_131 = arith.constant dense<0xFF800000> : vector<3xf32>
    %295 = vector.multi_reduction <maximumf>, %294, %cst_131 [1] : vector<3x4xf32> to vector<3xf32>
    %296 = vector.shape_cast %295 : vector<3xf32> to vector<3x1xf32>
    %297 = vector.broadcast %296 : vector<3x1xf32> to vector<3x4xf32>
    %298 = arith.subf %294, %297 : vector<3x4xf32>
    %299 = math.exp %298 : vector<3x4xf32>
    %cst_132 = arith.constant dense<0.000000e+00> : vector<3xf32>
    %300 = vector.multi_reduction <add>, %299, %cst_132 [1] : vector<3x4xf32> to vector<3xf32>
    %301 = vector.shape_cast %300 : vector<3xf32> to vector<3x1xf32>
    %302 = vector.broadcast %301 : vector<3x1xf32> to vector<3x4xf32>
    %303 = arith.divf %299, %302 : vector<3x4xf32>
    %304 = arith.truncf %303 : vector<3x4xf32> to vector<3x4xbf16>
    %305 = arith.index_cast %c6_i32 : i32 to index
    %c0_133 = arith.constant 0 : index
    %c0_134 = arith.constant 0 : index
    %c0_135 = arith.constant 0 : index
    %306 = vector.load %arg7[%305, %c0_133, %c0_134, %c0_135] : memref<10x2x3x4xbf16, #tpu.memory_space<vmem>>, vector<1x1x3x4xbf16>
    %307 = vector.shape_cast %306 : vector<1x1x3x4xbf16> to vector<3x4xbf16>
    %308 = vector.shape_cast %304 : vector<3x4xbf16> to vector<1x1x3x4xbf16>
    tpu.vector_store %arg7[%305, %c0_133, %c0_134, %c0_135], %308 {strides = array<i32>} : memref<10x2x3x4xbf16, #tpu.memory_space<vmem>>, vector<1x1x3x4xbf16>,
    %309 = vector.extract_strided_slice %286 {offsets = [0, 8], sizes = [3, 8], strides = [1, 1]} : vector<3x16xbf16> to vector<3x8xbf16>
    %310 = vector.extract_strided_slice %289 {offsets = [0, 8], sizes = [4, 8], strides = [1, 1]} : vector<4x16xbf16> to vector<4x8xbf16>
    %cst_136 = arith.constant dense<0.000000e+00> : vector<3x4xf32>
    %311 = tpu.matmul %309, %310, %cst_136 {dimension_numbers = #tpu.dot_dimension_numbers<[1], [1], [0], [0], [0, 0, 1, 0], [], []>} : vector<3x8xbf16>, vector<4x8xbf16>, vector<3x4xf32> -> vector<3x4xf32>
    %cst_137 = arith.constant 0.353553385 : f32
    %312 = vector.broadcast %cst_137 : f32 to vector<3x4xf32>
    %313 = arith.mulf %311, %312 : vector<3x4xf32>
    %cst_138 = arith.constant dense<0xFF800000> : vector<3xf32>
    %314 = vector.multi_reduction <maximumf>, %313, %cst_138 [1] : vector<3x4xf32> to vector<3xf32>
    %315 = vector.shape_cast %314 : vector<3xf32> to vector<3x1xf32>
    %316 = vector.broadcast %315 : vector<3x1xf32> to vector<3x4xf32>
    %317 = arith.subf %313, %316 : vector<3x4xf32>
    %318 = math.exp %317 : vector<3x4xf32>
    %cst_139 = arith.constant dense<0.000000e+00> : vector<3xf32>
    %319 = vector.multi_reduction <add>, %318, %cst_139 [1] : vector<3x4xf32> to vector<3xf32>
    %320 = vector.shape_cast %319 : vector<3xf32> to vector<3x1xf32>
    %321 = vector.broadcast %320 : vector<3x1xf32> to vector<3x4xf32>
    %322 = arith.divf %318, %321 : vector<3x4xf32>
    %323 = arith.truncf %322 : vector<3x4xf32> to vector<3x4xbf16>
    %324 = arith.index_cast %c6_i32 : i32 to index
    %c1_140 = arith.constant 1 : index
    %c0_141 = arith.constant 0 : index
    %c0_142 = arith.constant 0 : index
    %325 = vector.load %arg7[%324, %c1_140, %c0_141, %c0_142] : memref<10x2x3x4xbf16, #tpu.memory_space<vmem>>, vector<1x1x3x4xbf16>
    %326 = vector.shape_cast %325 : vector<1x1x3x4xbf16> to vector<3x4xbf16>
    %327 = vector.shape_cast %323 : vector<3x4xbf16> to vector<1x1x3x4xbf16>
    tpu.vector_store %arg7[%324, %c1_140, %c0_141, %c0_142], %327 {strides = array<i32>} : memref<10x2x3x4xbf16, #tpu.memory_space<vmem>>, vector<1x1x3x4xbf16>,
    %c7_i32 = arith.constant 7 : i32
    %c3_i32_143 = arith.constant 3 : i32
    %328 = arith.muli %c7_i32, %c3_i32_143 : i32
    %329 = arith.index_cast %328 : i32 to index
    %c0_144 = arith.constant 0 : index
    %330 = vector.load %arg8[%329, %c0_144] : memref<30x16xbf16, #tpu.memory_space<vmem>>, vector<3x16xbf16>
    %c4_i32_145 = arith.constant 4 : i32
    %331 = arith.muli %c7_i32, %c4_i32_145 : i32
    %332 = arith.index_cast %331 : i32 to index
    %c0_146 = arith.constant 0 : index
    %333 = vector.load %arg9[%332, %c0_146] : memref<40x16xbf16, #tpu.memory_space<vmem>>, vector<4x16xbf16>
    %334 = vector.extract_strided_slice %330 {offsets = [0, 0], sizes = [3, 8], strides = [1, 1]} : vector<3x16xbf16> to vector<3x8xbf16>
    %335 = vector.extract_strided_slice %333 {offsets = [0, 0], sizes = [4, 8], strides = [1, 1]} : vector<4x16xbf16> to vector<4x8xbf16>
    %cst_147 = arith.constant dense<0.000000e+00> : vector<3x4xf32>
    %336 = tpu.matmul %334, %335, %cst_147 {dimension_numbers = #tpu.dot_dimension_numbers<[1], [1], [0], [0], [0, 0, 1, 0], [], []>} : vector<3x8xbf16>, vector<4x8xbf16>, vector<3x4xf32> -> vector<3x4xf32>
    %cst_148 = arith.constant 0.353553385 : f32
    %337 = vector.broadcast %cst_148 : f32 to vector<3x4xf32>
    %338 = arith.mulf %336, %337 : vector<3x4xf32>
    %cst_149 = arith.constant dense<0xFF800000> : vector<3xf32>
    %339 = vector.multi_reduction <maximumf>, %338, %cst_149 [1] : vector<3x4xf32> to vector<3xf32>
    %340 = vector.shape_cast %339 : vector<3xf32> to vector<3x1xf32>
    %341 = vector.broadcast %340 : vector<3x1xf32> to vector<3x4xf32>
    %342 = arith.subf %338, %341 : vector<3x4xf32>
    %343 = math.exp %342 : vector<3x4xf32>
    %cst_150 = arith.constant dense<0.000000e+00> : vector<3xf32>
    %344 = vector.multi_reduction <add>, %343, %cst_150 [1] : vector<3x4xf32> to vector<3xf32>
    %345 = vector.shape_cast %344 : vector<3xf32> to vector<3x1xf32>
    %346 = vector.broadcast %345 : vector<3x1xf32> to vector<3x4xf32>
    %347 = arith.divf %343, %346 : vector<3x4xf32>
    %348 = arith.truncf %347 : vector<3x4xf32> to vector<3x4xbf16>
    %349 = arith.index_cast %c7_i32 : i32 to index
    %c0_151 = arith.constant 0 : index
    %c0_152 = arith.constant 0 : index
    %c0_153 = arith.constant 0 : index
    %350 = vector.load %arg7[%349, %c0_151, %c0_152, %c0_153] : memref<10x2x3x4xbf16, #tpu.memory_space<vmem>>, vector<1x1x3x4xbf16>
    %351 = vector.shape_cast %350 : vector<1x1x3x4xbf16> to vector<3x4xbf16>
    %352 = vector.shape_cast %348 : vector<3x4xbf16> to vector<1x1x3x4xbf16>
    tpu.vector_store %arg7[%349, %c0_151, %c0_152, %c0_153], %352 {strides = array<i32>} : memref<10x2x3x4xbf16, #tpu.memory_space<vmem>>, vector<1x1x3x4xbf16>,
    %353 = vector.extract_strided_slice %330 {offsets = [0, 8], sizes = [3, 8], strides = [1, 1]} : vector<3x16xbf16> to vector<3x8xbf16>
    %354 = vector.extract_strided_slice %333 {offsets = [0, 8], sizes = [4, 8], strides = [1, 1]} : vector<4x16xbf16> to vector<4x8xbf16>
    %cst_154 = arith.constant dense<0.000000e+00> : vector<3x4xf32>
    %355 = tpu.matmul %353, %354, %cst_154 {dimension_numbers = #tpu.dot_dimension_numbers<[1], [1], [0], [0], [0, 0, 1, 0], [], []>} : vector<3x8xbf16>, vector<4x8xbf16>, vector<3x4xf32> -> vector<3x4xf32>
    %cst_155 = arith.constant 0.353553385 : f32
    %356 = vector.broadcast %cst_155 : f32 to vector<3x4xf32>
    %357 = arith.mulf %355, %356 : vector<3x4xf32>
    %cst_156 = arith.constant dense<0xFF800000> : vector<3xf32>
    %358 = vector.multi_reduction <maximumf>, %357, %cst_156 [1] : vector<3x4xf32> to vector<3xf32>
    %359 = vector.shape_cast %358 : vector<3xf32> to vector<3x1xf32>
    %360 = vector.broadcast %359 : vector<3x1xf32> to vector<3x4xf32>
    %361 = arith.subf %357, %360 : vector<3x4xf32>
    %362 = math.exp %361 : vector<3x4xf32>
    %cst_157 = arith.constant dense<0.000000e+00> : vector<3xf32>
    %363 = vector.multi_reduction <add>, %362, %cst_157 [1] : vector<3x4xf32> to vector<3xf32>
    %364 = vector.shape_cast %363 : vector<3xf32> to vector<3x1xf32>
    %365 = vector.broadcast %364 : vector<3x1xf32> to vector<3x4xf32>
    %366 = arith.divf %362, %365 : vector<3x4xf32>
    %367 = arith.truncf %366 : vector<3x4xf32> to vector<3x4xbf16>
    %368 = arith.index_cast %c7_i32 : i32 to index
    %c1_158 = arith.constant 1 : index
    %c0_159 = arith.constant 0 : index
    %c0_160 = arith.constant 0 : index
    %369 = vector.load %arg7[%368, %c1_158, %c0_159, %c0_160] : memref<10x2x3x4xbf16, #tpu.memory_space<vmem>>, vector<1x1x3x4xbf16>
    %370 = vector.shape_cast %369 : vector<1x1x3x4xbf16> to vector<3x4xbf16>
    %371 = vector.shape_cast %367 : vector<3x4xbf16> to vector<1x1x3x4xbf16>
    tpu.vector_store %arg7[%368, %c1_158, %c0_159, %c0_160], %371 {strides = array<i32>} : memref<10x2x3x4xbf16, #tpu.memory_space<vmem>>, vector<1x1x3x4xbf16>,
    %c8_i32 = arith.constant 8 : i32
    %c3_i32_161 = arith.constant 3 : i32
    %372 = arith.muli %c8_i32, %c3_i32_161 : i32
    %373 = arith.index_cast %372 : i32 to index
    %c0_162 = arith.constant 0 : index
    %374 = vector.load %arg8[%373, %c0_162] : memref<30x16xbf16, #tpu.memory_space<vmem>>, vector<3x16xbf16>
    %c4_i32_163 = arith.constant 4 : i32
    %375 = arith.muli %c8_i32, %c4_i32_163 : i32
    %376 = arith.index_cast %375 : i32 to index
    %c0_164 = arith.constant 0 : index
    %377 = vector.load %arg9[%376, %c0_164] : memref<40x16xbf16, #tpu.memory_space<vmem>>, vector<4x16xbf16>
    %378 = vector.extract_strided_slice %374 {offsets = [0, 0], sizes = [3, 8], strides = [1, 1]} : vector<3x16xbf16> to vector<3x8xbf16>
    %379 = vector.extract_strided_slice %377 {offsets = [0, 0], sizes = [4, 8], strides = [1, 1]} : vector<4x16xbf16> to vector<4x8xbf16>
    %cst_165 = arith.constant dense<0.000000e+00> : vector<3x4xf32>
    %380 = tpu.matmul %378, %379, %cst_165 {dimension_numbers = #tpu.dot_dimension_numbers<[1], [1], [0], [0], [0, 0, 1, 0], [], []>} : vector<3x8xbf16>, vector<4x8xbf16>, vector<3x4xf32> -> vector<3x4xf32>
    %cst_166 = arith.constant 0.353553385 : f32
    %381 = vector.broadcast %cst_166 : f32 to vector<3x4xf32>
    %382 = arith.mulf %380, %381 : vector<3x4xf32>
    %cst_167 = arith.constant dense<0xFF800000> : vector<3xf32>
    %383 = vector.multi_reduction <maximumf>, %382, %cst_167 [1] : vector<3x4xf32> to vector<3xf32>
    %384 = vector.shape_cast %383 : vector<3xf32> to vector<3x1xf32>
    %385 = vector.broadcast %384 : vector<3x1xf32> to vector<3x4xf32>
    %386 = arith.subf %382, %385 : vector<3x4xf32>
    %387 = math.exp %386 : vector<3x4xf32>
    %cst_168 = arith.constant dense<0.000000e+00> : vector<3xf32>
    %388 = vector.multi_reduction <add>, %387, %cst_168 [1] : vector<3x4xf32> to vector<3xf32>
    %389 = vector.shape_cast %388 : vector<3xf32> to vector<3x1xf32>
    %390 = vector.broadcast %389 : vector<3x1xf32> to vector<3x4xf32>
    %391 = arith.divf %387, %390 : vector<3x4xf32>
    %392 = arith.truncf %391 : vector<3x4xf32> to vector<3x4xbf16>
    %393 = arith.index_cast %c8_i32 : i32 to index
    %c0_169 = arith.constant 0 : index
    %c0_170 = arith.constant 0 : index
    %c0_171 = arith.constant 0 : index
    %394 = vector.load %arg7[%393, %c0_169, %c0_170, %c0_171] : memref<10x2x3x4xbf16, #tpu.memory_space<vmem>>, vector<1x1x3x4xbf16>
    %395 = vector.shape_cast %394 : vector<1x1x3x4xbf16> to vector<3x4xbf16>
    %396 = vector.shape_cast %392 : vector<3x4xbf16> to vector<1x1x3x4xbf16>
    tpu.vector_store %arg7[%393, %c0_169, %c0_170, %c0_171], %396 {strides = array<i32>} : memref<10x2x3x4xbf16, #tpu.memory_space<vmem>>, vector<1x1x3x4xbf16>,
    %397 = vector.extract_strided_slice %374 {offsets = [0, 8], sizes = [3, 8], strides = [1, 1]} : vector<3x16xbf16> to vector<3x8xbf16>
    %398 = vector.extract_strided_slice %377 {offsets = [0, 8], sizes = [4, 8], strides = [1, 1]} : vector<4x16xbf16> to vector<4x8xbf16>
    %cst_172 = arith.constant dense<0.000000e+00> : vector<3x4xf32>
    %399 = tpu.matmul %397, %398, %cst_172 {dimension_numbers = #tpu.dot_dimension_numbers<[1], [1], [0], [0], [0, 0, 1, 0], [], []>} : vector<3x8xbf16>, vector<4x8xbf16>, vector<3x4xf32> -> vector<3x4xf32>
    %cst_173 = arith.constant 0.353553385 : f32
    %400 = vector.broadcast %cst_173 : f32 to vector<3x4xf32>
    %401 = arith.mulf %399, %400 : vector<3x4xf32>
    %cst_174 = arith.constant dense<0xFF800000> : vector<3xf32>
    %402 = vector.multi_reduction <maximumf>, %401, %cst_174 [1] : vector<3x4xf32> to vector<3xf32>
    %403 = vector.shape_cast %402 : vector<3xf32> to vector<3x1xf32>
    %404 = vector.broadcast %403 : vector<3x1xf32> to vector<3x4xf32>
    %405 = arith.subf %401, %404 : vector<3x4xf32>
    %406 = math.exp %405 : vector<3x4xf32>
    %cst_175 = arith.constant dense<0.000000e+00> : vector<3xf32>
    %407 = vector.multi_reduction <add>, %406, %cst_175 [1] : vector<3x4xf32> to vector<3xf32>
    %408 = vector.shape_cast %407 : vector<3xf32> to vector<3x1xf32>
    %409 = vector.broadcast %408 : vector<3x1xf32> to vector<3x4xf32>
    %410 = arith.divf %406, %409 : vector<3x4xf32>
    %411 = arith.truncf %410 : vector<3x4xf32> to vector<3x4xbf16>
    %412 = arith.index_cast %c8_i32 : i32 to index
    %c1_176 = arith.constant 1 : index
    %c0_177 = arith.constant 0 : index
    %c0_178 = arith.constant 0 : index
    %413 = vector.load %arg7[%412, %c1_176, %c0_177, %c0_178] : memref<10x2x3x4xbf16, #tpu.memory_space<vmem>>, vector<1x1x3x4xbf16>
    %414 = vector.shape_cast %413 : vector<1x1x3x4xbf16> to vector<3x4xbf16>
    %415 = vector.shape_cast %411 : vector<3x4xbf16> to vector<1x1x3x4xbf16>
    tpu.vector_store %arg7[%412, %c1_176, %c0_177, %c0_178], %415 {strides = array<i32>} : memref<10x2x3x4xbf16, #tpu.memory_space<vmem>>, vector<1x1x3x4xbf16>,
    %c9_i32 = arith.constant 9 : i32
    %c3_i32_179 = arith.constant 3 : i32
    %416 = arith.muli %c9_i32, %c3_i32_179 : i32
    %417 = arith.index_cast %416 : i32 to index
    %c0_180 = arith.constant 0 : index
    %418 = vector.load %arg8[%417, %c0_180] : memref<30x16xbf16, #tpu.memory_space<vmem>>, vector<3x16xbf16>
    %c4_i32_181 = arith.constant 4 : i32
    %419 = arith.muli %c9_i32, %c4_i32_181 : i32
    %420 = arith.index_cast %419 : i32 to index
    %c0_182 = arith.constant 0 : index
    %421 = vector.load %arg9[%420, %c0_182] : memref<40x16xbf16, #tpu.memory_space<vmem>>, vector<4x16xbf16>
    %422 = vector.extract_strided_slice %418 {offsets = [0, 0], sizes = [3, 8], strides = [1, 1]} : vector<3x16xbf16> to vector<3x8xbf16>
    %423 = vector.extract_strided_slice %421 {offsets = [0, 0], sizes = [4, 8], strides = [1, 1]} : vector<4x16xbf16> to vector<4x8xbf16>
    %cst_183 = arith.constant dense<0.000000e+00> : vector<3x4xf32>
    %424 = tpu.matmul %422, %423, %cst_183 {dimension_numbers = #tpu.dot_dimension_numbers<[1], [1], [0], [0], [0, 0, 1, 0], [], []>} : vector<3x8xbf16>, vector<4x8xbf16>, vector<3x4xf32> -> vector<3x4xf32>
    %cst_184 = arith.constant 0.353553385 : f32
    %425 = vector.broadcast %cst_184 : f32 to vector<3x4xf32>
    %426 = arith.mulf %424, %425 : vector<3x4xf32>
    %cst_185 = arith.constant dense<0xFF800000> : vector<3xf32>
    %427 = vector.multi_reduction <maximumf>, %426, %cst_185 [1] : vector<3x4xf32> to vector<3xf32>
    %428 = vector.shape_cast %427 : vector<3xf32> to vector<3x1xf32>
    %429 = vector.broadcast %428 : vector<3x1xf32> to vector<3x4xf32>
    %430 = arith.subf %426, %429 : vector<3x4xf32>
    %431 = math.exp %430 : vector<3x4xf32>
    %cst_186 = arith.constant dense<0.000000e+00> : vector<3xf32>
    %432 = vector.multi_reduction <add>, %431, %cst_186 [1] : vector<3x4xf32> to vector<3xf32>
    %433 = vector.shape_cast %432 : vector<3xf32> to vector<3x1xf32>
    %434 = vector.broadcast %433 : vector<3x1xf32> to vector<3x4xf32>
    %435 = arith.divf %431, %434 : vector<3x4xf32>
    %436 = arith.truncf %435 : vector<3x4xf32> to vector<3x4xbf16>
    %437 = arith.index_cast %c9_i32 : i32 to index
    %c0_187 = arith.constant 0 : index
    %c0_188 = arith.constant 0 : index
    %c0_189 = arith.constant 0 : index
    %438 = vector.load %arg7[%437, %c0_187, %c0_188, %c0_189] : memref<10x2x3x4xbf16, #tpu.memory_space<vmem>>, vector<1x1x3x4xbf16>
    %439 = vector.shape_cast %438 : vector<1x1x3x4xbf16> to vector<3x4xbf16>
    %440 = vector.shape_cast %436 : vector<3x4xbf16> to vector<1x1x3x4xbf16>
    tpu.vector_store %arg7[%437, %c0_187, %c0_188, %c0_189], %440 {strides = array<i32>} : memref<10x2x3x4xbf16, #tpu.memory_space<vmem>>, vector<1x1x3x4xbf16>,
    %441 = vector.extract_strided_slice %418 {offsets = [0, 8], sizes = [3, 8], strides = [1, 1]} : vector<3x16xbf16> to vector<3x8xbf16>
    %442 = vector.extract_strided_slice %421 {offsets = [0, 8], sizes = [4, 8], strides = [1, 1]} : vector<4x16xbf16> to vector<4x8xbf16>
    %cst_190 = arith.constant dense<0.000000e+00> : vector<3x4xf32>
    %443 = tpu.matmul %441, %442, %cst_190 {dimension_numbers = #tpu.dot_dimension_numbers<[1], [1], [0], [0], [0, 0, 1, 0], [], []>} : vector<3x8xbf16>, vector<4x8xbf16>, vector<3x4xf32> -> vector<3x4xf32>
    %cst_191 = arith.constant 0.353553385 : f32
    %444 = vector.broadcast %cst_191 : f32 to vector<3x4xf32>
    %445 = arith.mulf %443, %444 : vector<3x4xf32>
    %cst_192 = arith.constant dense<0xFF800000> : vector<3xf32>
    %446 = vector.multi_reduction <maximumf>, %445, %cst_192 [1] : vector<3x4xf32> to vector<3xf32>
    %447 = vector.shape_cast %446 : vector<3xf32> to vector<3x1xf32>
    %448 = vector.broadcast %447 : vector<3x1xf32> to vector<3x4xf32>
    %449 = arith.subf %445, %448 : vector<3x4xf32>
    %450 = math.exp %449 : vector<3x4xf32>
    %cst_193 = arith.constant dense<0.000000e+00> : vector<3xf32>
    %451 = vector.multi_reduction <add>, %450, %cst_193 [1] : vector<3x4xf32> to vector<3xf32>
    %452 = vector.shape_cast %451 : vector<3xf32> to vector<3x1xf32>
    %453 = vector.broadcast %452 : vector<3x1xf32> to vector<3x4xf32>
    %454 = arith.divf %450, %453 : vector<3x4xf32>
    %455 = arith.truncf %454 : vector<3x4xf32> to vector<3x4xbf16>
    %456 = arith.index_cast %c9_i32 : i32 to index
    %c1_194 = arith.constant 1 : index
    %c0_195 = arith.constant 0 : index
    %c0_196 = arith.constant 0 : index
    %457 = vector.load %arg7[%456, %c1_194, %c0_195, %c0_196] : memref<10x2x3x4xbf16, #tpu.memory_space<vmem>>, vector<1x1x3x4xbf16>
    %458 = vector.shape_cast %457 : vector<1x1x3x4xbf16> to vector<3x4xbf16>
    %459 = vector.shape_cast %455 : vector<3x4xbf16> to vector<1x1x3x4xbf16>
    tpu.vector_store %arg7[%456, %c1_194, %c0_195, %c0_196], %459 {strides = array<i32>} : memref<10x2x3x4xbf16, #tpu.memory_space<vmem>>, vector<1x1x3x4xbf16>,
    %c10_i32 = arith.constant 10 : i32
    return
  }
  func.func @transform_0(%arg0: i32) -> (i32, i32) {
    %c0_i32 = arith.constant 0 : i32
    %c0_i32_0 = arith.constant 0 : i32
    %c0_i32_1 = arith.constant 0 : i32
    return %c0_i32, %c0_i32_0 : i32, i32
  }
  func.func @transform_1(%arg0: i32) -> (i32, i32) {
    %c0_i32 = arith.constant 0 : i32
    %c0_i32_0 = arith.constant 0 : i32
    %c0_i32_1 = arith.constant 0 : i32
    return %c0_i32, %c0_i32_0 : i32, i32
  }
  func.func @transform_2(%arg0: i32) -> (i32, i32) {
    %c0_i32 = arith.constant 0 : i32
    %c0_i32_0 = arith.constant 0 : i32
    %c0_i32_1 = arith.constant 0 : i32
    return %c0_i32, %c0_i32_0 : i32, i32
  }
  func.func @transform_3(%arg0: i32) -> (i32, i32) {
    %c0_i32 = arith.constant 0 : i32
    %c0_i32_0 = arith.constant 0 : i32
    %c0_i32_1 = arith.constant 0 : i32
    return %c0_i32, %c0_i32_0 : i32, i32
  }
  func.func @transform_4(%arg0: i32) -> (i32, i32) {
    %c0_i32 = arith.constant 0 : i32
    %c0_i32_0 = arith.constant 0 : i32
    %c0_i32_1 = arith.constant 0 : i32
    return %c0_i32, %c0_i32_0 : i32, i32
  }
  func.func @transform_5(%arg0: i32) -> (i32, i32) {
    %c0_i32 = arith.constant 0 : i32
    %c0_i32_0 = arith.constant 0 : i32
    %c0_i32_1 = arith.constant 0 : i32
    return %c0_i32, %c0_i32_0 : i32, i32
  }
  func.func @transform_6(%arg0: i32) -> (i32, i32, i32, i32) {
    %c0_i32 = arith.constant 0 : i32
    %c0_i32_0 = arith.constant 0 : i32
    %c0_i32_1 = arith.constant 0 : i32
    %c0_i32_2 = arith.constant 0 : i32
    %c0_i32_3 = arith.constant 0 : i32
    return %c0_i32, %c0_i32_0, %c0_i32_1, %c0_i32_2 : i32, i32, i32, i32
  }
}

</mosaic_0001>

<llo_original>
// kernel: prepare_static.3
$region0: #{prepare_static.3}
  #allocation0 [shape = 'u32[]', space=smem, size = 0x4, offset = 0x4, fixed_abs, tag = 'smem constant byte address 0x4 - core index']
  #allocation1 [shape = 'u32[144,128]{1,0:T(1,128)}', space=vmem, size = 0x12000, scoped, tag = 'internal scratch']
  %s0 = inlined_call_operand.vmem [shape: f32[10,16], index: 0, kind: input, shape index: {}]
  %s1 = inlined_call_operand.hbm [shape: bf16[16,16], index: 1, kind: input, shape index: {}]
  %s2 = inlined_call_operand.hbm [shape: f32[1,16], index: 2, kind: input, shape index: {}]
  %s3 = inlined_call_operand.vmem [shape: bf16[16,16], index: 3, kind: input, shape index: {}]
  %s4 = inlined_call_operand.vmem [shape: f32[1,16], index: 4, kind: input, shape index: {}]
  %s5 = inlined_call_operand.vmem [shape: bf16[10,16], index: 5, kind: output, shape index: {}]
  %s6 = sld [smem:[#allocation0]]
  $region38: #{prepare_static.3} parent=0
    _
  %s8 = ssub.s32 1, %s6
  %s9 = scalar_select 0, %s8, %s6
  $region1: #{prepare_static.3} parent=0
    #allocation2 [shape = 'u8[4096]{0}', space=vmem, size = 0x1000, scoped, tag = 'input window, operand 1, single buffered']
    #allocation3 [shape = 's32[1]{0}', space=sflag, size = 0x4, scoped, tag = 'scoped memory for prepare_static.3']
    #allocation4 [shape = 'u8[512]{0}', space=vmem, size = 0x400, scoped, tag = 'input window, operand 2, single buffered']
    #allocation5 [shape = 's32[1]{0}', space=sflag, size = 0x4, scoped, tag = 'scoped memory for prepare_static.3']
    %10 = vsyncpa [#allocation3], 0
    %11 = vsyncpa [#allocation5], 0
    // Predicated region
    $region2: #{prepare_static.3} parent=1 // pred_check
      _
    $region3: #{prepare_static.3} parent=1 // pred_check_branch
      %13 = sbr.rel (0) target = $region5
    $region4: #{prepare_static.3} parent=1 // pred_region
      _
    $region5: #{prepare_static.3} parent=1 // pred_fallthru
      _
    // Predicated region
    $region6: #{prepare_static.3} parent=1 // pred_check
      _
    $region7: #{prepare_static.3} parent=1 // pred_check_branch
      %15 = sbr.rel (0) target = $region9
    $region8: #{prepare_static.3} parent=1 // pred_region
      %s17 = ssub.s32 128, 128
      %18 = vsyncadd [#allocation3], %s17
      %s19 = sshll.u32 [#allocation2], 4
      %s20 = int_to_ptr.vmem [resolvable:$true] %s19
      %25 = dma.hbm_to_vmem [thread:$0]  %s1, 128, %s20, [#allocation3], 64, 64, 4
    $region9: #{prepare_static.3} parent=1 // pred_fallthru
      _
    // Predicated region
    $region10: #{prepare_static.3} parent=1 // pred_check
      _
    $region11: #{prepare_static.3} parent=1 // pred_check_branch
      %27 = sbr.rel (0) target = $region13
    $region12: #{prepare_static.3} parent=1 // pred_region
      %s29 = ssub.s32 16, 16
      %30 = vsyncadd [#allocation5], %s29
      %s32 = sshll.u32 [#allocation4], 4
      %s33 = int_to_ptr.vmem [resolvable:$true] %s32
      %35 = dma.hbm_to_vmem [thread:$0]  %s2, 16, %s33, [#allocation5]
    $region13: #{prepare_static.3} parent=1 // pred_fallthru
      _
    // Predicated region
    $region14: #{prepare_static.3} parent=1 // pred_check
      _
    $region15: #{prepare_static.3} parent=1 // pred_check_branch
      %37 = sbr.rel (0) target = $region17
    $region16: #{prepare_static.3} parent=1 // pred_region
      _
    $region17: #{prepare_static.3} parent=1 // pred_fallthru
      _
    // Predicated region
    $region18: #{prepare_static.3} parent=1 // pred_check
      _
    $region19: #{prepare_static.3} parent=1 // pred_check_branch
      %39 = sbr.rel (0) target = $region21
    $region20: #{prepare_static.3} parent=1 // pred_region
      _
    $region21: #{prepare_static.3} parent=1 // pred_fallthru
      _
    // Predicated region
    $region22: #{prepare_static.3} parent=1 // pred_check
      _
    $region23: #{prepare_static.3} parent=1 // pred_check_branch
      %41 = sbr.rel (0) target = $region25
    $region24: #{prepare_static.3} parent=1 // pred_region
      %42 = dma.done [#allocation3], 128
    $region25: #{prepare_static.3} parent=1 // pred_fallthru
      _
    // Predicated region
    $region26: #{prepare_static.3} parent=1 // pred_check
      _
    $region27: #{prepare_static.3} parent=1 // pred_check_branch
      %44 = sbr.rel (0) target = $region29
    $region28: #{prepare_static.3} parent=1 // pred_region
      %45 = dma.done [#allocation5], 16
    $region29: #{prepare_static.3} parent=1 // pred_fallthru
      _
    %v47 = vld [vmem:[%s0] sm:$0xff]
    %v48 = vld [vmem:[%s0 + $0x8] sm:$0xff]
    %v49 = vld [vmem:[#allocation2] sm:$0xf]
    %v50 = vld [vmem:[#allocation2 + $0x4] sm:$0xf]
    %v51 = vld [vmem:[#allocation4] sm:$0x1]
    %v52 = vpack.c.bf16 %v48, %v47
    %v54 = vlaneseq
    %v55 = vshrl.u32 %v54, 7
    %v56 = vsub.s32 0, %v55
    %v57 = vrot.slane %v51, %v56
    %v61 = vunpack.c.l.b16 %v49
    %v62 = vunpack.c.l.b16 %v50
    %v63 = vpack.c.b16 %v62, %v61
    %vm65 = vcmask 130048
    %v67 = vsel %vm65, %v52, 0
    %69 = vmatprep.subr.bf16.mxu0 0
    %70 = vmatpush1.bf16.msra.mxu0 %v63
    %71 = vmatprep.subr.bf16.mxu0 0
    %72 = vmatpush1.bf16.msra.mxu0 0
    %73 = vmatprep.subr.bf16.mxu0 0
    %74 = vmatpush1.bf16.msra.mxu0 0
    %75 = vmatprep.subr.bf16.mxu0 0
    %76 = vmatpush1.bf16.msra.mxu0 0
    %77 = vmatprep.subr.bf16.mxu0 0
    %78 = vmatpush1.bf16.msra.mxu0 0
    %79 = vmatprep.subr.bf16.mxu0 0
    %80 = vmatpush1.bf16.msra.mxu0 0
    %81 = vmatprep.subr.bf16.mxu0 0
    %82 = vmatpush1.bf16.msra.mxu0 0
    %83 = vmatprep.subr.bf16.mxu0 0
    %84 = vmatpush1.bf16.msra.mxu0 0
    %85 = vmatprep.subr.bf16.mxu0 0
    %86 = vmatpush1.bf16.msra.mxu0 0
    %87 = vmatprep.subr.bf16.mxu0 0
    %88 = vmatpush1.bf16.msra.mxu0 0
    %89 = vmatprep.subr.bf16.mxu0 0
    %90 = vmatpush1.bf16.msra.mxu0 0
    %91 = vmatprep.subr.bf16.mxu0 0
    %92 = vmatpush1.bf16.msra.mxu0 0
    %93 = vmatprep.subr.bf16.mxu0 0
    %94 = vmatpush1.bf16.msra.mxu0 0
    %95 = vmatprep.subr.bf16.mxu0 0
    %96 = vmatpush1.bf16.msra.mxu0 0
    %97 = vmatprep.subr.bf16.mxu0 0
    %98 = vmatpush1.bf16.msra.mxu0 0
    %99 = vmatprep.subr.bf16.mxu0 0
    %100 = vmatpush1.bf16.msra.mxu0 0
    %101 = vmatprep.mubr.bf16.mxu0 0
    %102 = vmatmul.mubr.bf16.gmra.mrb[0].mxu0 %v67
    %v103 = vpop.f32.mrb[0].mxu0
    %v104 = vadd.f32 %v57, %v103
    %v105 = vpop.f32.mrb[0].mxu0
    %v106 = vpop.f32.mrb[0].mxu0
    %v107 = vadd.f32 %v57, %v106
    %v108 = vpop.f32.mrb[0].mxu0
    %109 = vdwg.mxu0
    %v110 = vmax.f32 %v104, 0.0
    %v111 = vmax.f32 %v107, 0.0
    %v112 = vld [vmem:[%s3] sm:$0xf]
    %v113 = vld [vmem:[%s3 + $0x4] sm:$0xf]
    %v114 = vld [vmem:[%s4] sm:$0x1]
    %v115 = vpack.c.bf16 %v111, %v110
    %v117 = vlaneseq
    %v118 = vshrl.u32 %v117, 7
    %v119 = vsub.s32 0, %v118
    %v120 = vrot.slane %v114, %v119
    %v124 = vunpack.c.l.b16 %v112
    %v125 = vunpack.c.l.b16 %v113
    %v126 = vpack.c.b16 %v125, %v124
    %v129 = vsel %vm65, %v115, 0
    %131 = vmatprep.subr.bf16.mxu0 0
    %132 = vmatpush1.bf16.msra.mxu0 %v126
    %133 = vmatprep.subr.bf16.mxu0 0
    %134 = vmatpush1.bf16.msra.mxu0 0
    %135 = vmatprep.subr.bf16.mxu0 0
    %136 = vmatpush1.bf16.msra.mxu0 0
    %137 = vmatprep.subr.bf16.mxu0 0
    %138 = vmatpush1.bf16.msra.mxu0 0
    %139 = vmatprep.subr.bf16.mxu0 0
    %140 = vmatpush1.bf16.msra.mxu0 0
    %141 = vmatprep.subr.bf16.mxu0 0
    %142 = vmatpush1.bf16.msra.mxu0 0
    %143 = vmatprep.subr.bf16.mxu0 0
    %144 = vmatpush1.bf16.msra.mxu0 0
    %145 = vmatprep.subr.bf16.mxu0 0
    %146 = vmatpush1.bf16.msra.mxu0 0
    %147 = vmatprep.subr.bf16.mxu0 0
    %148 = vmatpush1.bf16.msra.mxu0 0
    %149 = vmatprep.subr.bf16.mxu0 0
    %150 = vmatpush1.bf16.msra.mxu0 0
    %151 = vmatprep.subr.bf16.mxu0 0
    %152 = vmatpush1.bf16.msra.mxu0 0
    %153 = vmatprep.subr.bf16.mxu0 0
    %154 = vmatpush1.bf16.msra.mxu0 0
    %155 = vmatprep.subr.bf16.mxu0 0
    %156 = vmatpush1.bf16.msra.mxu0 0
    %157 = vmatprep.subr.bf16.mxu0 0
    %158 = vmatpush1.bf16.msra.mxu0 0
    %159 = vmatprep.subr.bf16.mxu0 0
    %160 = vmatpush1.bf16.msra.mxu0 0
    %161 = vmatprep.subr.bf16.mxu0 0
    %162 = vmatpush1.bf16.msra.mxu0 0
    %163 = vmatprep.mubr.bf16.mxu0 0
    %164 = vmatmul.mubr.bf16.gmra.mrb[0].mxu0 %v129
    %v165 = vpop.f32.mrb[0].mxu0
    %v166 = vadd.f32 %v120, %v165
    %v167 = vpop.f32.mrb[0].mxu0
    %v168 = vpop.f32.mrb[0].mxu0
    %v169 = vadd.f32 %v120, %v168
    %v170 = vpop.f32.mrb[0].mxu0
    %171 = vdwg.mxu0
    %v172 = vpack.c.bf16 %v169, %v166
    %v174 = vunpack.c.l.b16 %v172
    %v175 = vunpack.c.h.b16 %v172
    %v176 = vpack.c.b16 %v174, %v174
    %v177 = vpack.c.b16 %v175, %v175
    %vm180 = vcmask 125952
    %181 = vst.msk [vmem:[%s5] sm:$0xf] %vm180, %v176
    %182 = vst.msk [vmem:[%s5 + $0x4] sm:$0xf] %vm180, %v177
    // Predicated region
    $region30: #{prepare_static.3} parent=1 // pred_check
      _
    $region31: #{prepare_static.3} parent=1 // pred_check_branch
      %184 = sbr.rel (0) target = $region33
    $region32: #{prepare_static.3} parent=1 // pred_region
      _
    $region33: #{prepare_static.3} parent=1 // pred_fallthru
      _
    // Predicated region
    $region34: #{prepare_static.3} parent=1 // pred_check
      _
    $region35: #{prepare_static.3} parent=1 // pred_check_branch
      %186 = sbr.rel (0) target = $region37
    $region36: #{prepare_static.3} parent=1 // pred_region
      _
    $region37: #{prepare_static.3} parent=1 // pred_fallthru
      _
    %187 = vsyncpa [#allocation3], 1
    %188 = vsyncpa [#allocation5], 1

// kernel: prepare_static.4
$region0: #{prepare_static.4}
  #allocation0 [shape = 'u32[]', space=smem, size = 0x4, offset = 0x4, fixed_abs, tag = 'smem constant byte address 0x4 - core index']
  #allocation1 [shape = 'u32[144,128]{1,0:T(1,128)}', space=vmem, size = 0x12000, scoped, tag = 'internal scratch']
  %s0 = inlined_call_operand.vmem [shape: f32[7,7], index: 0, kind: input, shape index: {}]
  %s1 = inlined_call_operand.vmem [shape: bf16[7,16], index: 1, kind: input, shape index: {}]
  %s2 = inlined_call_operand.vmem [shape: f32[1,16], index: 2, kind: input, shape index: {}]
  %s3 = inlined_call_operand.vmem [shape: bf16[16,16], index: 3, kind: input, shape index: {}]
  %s4 = inlined_call_operand.vmem [shape: f32[1,16], index: 4, kind: input, shape index: {}]
  %s5 = inlined_call_operand.vmem [shape: bf16[7,16], index: 5, kind: output, shape index: {}]
  %s6 = sld [smem:[#allocation0]]
  $region30: #{prepare_static.4} parent=0
    _
  %s8 = ssub.s32 1, %s6
  %s9 = scalar_select 0, %s8, %s6
  // Predicated region
  $region2: #{prepare_static.4} parent=0 // pred_check
    _
  $region3: #{prepare_static.4} parent=0 // pred_check_branch
    %11 = sbr.rel (0) target = $region5
  $region4: #{prepare_static.4} parent=0 // pred_region
    _
  $region5: #{prepare_static.4} parent=0 // pred_fallthru
    _
  // Predicated region
  $region6: #{prepare_static.4} parent=0 // pred_check
    _
  $region7: #{prepare_static.4} parent=0 // pred_check_branch
    %13 = sbr.rel (0) target = $region9
  $region8: #{prepare_static.4} parent=0 // pred_region
    _
  $region9: #{prepare_static.4} parent=0 // pred_fallthru
    _
  // Predicated region
  $region10: #{prepare_static.4} parent=0 // pred_check
    _
  $region11: #{prepare_static.4} parent=0 // pred_check_branch
    %15 = sbr.rel (0) target = $region13
  $region12: #{prepare_static.4} parent=0 // pred_region
    _
  $region13: #{prepare_static.4} parent=0 // pred_fallthru
    _
  // Predicated region
  $region14: #{prepare_static.4} parent=0 // pred_check
    _
  $region15: #{prepare_static.4} parent=0 // pred_check_branch
    %17 = sbr.rel (0) target = $region17
  $region16: #{prepare_static.4} parent=0 // pred_region
    _
  $region17: #{prepare_static.4} parent=0 // pred_fallthru
    _
  // Predicated region
  $region18: #{prepare_static.4} parent=0 // pred_check
    _
  $region19: #{prepare_static.4} parent=0 // pred_check_branch
    %19 = sbr.rel (0) target = $region21
  $region20: #{prepare_static.4} parent=0 // pred_region
    _
  $region21: #{prepare_static.4} parent=0 // pred_fallthru
    _
  %v21 = vld [vmem:[%s0] sm:$0xff]
  %v22 = vld [vmem:[%s1] sm:$0xf]
  %v23 = vld [vmem:[%s2] sm:$0x1]
  %v24 = vpack.c.bf16 %v21, %v21
  %v26 = vlaneseq
  %v27 = vshrl.u32 %v26, 7
  %v28 = vsub.s32 0, %v27
  %v29 = vrot.slane %v23, %v28
  %vm31 = vcmask 56320
  %v33 = vsel %vm31, %v24, 0
  %vm35 = vcmask 1042432
  %vm36 = vcmask 1043456
  %v37 = vsel %vm35, 4294967295, 65535
  %v38 = vsel %vm36, %v37, 0
  %v40 = vand.u32 %v22, %v38
  %42 = vmatprep.subr.bf16.mxu0 0
  %43 = vmatpush1.bf16.msra.mxu0 %v40
  %44 = vmatprep.subr.bf16.mxu0 0
  %45 = vmatpush1.bf16.msra.mxu0 0
  %46 = vmatprep.subr.bf16.mxu0 0
  %47 = vmatpush1.bf16.msra.mxu0 0
  %48 = vmatprep.subr.bf16.mxu0 0
  %49 = vmatpush1.bf16.msra.mxu0 0
  %50 = vmatprep.subr.bf16.mxu0 0
  %51 = vmatpush1.bf16.msra.mxu0 0
  %52 = vmatprep.subr.bf16.mxu0 0
  %53 = vmatpush1.bf16.msra.mxu0 0
  %54 = vmatprep.subr.bf16.mxu0 0
  %55 = vmatpush1.bf16.msra.mxu0 0
  %56 = vmatprep.subr.bf16.mxu0 0
  %57 = vmatpush1.bf16.msra.mxu0 0
  %58 = vmatprep.subr.bf16.mxu0 0
  %59 = vmatpush1.bf16.msra.mxu0 0
  %60 = vmatprep.subr.bf16.mxu0 0
  %61 = vmatpush1.bf16.msra.mxu0 0
  %62 = vmatprep.subr.bf16.mxu0 0
  %63 = vmatpush1.bf16.msra.mxu0 0
  %64 = vmatprep.subr.bf16.mxu0 0
  %65 = vmatpush1.bf16.msra.mxu0 0
  %66 = vmatprep.subr.bf16.mxu0 0
  %67 = vmatpush1.bf16.msra.mxu0 0
  %68 = vmatprep.subr.bf16.mxu0 0
  %69 = vmatpush1.bf16.msra.mxu0 0
  %70 = vmatprep.subr.bf16.mxu0 0
  %71 = vmatpush1.bf16.msra.mxu0 0
  %72 = vmatprep.subr.bf16.mxu0 0
  %73 = vmatpush1.bf16.msra.mxu0 0
  %74 = vmatprep.mubr.bf16.mxu0 0
  %75 = vmatmul.mubr.bf16.gmra.mrb[0].mxu0 %v33
  %v76 = vpop.f32.mrb[0].mxu0
  %v77 = vadd.f32 %v29, %v76
  %v78 = vpop.f32.mrb[0].mxu0
  %v79 = vpop.f32.mrb[0].mxu0
  %v80 = vpop.f32.mrb[0].mxu0
  %81 = vdwg.mxu0
  %v82 = vmax.f32 %v77, 0.0
  %v83 = vld [vmem:[%s3] sm:$0xf]
  %v84 = vld [vmem:[%s3 + $0x4] sm:$0xf]
  %v85 = vld [vmem:[%s4] sm:$0x1]
  %v86 = vpack.c.bf16 %v82, %v82
  %v88 = vlaneseq
  %v89 = vshrl.u32 %v88, 7
  %v90 = vsub.s32 0, %v89
  %v91 = vrot.slane %v85, %v90
  %v95 = vunpack.c.l.b16 %v83
  %v96 = vunpack.c.l.b16 %v84
  %v97 = vpack.c.b16 %v96, %v95
  %vm99 = vcmask 130048
  %v101 = vsel %vm99, %v86, 0
  %103 = vmatprep.subr.bf16.mxu0 0
  %104 = vmatpush1.bf16.msra.mxu0 %v97
  %105 = vmatprep.subr.bf16.mxu0 0
  %106 = vmatpush1.bf16.msra.mxu0 0
  %107 = vmatprep.subr.bf16.mxu0 0
  %108 = vmatpush1.bf16.msra.mxu0 0
  %109 = vmatprep.subr.bf16.mxu0 0
  %110 = vmatpush1.bf16.msra.mxu0 0
  %111 = vmatprep.subr.bf16.mxu0 0
  %112 = vmatpush1.bf16.msra.mxu0 0
  %113 = vmatprep.subr.bf16.mxu0 0
  %114 = vmatpush1.bf16.msra.mxu0 0
  %115 = vmatprep.subr.bf16.mxu0 0
  %116 = vmatpush1.bf16.msra.mxu0 0
  %117 = vmatprep.subr.bf16.mxu0 0
  %118 = vmatpush1.bf16.msra.mxu0 0
  %119 = vmatprep.subr.bf16.mxu0 0
  %120 = vmatpush1.bf16.msra.mxu0 0
  %121 = vmatprep.subr.bf16.mxu0 0
  %122 = vmatpush1.bf16.msra.mxu0 0
  %123 = vmatprep.subr.bf16.mxu0 0
  %124 = vmatpush1.bf16.msra.mxu0 0
  %125 = vmatprep.subr.bf16.mxu0 0
  %126 = vmatpush1.bf16.msra.mxu0 0
  %127 = vmatprep.subr.bf16.mxu0 0
  %128 = vmatpush1.bf16.msra.mxu0 0
  %129 = vmatprep.subr.bf16.mxu0 0
  %130 = vmatpush1.bf16.msra.mxu0 0
  %131 = vmatprep.subr.bf16.mxu0 0
  %132 = vmatpush1.bf16.msra.mxu0 0
  %133 = vmatprep.subr.bf16.mxu0 0
  %134 = vmatpush1.bf16.msra.mxu0 0
  %135 = vmatprep.mubr.bf16.mxu0 0
  %136 = vmatmul.mubr.bf16.gmra.mrb[0].mxu0 %v101
  %v137 = vpop.f32.mrb[0].mxu0
  %v138 = vadd.f32 %v91, %v137
  %v139 = vpop.f32.mrb[0].mxu0
  %v140 = vpop.f32.mrb[0].mxu0
  %v141 = vpop.f32.mrb[0].mxu0
  %142 = vdwg.mxu0
  %v143 = vpack.c.bf16 %v138, %v138
  %vm144 = vcmask 125952
  %145 = vst.msk [vmem:[%s5] sm:$0xf] %vm144, %v143
  // Predicated region
  $region22: #{prepare_static.4} parent=0 // pred_check
    _
  $region23: #{prepare_static.4} parent=0 // pred_check_branch
    %147 = sbr.rel (0) target = $region25
  $region24: #{prepare_static.4} parent=0 // pred_region
    _
  $region25: #{prepare_static.4} parent=0 // pred_fallthru
    _
  // Predicated region
  $region26: #{prepare_static.4} parent=0 // pred_check
    _
  $region27: #{prepare_static.4} parent=0 // pred_check_branch
    %149 = sbr.rel (0) target = $region29
  $region28: #{prepare_static.4} parent=0 // pred_region
    _
  $region29: #{prepare_static.4} parent=0 // pred_fallthru
    _

// kernel: prepare_static.5
$region0: #{prepare_static.5}
  #allocation0 [shape = 'u32[]', space=smem, size = 0x4, offset = 0x4, fixed_abs, tag = 'smem constant byte address 0x4 - core index']
  #allocation1 [shape = 'u32[144,128]{1,0:T(1,128)}', space=vmem, size = 0x12000, scoped, tag = 'internal scratch']
  #allocation2 [shape = 'bf16[30,16]{1,0:T(8,128)(2,1)}', space=vmem, size = 0x2000, scoped, tag = 'scratch operand']
  #allocation3 [shape = 'bf16[40,16]{1,0:T(8,128)(2,1)}', space=vmem, size = 0x2800, scoped, tag = 'scratch operand']
  %s0 = inlined_call_operand.vmem [shape: bf16[30,16], index: 0, kind: input, shape index: {}]
  %s1 = inlined_call_operand.vmem [shape: bf16[40,16], index: 1, kind: input, shape index: {}]
  %s2 = inlined_call_operand.vmem [shape: bf16[16,16], index: 2, kind: input, shape index: {}]
  %s3 = inlined_call_operand.vmem [shape: f32[1,16], index: 3, kind: input, shape index: {}]
  %s4 = inlined_call_operand.vmem [shape: bf16[16,16], index: 4, kind: input, shape index: {}]
  %s5 = inlined_call_operand.vmem [shape: f32[1,16], index: 5, kind: input, shape index: {}]
  %s6 = inlined_call_operand.vmem [shape: bf16[10,2,3,4], index: 6, kind: output, shape index: {}]
  %s7 = sld [smem:[#allocation0]]
  $region34: #{prepare_static.5} parent=0
    _
  %s9 = ssub.s32 1, %s7
  %s10 = scalar_select 0, %s9, %s7
  // Predicated region
  $region2: #{prepare_static.5} parent=0 // pred_check
    _
  $region3: #{prepare_static.5} parent=0 // pred_check_branch
    %12 = sbr.rel (0) target = $region5
  $region4: #{prepare_static.5} parent=0 // pred_region
    _
  $region5: #{prepare_static.5} parent=0 // pred_fallthru
    _
  // Predicated region
  $region6: #{prepare_static.5} parent=0 // pred_check
    _
  $region7: #{prepare_static.5} parent=0 // pred_check_branch
    %14 = sbr.rel (0) target = $region9
  $region8: #{prepare_static.5} parent=0 // pred_region
    _
  $region9: #{prepare_static.5} parent=0 // pred_fallthru
    _
  // Predicated region
  $region10: #{prepare_static.5} parent=0 // pred_check
    _
  $region11: #{prepare_static.5} parent=0 // pred_check_branch
    %16 = sbr.rel (0) target = $region13
  $region12: #{prepare_static.5} parent=0 // pred_region
    _
  $region13: #{prepare_static.5} parent=0 // pred_fallthru
    _
  // Predicated region
  $region14: #{prepare_static.5} parent=0 // pred_check
    _
  $region15: #{prepare_static.5} parent=0 // pred_check_branch
    %18 = sbr.rel (0) target = $region17
  $region16: #{prepare_static.5} parent=0 // pred_region
    _
  $region17: #{prepare_static.5} parent=0 // pred_fallthru
    _
  // Predicated region
  $region18: #{prepare_static.5} parent=0 // pred_check
    _
  $region19: #{prepare_static.5} parent=0 // pred_check_branch
    %20 = sbr.rel (0) target = $region21
  $region20: #{prepare_static.5} parent=0 // pred_region
    _
  $region21: #{prepare_static.5} parent=0 // pred_fallthru
    _
  // Predicated region
  $region22: #{prepare_static.5} parent=0 // pred_check
    _
  $region23: #{prepare_static.5} parent=0 // pred_check_branch
    %22 = sbr.rel (0) target = $region25
  $region24: #{prepare_static.5} parent=0 // pred_region
    _
  $region25: #{prepare_static.5} parent=0 // pred_fallthru
    _
  %v24 = vld [vmem:[%s0] sm:$0xf]
  %v25 = vld [vmem:[%s0 + $0x4] sm:$0xf]
  %v26 = vld [vmem:[%s0 + $0x8] sm:$0xf]
  %v27 = vld [vmem:[%s0 + $0xc] sm:$0x7]
  %v28 = vld [vmem:[%s2] sm:$0xf]
  %v29 = vld [vmem:[%s2 + $0x4] sm:$0xf]
  %v30 = vld [vmem:[%s3] sm:$0x1]
  %v32 = vlaneseq
  %v33 = vshrl.u32 %v32, 7
  %v34 = vsub.s32 0, %v33
  %v35 = vrot.slane %v30, %v34
  %v41 = vunpack.c.l.b16 %v24
  %v42 = vunpack.c.l.b16 %v25
  %v43 = vunpack.c.l.b16 %v26
  %v44 = vunpack.c.l.b16 %v27
  %v45 = vpack.c.b16 %v42, %v41
  %v46 = vpack.c.b16 %v44, %v43
  %v49 = vunpack.c.l.b16 %v28
  %v50 = vunpack.c.l.b16 %v29
  %v51 = vpack.c.b16 %v50, %v49
  %vm53 = vcmask 130048
  %v55 = vsel %vm53, %v45, 0
  %v58 = vsel %vm53, %v46, 0
  %60 = vmatprep.subr.bf16.mxu0 0
  %61 = vmatpush1.bf16.msra.mxu0 %v51
  %62 = vmatprep.subr.bf16.mxu0 0
  %63 = vmatpush1.bf16.msra.mxu0 0
  %64 = vmatprep.subr.bf16.mxu0 0
  %65 = vmatpush1.bf16.msra.mxu0 0
  %66 = vmatprep.subr.bf16.mxu0 0
  %67 = vmatpush1.bf16.msra.mxu0 0
  %68 = vmatprep.subr.bf16.mxu0 0
  %69 = vmatpush1.bf16.msra.mxu0 0
  %70 = vmatprep.subr.bf16.mxu0 0
  %71 = vmatpush1.bf16.msra.mxu0 0
  %72 = vmatprep.subr.bf16.mxu0 0
  %73 = vmatpush1.bf16.msra.mxu0 0
  %74 = vmatprep.subr.bf16.mxu0 0
  %75 = vmatpush1.bf16.msra.mxu0 0
  %76 = vmatprep.subr.bf16.mxu0 0
  %77 = vmatpush1.bf16.msra.mxu0 0
  %78 = vmatprep.subr.bf16.mxu0 0
  %79 = vmatpush1.bf16.msra.mxu0 0
  %80 = vmatprep.subr.bf16.mxu0 0
  %81 = vmatpush1.bf16.msra.mxu0 0
  %82 = vmatprep.subr.bf16.mxu0 0
  %83 = vmatpush1.bf16.msra.mxu0 0
  %84 = vmatprep.subr.bf16.mxu0 0
  %85 = vmatpush1.bf16.msra.mxu0 0
  %86 = vmatprep.subr.bf16.mxu0 0
  %87 = vmatpush1.bf16.msra.mxu0 0
  %88 = vmatprep.subr.bf16.mxu0 0
  %89 = vmatpush1.bf16.msra.mxu0 0
  %90 = vmatprep.subr.bf16.mxu0 0
  %91 = vmatpush1.bf16.msra.mxu0 0
  %92 = vmatprep.mubr.bf16.mxu0 0
  %93 = vmatmul.mubr.bf16.gmra.mrb[0].mxu0 %v55
  %v94 = vpop.f32.mrb[0].mxu0
  %v95 = vadd.f32 %v35, %v94
  %v96 = vpop.f32.mrb[0].mxu0
  %v97 = vpop.f32.mrb[0].mxu0
  %v98 = vadd.f32 %v35, %v97
  %v99 = vpop.f32.mrb[0].mxu0
  %100 = vmatprep.mubr.bf16.mxu0 0
  %101 = vmatmul.mubr.bf16.gmra.mrb[0].mxu0 %v58
  %v102 = vpop.f32.mrb[0].mxu0
  %v103 = vadd.f32 %v35, %v102
  %v104 = vpop.f32.mrb[0].mxu0
  %v105 = vpop.f32.mrb[0].mxu0
  %v106 = vadd.f32 %v35, %v105
  %v107 = vpop.f32.mrb[0].mxu0
  %108 = vdwg.mxu0
  %v109 = vmax.f32 %v95, 0.0
  %v110 = vmax.f32 %v98, 0.0
  %v111 = vmax.f32 %v103, 0.0
  %v112 = vmax.f32 %v106, 0.0
  %v113 = vld [vmem:[%s1] sm:$0xf]
  %v114 = vld [vmem:[%s1 + $0x4] sm:$0xf]
  %v115 = vld [vmem:[%s1 + $0x8] sm:$0xf]
  %v116 = vld [vmem:[%s1 + $0xc] sm:$0xf]
  %v117 = vld [vmem:[%s1 + $0x10] sm:$0xf]
  %v118 = vld [vmem:[%s4] sm:$0xf]
  %v119 = vld [vmem:[%s4 + $0x4] sm:$0xf]
  %v120 = vld [vmem:[%s5] sm:$0x1]
  %v122 = vlaneseq
  %v123 = vshrl.u32 %v122, 7
  %v124 = vsub.s32 0, %v123
  %v125 = vrot.slane %v120, %v124
  %v132 = vunpack.c.l.b16 %v113
  %v133 = vunpack.c.l.b16 %v114
  %v134 = vunpack.c.l.b16 %v115
  %v135 = vunpack.c.l.b16 %v116
  %v136 = vunpack.c.l.b16 %v117
  %v137 = vpack.c.b16 %v133, %v132
  %v138 = vpack.c.b16 %v135, %v134
  %v139 = vpack.c.b16 %v136, %v136
  %v142 = vunpack.c.l.b16 %v118
  %v143 = vunpack.c.l.b16 %v119
  %v144 = vpack.c.b16 %v143, %v142
  %v147 = vsel %vm53, %v137, 0
  %v150 = vsel %vm53, %v138, 0
  %v153 = vsel %vm53, %v139, 0
  %155 = vmatprep.subr.bf16.mxu0 0
  %156 = vmatpush1.bf16.msra.mxu0 %v144
  %157 = vmatprep.subr.bf16.mxu0 0
  %158 = vmatpush1.bf16.msra.mxu0 0
  %159 = vmatprep.subr.bf16.mxu0 0
  %160 = vmatpush1.bf16.msra.mxu0 0
  %161 = vmatprep.subr.bf16.mxu0 0
  %162 = vmatpush1.bf16.msra.mxu0 0
  %163 = vmatprep.subr.bf16.mxu0 0
  %164 = vmatpush1.bf16.msra.mxu0 0
  %165 = vmatprep.subr.bf16.mxu0 0
  %166 = vmatpush1.bf16.msra.mxu0 0
  %167 = vmatprep.subr.bf16.mxu0 0
  %168 = vmatpush1.bf16.msra.mxu0 0
  %169 = vmatprep.subr.bf16.mxu0 0
  %170 = vmatpush1.bf16.msra.mxu0 0
  %171 = vmatprep.subr.bf16.mxu0 0
  %172 = vmatpush1.bf16.msra.mxu0 0
  %173 = vmatprep.subr.bf16.mxu0 0
  %174 = vmatpush1.bf16.msra.mxu0 0
  %175 = vmatprep.subr.bf16.mxu0 0
  %176 = vmatpush1.bf16.msra.mxu0 0
  %177 = vmatprep.subr.bf16.mxu0 0
  %178 = vmatpush1.bf16.msra.mxu0 0
  %179 = vmatprep.subr.bf16.mxu0 0
  %180 = vmatpush1.bf16.msra.mxu0 0
  %181 = vmatprep.subr.bf16.mxu0 0
  %182 = vmatpush1.bf16.msra.mxu0 0
  %183 = vmatprep.subr.bf16.mxu0 0
  %184 = vmatpush1.bf16.msra.mxu0 0
  %185 = vmatprep.subr.bf16.mxu0 0
  %186 = vmatpush1.bf16.msra.mxu0 0
  %187 = vmatprep.mubr.bf16.mxu0 0
  %188 = vmatmul.mubr.bf16.gmra.mrb[0].mxu0 %v147
  %v189 = vpop.f32.mrb[0].mxu0
  %v190 = vadd.f32 %v125, %v189
  %v191 = vpop.f32.mrb[0].mxu0
  %v192 = vpop.f32.mrb[0].mxu0
  %v193 = vadd.f32 %v125, %v192
  %v194 = vpop.f32.mrb[0].mxu0
  %195 = vmatprep.mubr.bf16.mxu0 0
  %196 = vmatmul.mubr.bf16.gmra.mrb[0].mxu0 %v150
  %v197 = vpop.f32.mrb[0].mxu0
  %v198 = vadd.f32 %v125, %v197
  %v199 = vpop.f32.mrb[0].mxu0
  %v200 = vpop.f32.mrb[0].mxu0
  %v201 = vadd.f32 %v125, %v200
  %v202 = vpop.f32.mrb[0].mxu0
  %203 = vmatprep.mubr.bf16.mxu0 0
  %204 = vmatmul.mubr.bf16.gmra.mrb[0].mxu0 %v153
  %v205 = vpop.f32.mrb[0].mxu0
  %v206 = vadd.f32 %v125, %v205
  %v207 = vpop.f32.mrb[0].mxu0
  %v208 = vpop.f32.mrb[0].mxu0
  %v209 = vpop.f32.mrb[0].mxu0
  %210 = vdwg.mxu0
  %v211 = vmax.f32 %v190, 0.0
  %v212 = vmax.f32 %v193, 0.0
  %v213 = vmax.f32 %v198, 0.0
  %v214 = vmax.f32 %v201, 0.0
  %v215 = vmax.f32 %v206, 0.0
  %v216 = vpack.c.bf16 %v110, %v109
  %v217 = vpack.c.bf16 %v112, %v111
  %v220 = vunpack.c.l.b16 %v216
  %v221 = vunpack.c.h.b16 %v216
  %v222 = vunpack.c.l.b16 %v217
  %v223 = vunpack.c.h.b16 %v217
  %v224 = vpack.c.b16 %v220, %v220
  %v225 = vpack.c.b16 %v221, %v221
  %v226 = vpack.c.b16 %v222, %v222
  %v227 = vpack.c.b16 %v223, %v223
  %vm232 = vcmask 125952
  %233 = vst.msk [vmem:[#allocation2] sm:$0xf] %vm232, %v224
  %234 = vst.msk [vmem:[#allocation2 + $0x4] sm:$0xf] %vm232, %v225
  %235 = vst.msk [vmem:[#allocation2 + $0x8] sm:$0xf] %vm232, %v226
  %vm236 = vcmask 124928
  %237 = vst.msk [vmem:[#allocation2 + $0xc] sm:$0x7] %vm236, %v227
  %v238 = vpack.c.bf16 %v212, %v211
  %v239 = vpack.c.bf16 %v214, %v213
  %v240 = vpack.c.bf16 %v215, %v215
  %v244 = vunpack.c.l.b16 %v238
  %v245 = vunpack.c.h.b16 %v238
  %v246 = vunpack.c.l.b16 %v239
  %v247 = vunpack.c.h.b16 %v239
  %v248 = vunpack.c.l.b16 %v240
  %v249 = vpack.c.b16 %v244, %v244
  %v250 = vpack.c.b16 %v245, %v245
  %v251 = vpack.c.b16 %v246, %v246
  %v252 = vpack.c.b16 %v247, %v247
  %v253 = vpack.c.b16 %v248, %v248
  %259 = vst.msk [vmem:[#allocation3] sm:$0xf] %vm232, %v249
  %260 = vst.msk [vmem:[#allocation3 + $0x4] sm:$0xf] %vm232, %v250
  %261 = vst.msk [vmem:[#allocation3 + $0x8] sm:$0xf] %vm232, %v251
  %262 = vst.msk [vmem:[#allocation3 + $0xc] sm:$0xf] %vm232, %v252
  %263 = vst.msk [vmem:[#allocation3 + $0x10] sm:$0xf] %vm232, %v253
  %v264 = vld [vmem:[#allocation2] sm:$0x3]
  %v265 = vld [vmem:[#allocation3] sm:$0x3]
  %vm266 = vcmask 64512
  %v268 = vsel %vm266, %v264, 0
  %v271 = vsel %vm266, %v265, 0
  %273 = vmatprep.subr.bf16.mxu0 0
  %274 = vmatpush1.bf16.xpose.msra.mxu0 %v271
  %275 = vmatprep.subr.bf16.mxu0 0
  %276 = vmatpush1.bf16.xpose.msra.mxu0 0
  %277 = vmatprep.subr.bf16.mxu0 0
  %278 = vmatpush1.bf16.xpose.msra.mxu0 0
  %279 = vmatprep.subr.bf16.mxu0 0
  %280 = vmatpush1.bf16.xpose.msra.mxu0 0
  %281 = vmatprep.subr.bf16.mxu0 0
  %282 = vmatpush1.bf16.xpose.msra.mxu0 0
  %283 = vmatprep.subr.bf16.mxu0 0
  %284 = vmatpush1.bf16.xpose.msra.mxu0 0
  %285 = vmatprep.subr.bf16.mxu0 0
  %286 = vmatpush1.bf16.xpose.msra.mxu0 0
  %287 = vmatprep.subr.bf16.mxu0 0
  %288 = vmatpush1.bf16.xpose.msra.mxu0 0
  %289 = vmatprep.subr.bf16.mxu0 0
  %290 = vmatpush1.bf16.xpose.msra.mxu0 0
  %291 = vmatprep.subr.bf16.mxu0 0
  %292 = vmatpush1.bf16.xpose.msra.mxu0 0
  %293 = vmatprep.subr.bf16.mxu0 0
  %294 = vmatpush1.bf16.xpose.msra.mxu0 0
  %295 = vmatprep.subr.bf16.mxu0 0
  %296 = vmatpush1.bf16.xpose.msra.mxu0 0
  %297 = vmatprep.subr.bf16.mxu0 0
  %298 = vmatpush1.bf16.xpose.msra.mxu0 0
  %299 = vmatprep.subr.bf16.mxu0 0
  %300 = vmatpush1.bf16.xpose.msra.mxu0 0
  %301 = vmatprep.subr.bf16.mxu0 0
  %302 = vmatpush1.bf16.xpose.msra.mxu0 0
  %303 = vmatprep.subr.bf16.mxu0 0
  %304 = vmatpush1.bf16.xpose.msra.mxu0 0
  %305 = vmatprep.mubr.bf16.mxu0 0
  %306 = vmatmul.mubr.bf16.gmra.mrb[0].mxu0 %v268
  %v307 = vpop.f32.mrb[0].mxu0
  %v308 = vadd.f32 0.0, %v307
  %v309 = vpop.f32.mrb[0].mxu0
  %v310 = vpop.f32.mrb[0].mxu0
  %v311 = vpop.f32.mrb[0].mxu0
  %312 = vdwg.mxu0
  %v313 = vmul.f32 %v308, 0.35355338
  %vm314 = vcmask 26624
  %v315 = vsel %vm314, %v313, -inf
  %316 = vmax.xlane.f32.xlu0 %v315
  %v317 = vpop.xlane.xlu0 %316
  %v318 = vsub.f32 %v313, %v317
  %v319 = vmul.f32 %v318, 1.442695
  %v320 = vpow.pop %v319
  %v321 = vsel %vm314, %v320, 0.0
  %322 = vadd.xlane.f32.xlu0 %v321
  %v323 = vpop.xlane.xlu0 %322
  %v324 = vrcp.pop %v323
  %v325 = vmul.f32 %v320, %v324
  %v326 = vpack.c.bf16 %v325, %v325
  %vm327 = vcmask 25600
  %vm328 = vsmask.f32 1280
  %vm329 = vmand %vm327, %vm328
  %v330 = vld [vmem:[%s6] sm:$0x3]
  %v331 = vsel %vm329, %v326, %v330
  %332 = vst [vmem:[%s6] sm:$0x3] %v331
  %v334 = vunpack.c.l.b16 %v264
  %v335 = vpack.c.b16 %v334, %v334
  %336 = vrot.lane.b32.xlu0 %v335, 120
  %v337 = vpop.permute.xlu0 %336
  %v339 = vunpack.c.l.b16 %v265
  %v340 = vpack.c.b16 %v339, %v339
  %341 = vrot.lane.b32.xlu0 %v340, 120
  %v342 = vpop.permute.xlu0 %341
  %v344 = vsel %vm266, %v337, 0
  %v347 = vsel %vm266, %v342, 0
  %349 = vmatprep.subr.bf16.mxu0 0
  %350 = vmatpush1.bf16.xpose.msra.mxu0 %v347
  %351 = vmatprep.subr.bf16.mxu0 0
  %352 = vmatpush1.bf16.xpose.msra.mxu0 0
  %353 = vmatprep.subr.bf16.mxu0 0
  %354 = vmatpush1.bf16.xpose.msra.mxu0 0
  %355 = vmatprep.subr.bf16.mxu0 0
  %356 = vmatpush1.bf16.xpose.msra.mxu0 0
  %357 = vmatprep.subr.bf16.mxu0 0
  %358 = vmatpush1.bf16.xpose.msra.mxu0 0
  %359 = vmatprep.subr.bf16.mxu0 0
  %360 = vmatpush1.bf16.xpose.msra.mxu0 0
  %361 = vmatprep.subr.bf16.mxu0 0
  %362 = vmatpush1.bf16.xpose.msra.mxu0 0
  %363 = vmatprep.subr.bf16.mxu0 0
  %364 = vmatpush1.bf16.xpose.msra.mxu0 0
  %365 = vmatprep.subr.bf16.mxu0 0
  %366 = vmatpush1.bf16.xpose.msra.mxu0 0
  %367 = vmatprep.subr.bf16.mxu0 0
  %368 = vmatpush1.bf16.xpose.msra.mxu0 0
  %369 = vmatprep.subr.bf16.mxu0 0
  %370 = vmatpush1.bf16.xpose.msra.mxu0 0
  %371 = vmatprep.subr.bf16.mxu0 0
  %372 = vmatpush1.bf16.xpose.msra.mxu0 0
  %373 = vmatprep.subr.bf16.mxu0 0
  %374 = vmatpush1.bf16.xpose.msra.mxu0 0
  %375 = vmatprep.subr.bf16.mxu0 0
  %376 = vmatpush1.bf16.xpose.msra.mxu0 0
  %377 = vmatprep.subr.bf16.mxu0 0
  %378 = vmatpush1.bf16.xpose.msra.mxu0 0
  %379 = vmatprep.subr.bf16.mxu0 0
  %380 = vmatpush1.bf16.xpose.msra.mxu0 0
  %381 = vmatprep.mubr.bf16.mxu0 0
  %382 = vmatmul.mubr.bf16.gmra.mrb[0].mxu0 %v344
  %v383 = vpop.f32.mrb[0].mxu0
  %v384 = vadd.f32 0.0, %v383
  %v385 = vpop.f32.mrb[0].mxu0
  %v386 = vpop.f32.mrb[0].mxu0
  %v387 = vpop.f32.mrb[0].mxu0
  %388 = vdwg.mxu0
  %v389 = vmul.f32 %v384, 0.35355338
  %v390 = vsel %vm314, %v389, -inf
  %391 = vmax.xlane.f32.xlu0 %v390
  %v392 = vpop.xlane.xlu0 %391
  %v393 = vsub.f32 %v389, %v392
  %v394 = vmul.f32 %v393, 1.442695
  %v395 = vpow.pop %v394
  %v396 = vsel %vm314, %v395, 0.0
  %397 = vadd.xlane.f32.xlu0 %v396
  %v398 = vpop.xlane.xlu0 %397
  %v399 = vrcp.pop %v398
  %v400 = vmul.f32 %v395, %v399
  %v401 = vpack.c.bf16 %v400, %v400
  %s402 = scalar_lea.vmem %s6, 2
  %v403 = vld [vmem:[%s402] sm:$0x3]
  %v404 = vsel %vm329, %v401, %v403
  %405 = vst [vmem:[%s402] sm:$0x3] %v404
  %v406 = vld [vmem:[#allocation2] sm:$0x6]
  %v407 = vld [vmem:[#allocation3] sm:$0xc]
  %v409 = vunpack.c.l.b16 %v406
  %v410 = vpack.c.b16 %v409, %v409
  %v412 = vshrl.u32 %v410, 16
  %v414 = vrot.slane %v412, 1
  %v415 = vshll.u32 %v410, 16
  %v417 = vrot.slane %v415, 2
  %v418 = vor.u32 %v414, %v417
  %v420 = vunpack.c.l.b16 %v407
  %v421 = vpack.c.b16 %v420, %v420
  %v422 = vrot.slane %v421, 2
  %v424 = vsel %vm266, %v418, 0
  %v427 = vsel %vm266, %v422, 0
  %429 = vmatprep.subr.bf16.mxu0 0
  %430 = vmatpush1.bf16.xpose.msra.mxu0 %v427
  %431 = vmatprep.subr.bf16.mxu0 0
  %432 = vmatpush1.bf16.xpose.msra.mxu0 0
  %433 = vmatprep.subr.bf16.mxu0 0
  %434 = vmatpush1.bf16.xpose.msra.mxu0 0
  %435 = vmatprep.subr.bf16.mxu0 0
  %436 = vmatpush1.bf16.xpose.msra.mxu0 0
  %437 = vmatprep.subr.bf16.mxu0 0
  %438 = vmatpush1.bf16.xpose.msra.mxu0 0
  %439 = vmatprep.subr.bf16.mxu0 0
  %440 = vmatpush1.bf16.xpose.msra.mxu0 0
  %441 = vmatprep.subr.bf16.mxu0 0
  %442 = vmatpush1.bf16.xpose.msra.mxu0 0
  %443 = vmatprep.subr.bf16.mxu0 0
  %444 = vmatpush1.bf16.xpose.msra.mxu0 0
  %445 = vmatprep.subr.bf16.mxu0 0
  %446 = vmatpush1.bf16.xpose.msra.mxu0 0
  %447 = vmatprep.subr.bf16.mxu0 0
  %448 = vmatpush1.bf16.xpose.msra.mxu0 0
  %449 = vmatprep.subr.bf16.mxu0 0
  %450 = vmatpush1.bf16.xpose.msra.mxu0 0
  %451 = vmatprep.subr.bf16.mxu0 0
  %452 = vmatpush1.bf16.xpose.msra.mxu0 0
  %453 = vmatprep.subr.bf16.mxu0 0
  %454 = vmatpush1.bf16.xpose.msra.mxu0 0
  %455 = vmatprep.subr.bf16.mxu0 0
  %456 = vmatpush1.bf16.xpose.msra.mxu0 0
  %457 = vmatprep.subr.bf16.mxu0 0
  %458 = vmatpush1.bf16.xpose.msra.mxu0 0
  %459 = vmatprep.subr.bf16.mxu0 0
  %460 = vmatpush1.bf16.xpose.msra.mxu0 0
  %461 = vmatprep.mubr.bf16.mxu0 0
  %462 = vmatmul.mubr.bf16.gmra.mrb[0].mxu0 %v424
  %v463 = vpop.f32.mrb[0].mxu0
  %v464 = vadd.f32 0.0, %v463
  %v465 = vpop.f32.mrb[0].mxu0
  %v466 = vpop.f32.mrb[0].mxu0
  %v467 = vpop.f32.mrb[0].mxu0
  %468 = vdwg.mxu0
  %v469 = vmul.f32 %v464, 0.35355338
  %v470 = vsel %vm314, %v469, -inf
  %471 = vmax.xlane.f32.xlu0 %v470
  %v472 = vpop.xlane.xlu0 %471
  %v473 = vsub.f32 %v469, %v472
  %v474 = vmul.f32 %v473, 1.442695
  %v475 = vpow.pop %v474
  %v476 = vsel %vm314, %v475, 0.0
  %477 = vadd.xlane.f32.xlu0 %v476
  %v478 = vpop.xlane.xlu0 %477
  %v479 = vrcp.pop %v478
  %v480 = vmul.f32 %v475, %v479
  %v481 = vpack.c.bf16 %v480, %v480
  %s482 = scalar_lea.vmem %s6, 4
  %v483 = vld [vmem:[%s482] sm:$0x3]
  %v484 = vsel %vm329, %v481, %v483
  %485 = vst [vmem:[%s482] sm:$0x3] %v484
  %486 = vrot.lane.b32.xlu0 %v418, 120
  %v487 = vpop.permute.xlu0 %486
  %488 = vrot.lane.b32.xlu0 %v422, 120
  %v489 = vpop.permute.xlu0 %488
  %v491 = vsel %vm266, %v487, 0
  %v494 = vsel %vm266, %v489, 0
  %496 = vmatprep.subr.bf16.mxu0 0
  %497 = vmatpush1.bf16.xpose.msra.mxu0 %v494
  %498 = vmatprep.subr.bf16.mxu0 0
  %499 = vmatpush1.bf16.xpose.msra.mxu0 0
  %500 = vmatprep.subr.bf16.mxu0 0
  %501 = vmatpush1.bf16.xpose.msra.mxu0 0
  %502 = vmatprep.subr.bf16.mxu0 0
  %503 = vmatpush1.bf16.xpose.msra.mxu0 0
  %504 = vmatprep.subr.bf16.mxu0 0
  %505 = vmatpush1.bf16.xpose.msra.mxu0 0
  %506 = vmatprep.subr.bf16.mxu0 0
  %507 = vmatpush1.bf16.xpose.msra.mxu0 0
  %508 = vmatprep.subr.bf16.mxu0 0
  %509 = vmatpush1.bf16.xpose.msra.mxu0 0
  %510 = vmatprep.subr.bf16.mxu0 0
  %511 = vmatpush1.bf16.xpose.msra.mxu0 0
  %512 = vmatprep.subr.bf16.mxu0 0
  %513 = vmatpush1.bf16.xpose.msra.mxu0 0
  %514 = vmatprep.subr.bf16.mxu0 0
  %515 = vmatpush1.bf16.xpose.msra.mxu0 0
  %516 = vmatprep.subr.bf16.mxu0 0
  %517 = vmatpush1.bf16.xpose.msra.mxu0 0
  %518 = vmatprep.subr.bf16.mxu0 0
  %519 = vmatpush1.bf16.xpose.msra.mxu0 0
  %520 = vmatprep.subr.bf16.mxu0 0
  %521 = vmatpush1.bf16.xpose.msra.mxu0 0
  %522 = vmatprep.subr.bf16.mxu0 0
  %523 = vmatpush1.bf16.xpose.msra.mxu0 0
  %524 = vmatprep.subr.bf16.mxu0 0
  %525 = vmatpush1.bf16.xpose.msra.mxu0 0
  %526 = vmatprep.subr.bf16.mxu0 0
  %527 = vmatpush1.bf16.xpose.msra.mxu0 0
  %528 = vmatprep.mubr.bf16.mxu0 0
  %529 = vmatmul.mubr.bf16.gmra.mrb[0].mxu0 %v491
  %v530 = vpop.f32.mrb[0].mxu0
  %v531 = vadd.f32 0.0, %v530
  %v532 = vpop.f32.mrb[0].mxu0
  %v533 = vpop.f32.mrb[0].mxu0
  %v534 = vpop.f32.mrb[0].mxu0
  %535 = vdwg.mxu0
  %v536 = vmul.f32 %v531, 0.35355338
  %v537 = vsel %vm314, %v536, -inf
  %538 = vmax.xlane.f32.xlu0 %v537
  %v539 = vpop.xlane.xlu0 %538
  %v540 = vsub.f32 %v536, %v539
  %v541 = vmul.f32 %v540, 1.442695
  %v542 = vpow.pop %v541
  %v543 = vsel %vm314, %v542, 0.0
  %544 = vadd.xlane.f32.xlu0 %v543
  %v545 = vpop.xlane.xlu0 %544
  %v546 = vrcp.pop %v545
  %v547 = vmul.f32 %v542, %v546
  %v548 = vpack.c.bf16 %v547, %v547
  %s549 = scalar_lea.vmem %s6, 6
  %v550 = vld [vmem:[%s549] sm:$0x3]
  %v551 = vsel %vm329, %v548, %v550
  %552 = vst [vmem:[%s549] sm:$0x3] %v551
  %v553 = vld [vmem:[#allocation2] sm:$0x8]
  %v554 = vld [vmem:[#allocation2 + $0x4] sm:$0x1]
  %v555 = vld [vmem:[#allocation3 + $0x4] sm:$0x3]
  %v558 = vunpack.c.l.b16 %v553
  %v559 = vunpack.c.l.b16 %v554
  %v560 = vpack.c.b16 %v559, %v558
  %v561 = vrot.slane %v560, 3
  %v563 = vsel %vm266, %v561, 0
  %v566 = vsel %vm266, %v555, 0
  %568 = vmatprep.subr.bf16.mxu0 0
  %569 = vmatpush1.bf16.xpose.msra.mxu0 %v566
  %570 = vmatprep.subr.bf16.mxu0 0
  %571 = vmatpush1.bf16.xpose.msra.mxu0 0
  %572 = vmatprep.subr.bf16.mxu0 0
  %573 = vmatpush1.bf16.xpose.msra.mxu0 0
  %574 = vmatprep.subr.bf16.mxu0 0
  %575 = vmatpush1.bf16.xpose.msra.mxu0 0
  %576 = vmatprep.subr.bf16.mxu0 0
  %577 = vmatpush1.bf16.xpose.msra.mxu0 0
  %578 = vmatprep.subr.bf16.mxu0 0
  %579 = vmatpush1.bf16.xpose.msra.mxu0 0
  %580 = vmatprep.subr.bf16.mxu0 0
  %581 = vmatpush1.bf16.xpose.msra.mxu0 0
  %582 = vmatprep.subr.bf16.mxu0 0
  %583 = vmatpush1.bf16.xpose.msra.mxu0 0
  %584 = vmatprep.subr.bf16.mxu0 0
  %585 = vmatpush1.bf16.xpose.msra.mxu0 0
  %586 = vmatprep.subr.bf16.mxu0 0
  %587 = vmatpush1.bf16.xpose.msra.mxu0 0
  %588 = vmatprep.subr.bf16.mxu0 0
  %589 = vmatpush1.bf16.xpose.msra.mxu0 0
  %590 = vmatprep.subr.bf16.mxu0 0
  %591 = vmatpush1.bf16.xpose.msra.mxu0 0
  %592 = vmatprep.subr.bf16.mxu0 0
  %593 = vmatpush1.bf16.xpose.msra.mxu0 0
  %594 = vmatprep.subr.bf16.mxu0 0
  %595 = vmatpush1.bf16.xpose.msra.mxu0 0
  %596 = vmatprep.subr.bf16.mxu0 0
  %597 = vmatpush1.bf16.xpose.msra.mxu0 0
  %598 = vmatprep.subr.bf16.mxu0 0
  %599 = vmatpush1.bf16.xpose.msra.mxu0 0
  %600 = vmatprep.mubr.bf16.mxu0 0
  %601 = vmatmul.mubr.bf16.gmra.mrb[0].mxu0 %v563
  %v602 = vpop.f32.mrb[0].mxu0
  %v603 = vadd.f32 0.0, %v602
  %v604 = vpop.f32.mrb[0].mxu0
  %v605 = vpop.f32.mrb[0].mxu0
  %v606 = vpop.f32.mrb[0].mxu0
  %607 = vdwg.mxu0
  %v608 = vmul.f32 %v603, 0.35355338
  %v609 = vsel %vm314, %v608, -inf
  %610 = vmax.xlane.f32.xlu0 %v609
  %v611 = vpop.xlane.xlu0 %610
  %v612 = vsub.f32 %v608, %v611
  %v613 = vmul.f32 %v612, 1.442695
  %v614 = vpow.pop %v613
  %v615 = vsel %vm314, %v614, 0.0
  %616 = vadd.xlane.f32.xlu0 %v615
  %v617 = vpop.xlane.xlu0 %616
  %v618 = vrcp.pop %v617
  %v619 = vmul.f32 %v614, %v618
  %v620 = vpack.c.bf16 %v619, %v619
  %s621 = scalar_lea.vmem %s6, 8
  %v622 = vld [vmem:[%s621] sm:$0x3]
  %v623 = vsel %vm329, %v620, %v622
  %624 = vst [vmem:[%s621] sm:$0x3] %v623
  %625 = vrot.lane.b32.xlu0 %v561, 120
  %v626 = vpop.permute.xlu0 %625
  %v628 = vunpack.c.l.b16 %v555
  %v629 = vpack.c.b16 %v628, %v628
  %630 = vrot.lane.b32.xlu0 %v629, 120
  %v631 = vpop.permute.xlu0 %630
  %v633 = vsel %vm266, %v626, 0
  %v636 = vsel %vm266, %v631, 0
  %638 = vmatprep.subr.bf16.mxu0 0
  %639 = vmatpush1.bf16.xpose.msra.mxu0 %v636
  %640 = vmatprep.subr.bf16.mxu0 0
  %641 = vmatpush1.bf16.xpose.msra.mxu0 0
  %642 = vmatprep.subr.bf16.mxu0 0
  %643 = vmatpush1.bf16.xpose.msra.mxu0 0
  %644 = vmatprep.subr.bf16.mxu0 0
  %645 = vmatpush1.bf16.xpose.msra.mxu0 0
  %646 = vmatprep.subr.bf16.mxu0 0
  %647 = vmatpush1.bf16.xpose.msra.mxu0 0
  %648 = vmatprep.subr.bf16.mxu0 0
  %649 = vmatpush1.bf16.xpose.msra.mxu0 0
  %650 = vmatprep.subr.bf16.mxu0 0
  %651 = vmatpush1.bf16.xpose.msra.mxu0 0
  %652 = vmatprep.subr.bf16.mxu0 0
  %653 = vmatpush1.bf16.xpose.msra.mxu0 0
  %654 = vmatprep.subr.bf16.mxu0 0
  %655 = vmatpush1.bf16.xpose.msra.mxu0 0
  %656 = vmatprep.subr.bf16.mxu0 0
  %657 = vmatpush1.bf16.xpose.msra.mxu0 0
  %658 = vmatprep.subr.bf16.mxu0 0
  %659 = vmatpush1.bf16.xpose.msra.mxu0 0
  %660 = vmatprep.subr.bf16.mxu0 0
  %661 = vmatpush1.bf16.xpose.msra.mxu0 0
  %662 = vmatprep.subr.bf16.mxu0 0
  %663 = vmatpush1.bf16.xpose.msra.mxu0 0
  %664 = vmatprep.subr.bf16.mxu0 0
  %665 = vmatpush1.bf16.xpose.msra.mxu0 0
  %666 = vmatprep.subr.bf16.mxu0 0
  %667 = vmatpush1.bf16.xpose.msra.mxu0 0
  %668 = vmatprep.subr.bf16.mxu0 0
  %669 = vmatpush1.bf16.xpose.msra.mxu0 0
  %670 = vmatprep.mubr.bf16.mxu0 0
  %671 = vmatmul.mubr.bf16.gmra.mrb[0].mxu0 %v633
  %v672 = vpop.f32.mrb[0].mxu0
  %v673 = vadd.f32 0.0, %v672
  %v674 = vpop.f32.mrb[0].mxu0
  %v675 = vpop.f32.mrb[0].mxu0
  %v676 = vpop.f32.mrb[0].mxu0
  %677 = vdwg.mxu0
  %v678 = vmul.f32 %v673, 0.35355338
  %v679 = vsel %vm314, %v678, -inf
  %680 = vmax.xlane.f32.xlu0 %v679
  %v681 = vpop.xlane.xlu0 %680
  %v682 = vsub.f32 %v678, %v681
  %v683 = vmul.f32 %v682, 1.442695
  %v684 = vpow.pop %v683
  %v685 = vsel %vm314, %v684, 0.0
  %686 = vadd.xlane.f32.xlu0 %v685
  %v687 = vpop.xlane.xlu0 %686
  %v688 = vrcp.pop %v687
  %v689 = vmul.f32 %v684, %v688
  %v690 = vpack.c.bf16 %v689, %v689
  %s691 = scalar_lea.vmem %s6, 10
  %v692 = vld [vmem:[%s691] sm:$0x3]
  %v693 = vsel %vm329, %v690, %v692
  %694 = vst [vmem:[%s691] sm:$0x3] %v693
  %v695 = vld [vmem:[#allocation2 + $0x4] sm:$0x3]
  %v696 = vld [vmem:[#allocation3 + $0x4] sm:$0xc]
  %v698 = vunpack.c.l.b16 %v695
  %v699 = vpack.c.b16 %v698, %v698
  %v701 = vshrl.u32 %v699, 16
  %v703 = vshll.u32 %v699, 16
  %v705 = vrot.slane %v703, 1
  %v706 = vor.u32 %v701, %v705
  %v708 = vunpack.c.l.b16 %v696
  %v709 = vpack.c.b16 %v708, %v708
  %v710 = vrot.slane %v709, 2
  %v712 = vsel %vm266, %v706, 0
  %v715 = vsel %vm266, %v710, 0
  %717 = vmatprep.subr.bf16.mxu0 0
  %718 = vmatpush1.bf16.xpose.msra.mxu0 %v715
  %719 = vmatprep.subr.bf16.mxu0 0
  %720 = vmatpush1.bf16.xpose.msra.mxu0 0
  %721 = vmatprep.subr.bf16.mxu0 0
  %722 = vmatpush1.bf16.xpose.msra.mxu0 0
  %723 = vmatprep.subr.bf16.mxu0 0
  %724 = vmatpush1.bf16.xpose.msra.mxu0 0
  %725 = vmatprep.subr.bf16.mxu0 0
  %726 = vmatpush1.bf16.xpose.msra.mxu0 0
  %727 = vmatprep.subr.bf16.mxu0 0
  %728 = vmatpush1.bf16.xpose.msra.mxu0 0
  %729 = vmatprep.subr.bf16.mxu0 0
  %730 = vmatpush1.bf16.xpose.msra.mxu0 0
  %731 = vmatprep.subr.bf16.mxu0 0
  %732 = vmatpush1.bf16.xpose.msra.mxu0 0
  %733 = vmatprep.subr.bf16.mxu0 0
  %734 = vmatpush1.bf16.xpose.msra.mxu0 0
  %735 = vmatprep.subr.bf16.mxu0 0
  %736 = vmatpush1.bf16.xpose.msra.mxu0 0
  %737 = vmatprep.subr.bf16.mxu0 0
  %738 = vmatpush1.bf16.xpose.msra.mxu0 0
  %739 = vmatprep.subr.bf16.mxu0 0
  %740 = vmatpush1.bf16.xpose.msra.mxu0 0
  %741 = vmatprep.subr.bf16.mxu0 0
  %742 = vmatpush1.bf16.xpose.msra.mxu0 0
  %743 = vmatprep.subr.bf16.mxu0 0
  %744 = vmatpush1.bf16.xpose.msra.mxu0 0
  %745 = vmatprep.subr.bf16.mxu0 0
  %746 = vmatpush1.bf16.xpose.msra.mxu0 0
  %747 = vmatprep.subr.bf16.mxu0 0
  %748 = vmatpush1.bf16.xpose.msra.mxu0 0
  %749 = vmatprep.mubr.bf16.mxu0 0
  %750 = vmatmul.mubr.bf16.gmra.mrb[0].mxu0 %v712
  %v751 = vpop.f32.mrb[0].mxu0
  %v752 = vadd.f32 0.0, %v751
  %v753 = vpop.f32.mrb[0].mxu0
  %v754 = vpop.f32.mrb[0].mxu0
  %v755 = vpop.f32.mrb[0].mxu0
  %756 = vdwg.mxu0
  %v757 = vmul.f32 %v752, 0.35355338
  %v758 = vsel %vm314, %v757, -inf
  %759 = vmax.xlane.f32.xlu0 %v758
  %v760 = vpop.xlane.xlu0 %759
  %v761 = vsub.f32 %v757, %v760
  %v762 = vmul.f32 %v761, 1.442695
  %v763 = vpow.pop %v762
  %v764 = vsel %vm314, %v763, 0.0
  %765 = vadd.xlane.f32.xlu0 %v764
  %v766 = vpop.xlane.xlu0 %765
  %v767 = vrcp.pop %v766
  %v768 = vmul.f32 %v763, %v767
  %v769 = vpack.c.bf16 %v768, %v768
  %s770 = scalar_lea.vmem %s6, 12
  %v771 = vld [vmem:[%s770] sm:$0x3]
  %v772 = vsel %vm329, %v769, %v771
  %773 = vst [vmem:[%s770] sm:$0x3] %v772
  %774 = vrot.lane.b32.xlu0 %v706, 120
  %v775 = vpop.permute.xlu0 %774
  %776 = vrot.lane.b32.xlu0 %v710, 120
  %v777 = vpop.permute.xlu0 %776
  %v779 = vsel %vm266, %v775, 0
  %v782 = vsel %vm266, %v777, 0
  %784 = vmatprep.subr.bf16.mxu0 0
  %785 = vmatpush1.bf16.xpose.msra.mxu0 %v782
  %786 = vmatprep.subr.bf16.mxu0 0
  %787 = vmatpush1.bf16.xpose.msra.mxu0 0
  %788 = vmatprep.subr.bf16.mxu0 0
  %789 = vmatpush1.bf16.xpose.msra.mxu0 0
  %790 = vmatprep.subr.bf16.mxu0 0
  %791 = vmatpush1.bf16.xpose.msra.mxu0 0
  %792 = vmatprep.subr.bf16.mxu0 0
  %793 = vmatpush1.bf16.xpose.msra.mxu0 0
  %794 = vmatprep.subr.bf16.mxu0 0
  %795 = vmatpush1.bf16.xpose.msra.mxu0 0
  %796 = vmatprep.subr.bf16.mxu0 0
  %797 = vmatpush1.bf16.xpose.msra.mxu0 0
  %798 = vmatprep.subr.bf16.mxu0 0
  %799 = vmatpush1.bf16.xpose.msra.mxu0 0
  %800 = vmatprep.subr.bf16.mxu0 0
  %801 = vmatpush1.bf16.xpose.msra.mxu0 0
  %802 = vmatprep.subr.bf16.mxu0 0
  %803 = vmatpush1.bf16.xpose.msra.mxu0 0
  %804 = vmatprep.subr.bf16.mxu0 0
  %805 = vmatpush1.bf16.xpose.msra.mxu0 0
  %806 = vmatprep.subr.bf16.mxu0 0
  %807 = vmatpush1.bf16.xpose.msra.mxu0 0
  %808 = vmatprep.subr.bf16.mxu0 0
  %809 = vmatpush1.bf16.xpose.msra.mxu0 0
  %810 = vmatprep.subr.bf16.mxu0 0
  %811 = vmatpush1.bf16.xpose.msra.mxu0 0
  %812 = vmatprep.subr.bf16.mxu0 0
  %813 = vmatpush1.bf16.xpose.msra.mxu0 0
  %814 = vmatprep.subr.bf16.mxu0 0
  %815 = vmatpush1.bf16.xpose.msra.mxu0 0
  %816 = vmatprep.mubr.bf16.mxu0 0
  %817 = vmatmul.mubr.bf16.gmra.mrb[0].mxu0 %v779
  %v818 = vpop.f32.mrb[0].mxu0
  %v819 = vadd.f32 0.0, %v818
  %v820 = vpop.f32.mrb[0].mxu0
  %v821 = vpop.f32.mrb[0].mxu0
  %v822 = vpop.f32.mrb[0].mxu0
  %823 = vdwg.mxu0
  %v824 = vmul.f32 %v819, 0.35355338
  %v825 = vsel %vm314, %v824, -inf
  %826 = vmax.xlane.f32.xlu0 %v825
  %v827 = vpop.xlane.xlu0 %826
  %v828 = vsub.f32 %v824, %v827
  %v829 = vmul.f32 %v828, 1.442695
  %v830 = vpow.pop %v829
  %v831 = vsel %vm314, %v830, 0.0
  %832 = vadd.xlane.f32.xlu0 %v831
  %v833 = vpop.xlane.xlu0 %832
  %v834 = vrcp.pop %v833
  %v835 = vmul.f32 %v830, %v834
  %v836 = vpack.c.bf16 %v835, %v835
  %s837 = scalar_lea.vmem %s6, 14
  %v838 = vld [vmem:[%s837] sm:$0x3]
  %v839 = vsel %vm329, %v836, %v838
  %840 = vst [vmem:[%s837] sm:$0x3] %v839
  %v841 = vld [vmem:[#allocation2 + $0x4] sm:$0xc]
  %v842 = vld [vmem:[#allocation3 + $0x8] sm:$0x3]
  %v844 = vunpack.c.l.b16 %v841
  %v845 = vpack.c.b16 %v844, %v844
  %v846 = vrot.slane %v845, 2
  %v848 = vsel %vm266, %v846, 0
  %v851 = vsel %vm266, %v842, 0
  %853 = vmatprep.subr.bf16.mxu0 0
  %854 = vmatpush1.bf16.xpose.msra.mxu0 %v851
  %855 = vmatprep.subr.bf16.mxu0 0
  %856 = vmatpush1.bf16.xpose.msra.mxu0 0
  %857 = vmatprep.subr.bf16.mxu0 0
  %858 = vmatpush1.bf16.xpose.msra.mxu0 0
  %859 = vmatprep.subr.bf16.mxu0 0
  %860 = vmatpush1.bf16.xpose.msra.mxu0 0
  %861 = vmatprep.subr.bf16.mxu0 0
  %862 = vmatpush1.bf16.xpose.msra.mxu0 0
  %863 = vmatprep.subr.bf16.mxu0 0
  %864 = vmatpush1.bf16.xpose.msra.mxu0 0
  %865 = vmatprep.subr.bf16.mxu0 0
  %866 = vmatpush1.bf16.xpose.msra.mxu0 0
  %867 = vmatprep.subr.bf16.mxu0 0
  %868 = vmatpush1.bf16.xpose.msra.mxu0 0
  %869 = vmatprep.subr.bf16.mxu0 0
  %870 = vmatpush1.bf16.xpose.msra.mxu0 0
  %871 = vmatprep.subr.bf16.mxu0 0
  %872 = vmatpush1.bf16.xpose.msra.mxu0 0
  %873 = vmatprep.subr.bf16.mxu0 0
  %874 = vmatpush1.bf16.xpose.msra.mxu0 0
  %875 = vmatprep.subr.bf16.mxu0 0
  %876 = vmatpush1.bf16.xpose.msra.mxu0 0
  %877 = vmatprep.subr.bf16.mxu0 0
  %878 = vmatpush1.bf16.xpose.msra.mxu0 0
  %879 = vmatprep.subr.bf16.mxu0 0
  %880 = vmatpush1.bf16.xpose.msra.mxu0 0
  %881 = vmatprep.subr.bf16.mxu0 0
  %882 = vmatpush1.bf16.xpose.msra.mxu0 0
  %883 = vmatprep.subr.bf16.mxu0 0
  %884 = vmatpush1.bf16.xpose.msra.mxu0 0
  %885 = vmatprep.mubr.bf16.mxu0 0
  %886 = vmatmul.mubr.bf16.gmra.mrb[0].mxu0 %v848
  %v887 = vpop.f32.mrb[0].mxu0
  %v888 = vadd.f32 0.0, %v887
  %v889 = vpop.f32.mrb[0].mxu0
  %v890 = vpop.f32.mrb[0].mxu0
  %v891 = vpop.f32.mrb[0].mxu0
  %892 = vdwg.mxu0
  %v893 = vmul.f32 %v888, 0.35355338
  %v894 = vsel %vm314, %v893, -inf
  %895 = vmax.xlane.f32.xlu0 %v894
  %v896 = vpop.xlane.xlu0 %895
  %v897 = vsub.f32 %v893, %v896
  %v898 = vmul.f32 %v897, 1.442695
  %v899 = vpow.pop %v898
  %v900 = vsel %vm314, %v899, 0.0
  %901 = vadd.xlane.f32.xlu0 %v900
  %v902 = vpop.xlane.xlu0 %901
  %v903 = vrcp.pop %v902
  %v904 = vmul.f32 %v899, %v903
  %v905 = vpack.c.bf16 %v904, %v904
  %s906 = scalar_lea.vmem %s6, 16
  %v907 = vld [vmem:[%s906] sm:$0x3]
  %v908 = vsel %vm329, %v905, %v907
  %909 = vst [vmem:[%s906] sm:$0x3] %v908
  %910 = vrot.lane.b32.xlu0 %v846, 120
  %v911 = vpop.permute.xlu0 %910
  %v913 = vunpack.c.l.b16 %v842
  %v914 = vpack.c.b16 %v913, %v913
  %915 = vrot.lane.b32.xlu0 %v914, 120
  %v916 = vpop.permute.xlu0 %915
  %v918 = vsel %vm266, %v911, 0
  %v921 = vsel %vm266, %v916, 0
  %923 = vmatprep.subr.bf16.mxu0 0
  %924 = vmatpush1.bf16.xpose.msra.mxu0 %v921
  %925 = vmatprep.subr.bf16.mxu0 0
  %926 = vmatpush1.bf16.xpose.msra.mxu0 0
  %927 = vmatprep.subr.bf16.mxu0 0
  %928 = vmatpush1.bf16.xpose.msra.mxu0 0
  %929 = vmatprep.subr.bf16.mxu0 0
  %930 = vmatpush1.bf16.xpose.msra.mxu0 0
  %931 = vmatprep.subr.bf16.mxu0 0
  %932 = vmatpush1.bf16.xpose.msra.mxu0 0
  %933 = vmatprep.subr.bf16.mxu0 0
  %934 = vmatpush1.bf16.xpose.msra.mxu0 0
  %935 = vmatprep.subr.bf16.mxu0 0
  %936 = vmatpush1.bf16.xpose.msra.mxu0 0
  %937 = vmatprep.subr.bf16.mxu0 0
  %938 = vmatpush1.bf16.xpose.msra.mxu0 0
  %939 = vmatprep.subr.bf16.mxu0 0
  %940 = vmatpush1.bf16.xpose.msra.mxu0 0
  %941 = vmatprep.subr.bf16.mxu0 0
  %942 = vmatpush1.bf16.xpose.msra.mxu0 0
  %943 = vmatprep.subr.bf16.mxu0 0
  %944 = vmatpush1.bf16.xpose.msra.mxu0 0
  %945 = vmatprep.subr.bf16.mxu0 0
  %946 = vmatpush1.bf16.xpose.msra.mxu0 0
  %947 = vmatprep.subr.bf16.mxu0 0
  %948 = vmatpush1.bf16.xpose.msra.mxu0 0
  %949 = vmatprep.subr.bf16.mxu0 0
  %950 = vmatpush1.bf16.xpose.msra.mxu0 0
  %951 = vmatprep.subr.bf16.mxu0 0
  %952 = vmatpush1.bf16.xpose.msra.mxu0 0
  %953 = vmatprep.subr.bf16.mxu0 0
  %954 = vmatpush1.bf16.xpose.msra.mxu0 0
  %955 = vmatprep.mubr.bf16.mxu0 0
  %956 = vmatmul.mubr.bf16.gmra.mrb[0].mxu0 %v918
  %v957 = vpop.f32.mrb[0].mxu0
  %v958 = vadd.f32 0.0, %v957
  %v959 = vpop.f32.mrb[0].mxu0
  %v960 = vpop.f32.mrb[0].mxu0
  %v961 = vpop.f32.mrb[0].mxu0
  %962 = vdwg.mxu0
  %v963 = vmul.f32 %v958, 0.35355338
  %v964 = vsel %vm314, %v963, -inf
  %965 = vmax.xlane.f32.xlu0 %v964
  %v966 = vpop.xlane.xlu0 %965
  %v967 = vsub.f32 %v963, %v966
  %v968 = vmul.f32 %v967, 1.442695
  %v969 = vpow.pop %v968
  %v970 = vsel %vm314, %v969, 0.0
  %971 = vadd.xlane.f32.xlu0 %v970
  %v972 = vpop.xlane.xlu0 %971
  %v973 = vrcp.pop %v972
  %v974 = vmul.f32 %v969, %v973
  %v975 = vpack.c.bf16 %v974, %v974
  %s976 = scalar_lea.vmem %s6, 18
  %v977 = vld [vmem:[%s976] sm:$0x3]
  %v978 = vsel %vm329, %v975, %v977
  %979 = vst [vmem:[%s976] sm:$0x3] %v978
  %v980 = vld [vmem:[#allocation2 + $0x4] sm:$0x8]
  %v981 = vld [vmem:[#allocation2 + $0x8] sm:$0x1]
  %v982 = vld [vmem:[#allocation3 + $0x8] sm:$0xc]
  %v985 = vunpack.c.l.b16 %v980
  %v986 = vunpack.c.l.b16 %v981
  %v987 = vpack.c.b16 %v986, %v985
  %v989 = vshrl.u32 %v987, 16
  %v991 = vrot.slane %v989, 3
  %v992 = vshll.u32 %v987, 16
  %v994 = vrot.slane %v992, 4
  %v995 = vor.u32 %v991, %v994
  %v997 = vunpack.c.l.b16 %v982
  %v998 = vpack.c.b16 %v997, %v997
  %v999 = vrot.slane %v998, 2
  %v1001 = vsel %vm266, %v995, 0
  %v1004 = vsel %vm266, %v999, 0
  %1006 = vmatprep.subr.bf16.mxu0 0
  %1007 = vmatpush1.bf16.xpose.msra.mxu0 %v1004
  %1008 = vmatprep.subr.bf16.mxu0 0
  %1009 = vmatpush1.bf16.xpose.msra.mxu0 0
  %1010 = vmatprep.subr.bf16.mxu0 0
  %1011 = vmatpush1.bf16.xpose.msra.mxu0 0
  %1012 = vmatprep.subr.bf16.mxu0 0
  %1013 = vmatpush1.bf16.xpose.msra.mxu0 0
  %1014 = vmatprep.subr.bf16.mxu0 0
  %1015 = vmatpush1.bf16.xpose.msra.mxu0 0
  %1016 = vmatprep.subr.bf16.mxu0 0
  %1017 = vmatpush1.bf16.xpose.msra.mxu0 0
  %1018 = vmatprep.subr.bf16.mxu0 0
  %1019 = vmatpush1.bf16.xpose.msra.mxu0 0
  %1020 = vmatprep.subr.bf16.mxu0 0
  %1021 = vmatpush1.bf16.xpose.msra.mxu0 0
  %1022 = vmatprep.subr.bf16.mxu0 0
  %1023 = vmatpush1.bf16.xpose.msra.mxu0 0
  %1024 = vmatprep.subr.bf16.mxu0 0
  %1025 = vmatpush1.bf16.xpose.msra.mxu0 0
  %1026 = vmatprep.subr.bf16.mxu0 0
  %1027 = vmatpush1.bf16.xpose.msra.mxu0 0
  %1028 = vmatprep.subr.bf16.mxu0 0
  %1029 = vmatpush1.bf16.xpose.msra.mxu0 0
  %1030 = vmatprep.subr.bf16.mxu0 0
  %1031 = vmatpush1.bf16.xpose.msra.mxu0 0
  %1032 = vmatprep.subr.bf16.mxu0 0
  %1033 = vmatpush1.bf16.xpose.msra.mxu0 0
  %1034 = vmatprep.subr.bf16.mxu0 0
  %1035 = vmatpush1.bf16.xpose.msra.mxu0 0
  %1036 = vmatprep.subr.bf16.mxu0 0
  %1037 = vmatpush1.bf16.xpose.msra.mxu0 0
  %1038 = vmatprep.mubr.bf16.mxu0 0
  %1039 = vmatmul.mubr.bf16.gmra.mrb[0].mxu0 %v1001
  %v1040 = vpop.f32.mrb[0].mxu0
  %v1041 = vadd.f32 0.0, %v1040
  %v1042 = vpop.f32.mrb[0].mxu0
  %v1043 = vpop.f32.mrb[0].mxu0
  %v1044 = vpop.f32.mrb[0].mxu0
  %1045 = vdwg.mxu0
  %v1046 = vmul.f32 %v1041, 0.35355338
  %v1047 = vsel %vm314, %v1046, -inf
  %1048 = vmax.xlane.f32.xlu0 %v1047
  %v1049 = vpop.xlane.xlu0 %1048
  %v1050 = vsub.f32 %v1046, %v1049
  %v1051 = vmul.f32 %v1050, 1.442695
  %v1052 = vpow.pop %v1051
  %v1053 = vsel %vm314, %v1052, 0.0
  %1054 = vadd.xlane.f32.xlu0 %v1053
  %v1055 = vpop.xlane.xlu0 %1054
  %v1056 = vrcp.pop %v1055
  %v1057 = vmul.f32 %v1052, %v1056
  %v1058 = vpack.c.bf16 %v1057, %v1057
  %s1059 = scalar_lea.vmem %s6, 20
  %v1060 = vld [vmem:[%s1059] sm:$0x3]
  %v1061 = vsel %vm329, %v1058, %v1060
  %1062 = vst [vmem:[%s1059] sm:$0x3] %v1061
  %1063 = vrot.lane.b32.xlu0 %v995, 120
  %v1064 = vpop.permute.xlu0 %1063
  %1065 = vrot.lane.b32.xlu0 %v999, 120
  %v1066 = vpop.permute.xlu0 %1065
  %v1068 = vsel %vm266, %v1064, 0
  %v1071 = vsel %vm266, %v1066, 0
  %1073 = vmatprep.subr.bf16.mxu0 0
  %1074 = vmatpush1.bf16.xpose.msra.mxu0 %v1071
  %1075 = vmatprep.subr.bf16.mxu0 0
  %1076 = vmatpush1.bf16.xpose.msra.mxu0 0
  %1077 = vmatprep.subr.bf16.mxu0 0
  %1078 = vmatpush1.bf16.xpose.msra.mxu0 0
  %1079 = vmatprep.subr.bf16.mxu0 0
  %1080 = vmatpush1.bf16.xpose.msra.mxu0 0
  %1081 = vmatprep.subr.bf16.mxu0 0
  %1082 = vmatpush1.bf16.xpose.msra.mxu0 0
  %1083 = vmatprep.subr.bf16.mxu0 0
  %1084 = vmatpush1.bf16.xpose.msra.mxu0 0
  %1085 = vmatprep.subr.bf16.mxu0 0
  %1086 = vmatpush1.bf16.xpose.msra.mxu0 0
  %1087 = vmatprep.subr.bf16.mxu0 0
  %1088 = vmatpush1.bf16.xpose.msra.mxu0 0
  %1089 = vmatprep.subr.bf16.mxu0 0
  %1090 = vmatpush1.bf16.xpose.msra.mxu0 0
  %1091 = vmatprep.subr.bf16.mxu0 0
  %1092 = vmatpush1.bf16.xpose.msra.mxu0 0
  %1093 = vmatprep.subr.bf16.mxu0 0
  %1094 = vmatpush1.bf16.xpose.msra.mxu0 0
  %1095 = vmatprep.subr.bf16.mxu0 0
  %1096 = vmatpush1.bf16.xpose.msra.mxu0 0
  %1097 = vmatprep.subr.bf16.mxu0 0
  %1098 = vmatpush1.bf16.xpose.msra.mxu0 0
  %1099 = vmatprep.subr.bf16.mxu0 0
  %1100 = vmatpush1.bf16.xpose.msra.mxu0 0
  %1101 = vmatprep.subr.bf16.mxu0 0
  %1102 = vmatpush1.bf16.xpose.msra.mxu0 0
  %1103 = vmatprep.subr.bf16.mxu0 0
  %1104 = vmatpush1.bf16.xpose.msra.mxu0 0
  %1105 = vmatprep.mubr.bf16.mxu0 0
  %1106 = vmatmul.mubr.bf16.gmra.mrb[0].mxu0 %v1068
  %v1107 = vpop.f32.mrb[0].mxu0
  %v1108 = vadd.f32 0.0, %v1107
  %v1109 = vpop.f32.mrb[0].mxu0
  %v1110 = vpop.f32.mrb[0].mxu0
  %v1111 = vpop.f32.mrb[0].mxu0
  %1112 = vdwg.mxu0
  %v1113 = vmul.f32 %v1108, 0.35355338
  %v1114 = vsel %vm314, %v1113, -inf
  %1115 = vmax.xlane.f32.xlu0 %v1114
  %v1116 = vpop.xlane.xlu0 %1115
  %v1117 = vsub.f32 %v1113, %v1116
  %v1118 = vmul.f32 %v1117, 1.442695
  %v1119 = vpow.pop %v1118
  %v1120 = vsel %vm314, %v1119, 0.0
  %1121 = vadd.xlane.f32.xlu0 %v1120
  %v1122 = vpop.xlane.xlu0 %1121
  %v1123 = vrcp.pop %v1122
  %v1124 = vmul.f32 %v1119, %v1123
  %v1125 = vpack.c.bf16 %v1124, %v1124
  %s1126 = scalar_lea.vmem %s6, 22
  %v1127 = vld [vmem:[%s1126] sm:$0x3]
  %v1128 = vsel %vm329, %v1125, %v1127
  %1129 = vst [vmem:[%s1126] sm:$0x3] %v1128
  %v1130 = vld [vmem:[#allocation2 + $0x8] sm:$0x6]
  %v1131 = vld [vmem:[#allocation3 + $0xc] sm:$0x3]
  %v1133 = vunpack.c.l.b16 %v1130
  %v1134 = vpack.c.b16 %v1133, %v1133
  %v1135 = vrot.slane %v1134, 1
  %v1137 = vsel %vm266, %v1135, 0
  %v1140 = vsel %vm266, %v1131, 0
  %1142 = vmatprep.subr.bf16.mxu0 0
  %1143 = vmatpush1.bf16.xpose.msra.mxu0 %v1140
  %1144 = vmatprep.subr.bf16.mxu0 0
  %1145 = vmatpush1.bf16.xpose.msra.mxu0 0
  %1146 = vmatprep.subr.bf16.mxu0 0
  %1147 = vmatpush1.bf16.xpose.msra.mxu0 0
  %1148 = vmatprep.subr.bf16.mxu0 0
  %1149 = vmatpush1.bf16.xpose.msra.mxu0 0
  %1150 = vmatprep.subr.bf16.mxu0 0
  %1151 = vmatpush1.bf16.xpose.msra.mxu0 0
  %1152 = vmatprep.subr.bf16.mxu0 0
  %1153 = vmatpush1.bf16.xpose.msra.mxu0 0
  %1154 = vmatprep.subr.bf16.mxu0 0
  %1155 = vmatpush1.bf16.xpose.msra.mxu0 0
  %1156 = vmatprep.subr.bf16.mxu0 0
  %1157 = vmatpush1.bf16.xpose.msra.mxu0 0
  %1158 = vmatprep.subr.bf16.mxu0 0
  %1159 = vmatpush1.bf16.xpose.msra.mxu0 0
  %1160 = vmatprep.subr.bf16.mxu0 0
  %1161 = vmatpush1.bf16.xpose.msra.mxu0 0
  %1162 = vmatprep.subr.bf16.mxu0 0
  %1163 = vmatpush1.bf16.xpose.msra.mxu0 0
  %1164 = vmatprep.subr.bf16.mxu0 0
  %1165 = vmatpush1.bf16.xpose.msra.mxu0 0
  %1166 = vmatprep.subr.bf16.mxu0 0
  %1167 = vmatpush1.bf16.xpose.msra.mxu0 0
  %1168 = vmatprep.subr.bf16.mxu0 0
  %1169 = vmatpush1.bf16.xpose.msra.mxu0 0
  %1170 = vmatprep.subr.bf16.mxu0 0
  %1171 = vmatpush1.bf16.xpose.msra.mxu0 0
  %1172 = vmatprep.subr.bf16.mxu0 0
  %1173 = vmatpush1.bf16.xpose.msra.mxu0 0
  %1174 = vmatprep.mubr.bf16.mxu0 0
  %1175 = vmatmul.mubr.bf16.gmra.mrb[0].mxu0 %v1137
  %v1176 = vpop.f32.mrb[0].mxu0
  %v1177 = vadd.f32 0.0, %v1176
  %v1178 = vpop.f32.mrb[0].mxu0
  %v1179 = vpop.f32.mrb[0].mxu0
  %v1180 = vpop.f32.mrb[0].mxu0
  %1181 = vdwg.mxu0
  %v1182 = vmul.f32 %v1177, 0.35355338
  %v1183 = vsel %vm314, %v1182, -inf
  %1184 = vmax.xlane.f32.xlu0 %v1183
  %v1185 = vpop.xlane.xlu0 %1184
  %v1186 = vsub.f32 %v1182, %v1185
  %v1187 = vmul.f32 %v1186, 1.442695
  %v1188 = vpow.pop %v1187
  %v1189 = vsel %vm314, %v1188, 0.0
  %1190 = vadd.xlane.f32.xlu0 %v1189
  %v1191 = vpop.xlane.xlu0 %1190
  %v1192 = vrcp.pop %v1191
  %v1193 = vmul.f32 %v1188, %v1192
  %v1194 = vpack.c.bf16 %v1193, %v1193
  %s1195 = scalar_lea.vmem %s6, 24
  %v1196 = vld [vmem:[%s1195] sm:$0x3]
  %v1197 = vsel %vm329, %v1194, %v1196
  %1198 = vst [vmem:[%s1195] sm:$0x3] %v1197
  %1199 = vrot.lane.b32.xlu0 %v1135, 120
  %v1200 = vpop.permute.xlu0 %1199
  %v1202 = vunpack.c.l.b16 %v1131
  %v1203 = vpack.c.b16 %v1202, %v1202
  %1204 = vrot.lane.b32.xlu0 %v1203, 120
  %v1205 = vpop.permute.xlu0 %1204
  %v1207 = vsel %vm266, %v1200, 0
  %v1210 = vsel %vm266, %v1205, 0
  %1212 = vmatprep.subr.bf16.mxu0 0
  %1213 = vmatpush1.bf16.xpose.msra.mxu0 %v1210
  %1214 = vmatprep.subr.bf16.mxu0 0
  %1215 = vmatpush1.bf16.xpose.msra.mxu0 0
  %1216 = vmatprep.subr.bf16.mxu0 0
  %1217 = vmatpush1.bf16.xpose.msra.mxu0 0
  %1218 = vmatprep.subr.bf16.mxu0 0
  %1219 = vmatpush1.bf16.xpose.msra.mxu0 0
  %1220 = vmatprep.subr.bf16.mxu0 0
  %1221 = vmatpush1.bf16.xpose.msra.mxu0 0
  %1222 = vmatprep.subr.bf16.mxu0 0
  %1223 = vmatpush1.bf16.xpose.msra.mxu0 0
  %1224 = vmatprep.subr.bf16.mxu0 0
  %1225 = vmatpush1.bf16.xpose.msra.mxu0 0
  %1226 = vmatprep.subr.bf16.mxu0 0
  %1227 = vmatpush1.bf16.xpose.msra.mxu0 0
  %1228 = vmatprep.subr.bf16.mxu0 0
  %1229 = vmatpush1.bf16.xpose.msra.mxu0 0
  %1230 = vmatprep.subr.bf16.mxu0 0
  %1231 = vmatpush1.bf16.xpose.msra.mxu0 0
  %1232 = vmatprep.subr.bf16.mxu0 0
  %1233 = vmatpush1.bf16.xpose.msra.mxu0 0
  %1234 = vmatprep.subr.bf16.mxu0 0
  %1235 = vmatpush1.bf16.xpose.msra.mxu0 0
  %1236 = vmatprep.subr.bf16.mxu0 0
  %1237 = vmatpush1.bf16.xpose.msra.mxu0 0
  %1238 = vmatprep.subr.bf16.mxu0 0
  %1239 = vmatpush1.bf16.xpose.msra.mxu0 0
  %1240 = vmatprep.subr.bf16.mxu0 0
  %1241 = vmatpush1.bf16.xpose.msra.mxu0 0
  %1242 = vmatprep.subr.bf16.mxu0 0
  %1243 = vmatpush1.bf16.xpose.msra.mxu0 0
  %1244 = vmatprep.mubr.bf16.mxu0 0
  %1245 = vmatmul.mubr.bf16.gmra.mrb[0].mxu0 %v1207
  %v1246 = vpop.f32.mrb[0].mxu0
  %v1247 = vadd.f32 0.0, %v1246
  %v1248 = vpop.f32.mrb[0].mxu0
  %v1249 = vpop.f32.mrb[0].mxu0
  %v1250 = vpop.f32.mrb[0].mxu0
  %1251 = vdwg.mxu0
  %v1252 = vmul.f32 %v1247, 0.35355338
  %v1253 = vsel %vm314, %v1252, -inf
  %1254 = vmax.xlane.f32.xlu0 %v1253
  %v1255 = vpop.xlane.xlu0 %1254
  %v1256 = vsub.f32 %v1252, %v1255
  %v1257 = vmul.f32 %v1256, 1.442695
  %v1258 = vpow.pop %v1257
  %v1259 = vsel %vm314, %v1258, 0.0
  %1260 = vadd.xlane.f32.xlu0 %v1259
  %v1261 = vpop.xlane.xlu0 %1260
  %v1262 = vrcp.pop %v1261
  %v1263 = vmul.f32 %v1258, %v1262
  %v1264 = vpack.c.bf16 %v1263, %v1263
  %s1265 = scalar_lea.vmem %s6, 26
  %v1266 = vld [vmem:[%s1265] sm:$0x3]
  %v1267 = vsel %vm329, %v1264, %v1266
  %1268 = vst [vmem:[%s1265] sm:$0x3] %v1267
  %v1269 = vld [vmem:[#allocation2 + $0x8] sm:$0xc]
  %v1270 = vld [vmem:[#allocation3 + $0xc] sm:$0xc]
  %v1272 = vunpack.c.l.b16 %v1269
  %v1273 = vpack.c.b16 %v1272, %v1272
  %v1275 = vshrl.u32 %v1273, 16
  %v1277 = vrot.slane %v1275, 2
  %v1278 = vshll.u32 %v1273, 16
  %v1280 = vrot.slane %v1278, 3
  %v1281 = vor.u32 %v1277, %v1280
  %v1283 = vunpack.c.l.b16 %v1270
  %v1284 = vpack.c.b16 %v1283, %v1283
  %v1285 = vrot.slane %v1284, 2
  %v1287 = vsel %vm266, %v1281, 0
  %v1290 = vsel %vm266, %v1285, 0
  %1292 = vmatprep.subr.bf16.mxu0 0
  %1293 = vmatpush1.bf16.xpose.msra.mxu0 %v1290
  %1294 = vmatprep.subr.bf16.mxu0 0
  %1295 = vmatpush1.bf16.xpose.msra.mxu0 0
  %1296 = vmatprep.subr.bf16.mxu0 0
  %1297 = vmatpush1.bf16.xpose.msra.mxu0 0
  %1298 = vmatprep.subr.bf16.mxu0 0
  %1299 = vmatpush1.bf16.xpose.msra.mxu0 0
  %1300 = vmatprep.subr.bf16.mxu0 0
  %1301 = vmatpush1.bf16.xpose.msra.mxu0 0
  %1302 = vmatprep.subr.bf16.mxu0 0
  %1303 = vmatpush1.bf16.xpose.msra.mxu0 0
  %1304 = vmatprep.subr.bf16.mxu0 0
  %1305 = vmatpush1.bf16.xpose.msra.mxu0 0
  %1306 = vmatprep.subr.bf16.mxu0 0
  %1307 = vmatpush1.bf16.xpose.msra.mxu0 0
  %1308 = vmatprep.subr.bf16.mxu0 0
  %1309 = vmatpush1.bf16.xpose.msra.mxu0 0
  %1310 = vmatprep.subr.bf16.mxu0 0
  %1311 = vmatpush1.bf16.xpose.msra.mxu0 0
  %1312 = vmatprep.subr.bf16.mxu0 0
  %1313 = vmatpush1.bf16.xpose.msra.mxu0 0
  %1314 = vmatprep.subr.bf16.mxu0 0
  %1315 = vmatpush1.bf16.xpose.msra.mxu0 0
  %1316 = vmatprep.subr.bf16.mxu0 0
  %1317 = vmatpush1.bf16.xpose.msra.mxu0 0
  %1318 = vmatprep.subr.bf16.mxu0 0
  %1319 = vmatpush1.bf16.xpose.msra.mxu0 0
  %1320 = vmatprep.subr.bf16.mxu0 0
  %1321 = vmatpush1.bf16.xpose.msra.mxu0 0
  %1322 = vmatprep.subr.bf16.mxu0 0
  %1323 = vmatpush1.bf16.xpose.msra.mxu0 0
  %1324 = vmatprep.mubr.bf16.mxu0 0
  %1325 = vmatmul.mubr.bf16.gmra.mrb[0].mxu0 %v1287
  %v1326 = vpop.f32.mrb[0].mxu0
  %v1327 = vadd.f32 0.0, %v1326
  %v1328 = vpop.f32.mrb[0].mxu0
  %v1329 = vpop.f32.mrb[0].mxu0
  %v1330 = vpop.f32.mrb[0].mxu0
  %1331 = vdwg.mxu0
  %v1332 = vmul.f32 %v1327, 0.35355338
  %v1333 = vsel %vm314, %v1332, -inf
  %1334 = vmax.xlane.f32.xlu0 %v1333
  %v1335 = vpop.xlane.xlu0 %1334
  %v1336 = vsub.f32 %v1332, %v1335
  %v1337 = vmul.f32 %v1336, 1.442695
  %v1338 = vpow.pop %v1337
  %v1339 = vsel %vm314, %v1338, 0.0
  %1340 = vadd.xlane.f32.xlu0 %v1339
  %v1341 = vpop.xlane.xlu0 %1340
  %v1342 = vrcp.pop %v1341
  %v1343 = vmul.f32 %v1338, %v1342
  %v1344 = vpack.c.bf16 %v1343, %v1343
  %s1345 = scalar_lea.vmem %s6, 28
  %v1346 = vld [vmem:[%s1345] sm:$0x3]
  %v1347 = vsel %vm329, %v1344, %v1346
  %1348 = vst [vmem:[%s1345] sm:$0x3] %v1347
  %1349 = vrot.lane.b32.xlu0 %v1281, 120
  %v1350 = vpop.permute.xlu0 %1349
  %1351 = vrot.lane.b32.xlu0 %v1285, 120
  %v1352 = vpop.permute.xlu0 %1351
  %v1354 = vsel %vm266, %v1350, 0
  %v1357 = vsel %vm266, %v1352, 0
  %1359 = vmatprep.subr.bf16.mxu0 0
  %1360 = vmatpush1.bf16.xpose.msra.mxu0 %v1357
  %1361 = vmatprep.subr.bf16.mxu0 0
  %1362 = vmatpush1.bf16.xpose.msra.mxu0 0
  %1363 = vmatprep.subr.bf16.mxu0 0
  %1364 = vmatpush1.bf16.xpose.msra.mxu0 0
  %1365 = vmatprep.subr.bf16.mxu0 0
  %1366 = vmatpush1.bf16.xpose.msra.mxu0 0
  %1367 = vmatprep.subr.bf16.mxu0 0
  %1368 = vmatpush1.bf16.xpose.msra.mxu0 0
  %1369 = vmatprep.subr.bf16.mxu0 0
  %1370 = vmatpush1.bf16.xpose.msra.mxu0 0
  %1371 = vmatprep.subr.bf16.mxu0 0
  %1372 = vmatpush1.bf16.xpose.msra.mxu0 0
  %1373 = vmatprep.subr.bf16.mxu0 0
  %1374 = vmatpush1.bf16.xpose.msra.mxu0 0
  %1375 = vmatprep.subr.bf16.mxu0 0
  %1376 = vmatpush1.bf16.xpose.msra.mxu0 0
  %1377 = vmatprep.subr.bf16.mxu0 0
  %1378 = vmatpush1.bf16.xpose.msra.mxu0 0
  %1379 = vmatprep.subr.bf16.mxu0 0
  %1380 = vmatpush1.bf16.xpose.msra.mxu0 0
  %1381 = vmatprep.subr.bf16.mxu0 0
  %1382 = vmatpush1.bf16.xpose.msra.mxu0 0
  %1383 = vmatprep.subr.bf16.mxu0 0
  %1384 = vmatpush1.bf16.xpose.msra.mxu0 0
  %1385 = vmatprep.subr.bf16.mxu0 0
  %1386 = vmatpush1.bf16.xpose.msra.mxu0 0
  %1387 = vmatprep.subr.bf16.mxu0 0
  %1388 = vmatpush1.bf16.xpose.msra.mxu0 0
  %1389 = vmatprep.subr.bf16.mxu0 0
  %1390 = vmatpush1.bf16.xpose.msra.mxu0 0
  %1391 = vmatprep.mubr.bf16.mxu0 0
  %1392 = vmatmul.mubr.bf16.gmra.mrb[0].mxu0 %v1354
  %v1393 = vpop.f32.mrb[0].mxu0
  %v1394 = vadd.f32 0.0, %v1393
  %v1395 = vpop.f32.mrb[0].mxu0
  %v1396 = vpop.f32.mrb[0].mxu0
  %v1397 = vpop.f32.mrb[0].mxu0
  %1398 = vdwg.mxu0
  %v1399 = vmul.f32 %v1394, 0.35355338
  %v1400 = vsel %vm314, %v1399, -inf
  %1401 = vmax.xlane.f32.xlu0 %v1400
  %v1402 = vpop.xlane.xlu0 %1401
  %v1403 = vsub.f32 %v1399, %v1402
  %v1404 = vmul.f32 %v1403, 1.442695
  %v1405 = vpow.pop %v1404
  %v1406 = vsel %vm314, %v1405, 0.0
  %1407 = vadd.xlane.f32.xlu0 %v1406
  %v1408 = vpop.xlane.xlu0 %1407
  %v1409 = vrcp.pop %v1408
  %v1410 = vmul.f32 %v1405, %v1409
  %v1411 = vpack.c.bf16 %v1410, %v1410
  %s1412 = scalar_lea.vmem %s6, 30
  %v1413 = vld [vmem:[%s1412] sm:$0x3]
  %v1414 = vsel %vm329, %v1411, %v1413
  %1415 = vst [vmem:[%s1412] sm:$0x3] %v1414
  %v1416 = vld [vmem:[#allocation2 + $0xc] sm:$0x3]
  %v1417 = vld [vmem:[#allocation3 + $0x10] sm:$0x3]
  %v1419 = vsel %vm266, %v1416, 0
  %v1422 = vsel %vm266, %v1417, 0
  %1424 = vmatprep.subr.bf16.mxu0 0
  %1425 = vmatpush1.bf16.xpose.msra.mxu0 %v1422
  %1426 = vmatprep.subr.bf16.mxu0 0
  %1427 = vmatpush1.bf16.xpose.msra.mxu0 0
  %1428 = vmatprep.subr.bf16.mxu0 0
  %1429 = vmatpush1.bf16.xpose.msra.mxu0 0
  %1430 = vmatprep.subr.bf16.mxu0 0
  %1431 = vmatpush1.bf16.xpose.msra.mxu0 0
  %1432 = vmatprep.subr.bf16.mxu0 0
  %1433 = vmatpush1.bf16.xpose.msra.mxu0 0
  %1434 = vmatprep.subr.bf16.mxu0 0
  %1435 = vmatpush1.bf16.xpose.msra.mxu0 0
  %1436 = vmatprep.subr.bf16.mxu0 0
  %1437 = vmatpush1.bf16.xpose.msra.mxu0 0
  %1438 = vmatprep.subr.bf16.mxu0 0
  %1439 = vmatpush1.bf16.xpose.msra.mxu0 0
  %1440 = vmatprep.subr.bf16.mxu0 0
  %1441 = vmatpush1.bf16.xpose.msra.mxu0 0
  %1442 = vmatprep.subr.bf16.mxu0 0
  %1443 = vmatpush1.bf16.xpose.msra.mxu0 0
  %1444 = vmatprep.subr.bf16.mxu0 0
  %1445 = vmatpush1.bf16.xpose.msra.mxu0 0
  %1446 = vmatprep.subr.bf16.mxu0 0
  %1447 = vmatpush1.bf16.xpose.msra.mxu0 0
  %1448 = vmatprep.subr.bf16.mxu0 0
  %1449 = vmatpush1.bf16.xpose.msra.mxu0 0
  %1450 = vmatprep.subr.bf16.mxu0 0
  %1451 = vmatpush1.bf16.xpose.msra.mxu0 0
  %1452 = vmatprep.subr.bf16.mxu0 0
  %1453 = vmatpush1.bf16.xpose.msra.mxu0 0
  %1454 = vmatprep.subr.bf16.mxu0 0
  %1455 = vmatpush1.bf16.xpose.msra.mxu0 0
  %1456 = vmatprep.mubr.bf16.mxu0 0
  %1457 = vmatmul.mubr.bf16.gmra.mrb[0].mxu0 %v1419
  %v1458 = vpop.f32.mrb[0].mxu0
  %v1459 = vadd.f32 0.0, %v1458
  %v1460 = vpop.f32.mrb[0].mxu0
  %v1461 = vpop.f32.mrb[0].mxu0
  %v1462 = vpop.f32.mrb[0].mxu0
  %1463 = vdwg.mxu0
  %v1464 = vmul.f32 %v1459, 0.35355338
  %v1465 = vsel %vm314, %v1464, -inf
  %1466 = vmax.xlane.f32.xlu0 %v1465
  %v1467 = vpop.xlane.xlu0 %1466
  %v1468 = vsub.f32 %v1464, %v1467
  %v1469 = vmul.f32 %v1468, 1.442695
  %v1470 = vpow.pop %v1469
  %v1471 = vsel %vm314, %v1470, 0.0
  %1472 = vadd.xlane.f32.xlu0 %v1471
  %v1473 = vpop.xlane.xlu0 %1472
  %v1474 = vrcp.pop %v1473
  %v1475 = vmul.f32 %v1470, %v1474
  %v1476 = vpack.c.bf16 %v1475, %v1475
  %s1477 = scalar_lea.vmem %s6, 32
  %v1478 = vld [vmem:[%s1477] sm:$0x3]
  %v1479 = vsel %vm329, %v1476, %v1478
  %1480 = vst [vmem:[%s1477] sm:$0x3] %v1479
  %v1482 = vunpack.c.l.b16 %v1416
  %v1483 = vpack.c.b16 %v1482, %v1482
  %1484 = vrot.lane.b32.xlu0 %v1483, 120
  %v1485 = vpop.permute.xlu0 %1484
  %v1487 = vunpack.c.l.b16 %v1417
  %v1488 = vpack.c.b16 %v1487, %v1487
  %1489 = vrot.lane.b32.xlu0 %v1488, 120
  %v1490 = vpop.permute.xlu0 %1489
  %v1492 = vsel %vm266, %v1485, 0
  %v1495 = vsel %vm266, %v1490, 0
  %1497 = vmatprep.subr.bf16.mxu0 0
  %1498 = vmatpush1.bf16.xpose.msra.mxu0 %v1495
  %1499 = vmatprep.subr.bf16.mxu0 0
  %1500 = vmatpush1.bf16.xpose.msra.mxu0 0
  %1501 = vmatprep.subr.bf16.mxu0 0
  %1502 = vmatpush1.bf16.xpose.msra.mxu0 0
  %1503 = vmatprep.subr.bf16.mxu0 0
  %1504 = vmatpush1.bf16.xpose.msra.mxu0 0
  %1505 = vmatprep.subr.bf16.mxu0 0
  %1506 = vmatpush1.bf16.xpose.msra.mxu0 0
  %1507 = vmatprep.subr.bf16.mxu0 0
  %1508 = vmatpush1.bf16.xpose.msra.mxu0 0
  %1509 = vmatprep.subr.bf16.mxu0 0
  %1510 = vmatpush1.bf16.xpose.msra.mxu0 0
  %1511 = vmatprep.subr.bf16.mxu0 0
  %1512 = vmatpush1.bf16.xpose.msra.mxu0 0
  %1513 = vmatprep.subr.bf16.mxu0 0
  %1514 = vmatpush1.bf16.xpose.msra.mxu0 0
  %1515 = vmatprep.subr.bf16.mxu0 0
  %1516 = vmatpush1.bf16.xpose.msra.mxu0 0
  %1517 = vmatprep.subr.bf16.mxu0 0
  %1518 = vmatpush1.bf16.xpose.msra.mxu0 0
  %1519 = vmatprep.subr.bf16.mxu0 0
  %1520 = vmatpush1.bf16.xpose.msra.mxu0 0
  %1521 = vmatprep.subr.bf16.mxu0 0
  %1522 = vmatpush1.bf16.xpose.msra.mxu0 0
  %1523 = vmatprep.subr.bf16.mxu0 0
  %1524 = vmatpush1.bf16.xpose.msra.mxu0 0
  %1525 = vmatprep.subr.bf16.mxu0 0
  %1526 = vmatpush1.bf16.xpose.msra.mxu0 0
  %1527 = vmatprep.subr.bf16.mxu0 0
  %1528 = vmatpush1.bf16.xpose.msra.mxu0 0
  %1529 = vmatprep.mubr.bf16.mxu0 0
  %1530 = vmatmul.mubr.bf16.gmra.mrb[0].mxu0 %v1492
  %v1531 = vpop.f32.mrb[0].mxu0
  %v1532 = vadd.f32 0.0, %v1531
  %v1533 = vpop.f32.mrb[0].mxu0
  %v1534 = vpop.f32.mrb[0].mxu0
  %v1535 = vpop.f32.mrb[0].mxu0
  %1536 = vdwg.mxu0
  %v1537 = vmul.f32 %v1532, 0.35355338
  %v1538 = vsel %vm314, %v1537, -inf
  %1539 = vmax.xlane.f32.xlu0 %v1538
  %v1540 = vpop.xlane.xlu0 %1539
  %v1541 = vsub.f32 %v1537, %v1540
  %v1542 = vmul.f32 %v1541, 1.442695
  %v1543 = vpow.pop %v1542
  %v1544 = vsel %vm314, %v1543, 0.0
  %1545 = vadd.xlane.f32.xlu0 %v1544
  %v1546 = vpop.xlane.xlu0 %1545
  %v1547 = vrcp.pop %v1546
  %v1548 = vmul.f32 %v1543, %v1547
  %v1549 = vpack.c.bf16 %v1548, %v1548
  %s1550 = scalar_lea.vmem %s6, 34
  %v1551 = vld [vmem:[%s1550] sm:$0x3]
  %v1552 = vsel %vm329, %v1549, %v1551
  %1553 = vst [vmem:[%s1550] sm:$0x3] %v1552
  %v1554 = vld [vmem:[#allocation2 + $0xc] sm:$0x6]
  %v1555 = vld [vmem:[#allocation3 + $0x10] sm:$0xc]
  %v1557 = vunpack.c.l.b16 %v1554
  %v1558 = vpack.c.b16 %v1557, %v1557
  %v1560 = vshrl.u32 %v1558, 16
  %v1562 = vrot.slane %v1560, 1
  %v1563 = vshll.u32 %v1558, 16
  %v1565 = vrot.slane %v1563, 2
  %v1566 = vor.u32 %v1562, %v1565
  %v1568 = vunpack.c.l.b16 %v1555
  %v1569 = vpack.c.b16 %v1568, %v1568
  %v1570 = vrot.slane %v1569, 2
  %v1572 = vsel %vm266, %v1566, 0
  %v1575 = vsel %vm266, %v1570, 0
  %1577 = vmatprep.subr.bf16.mxu0 0
  %1578 = vmatpush1.bf16.xpose.msra.mxu0 %v1575
  %1579 = vmatprep.subr.bf16.mxu0 0
  %1580 = vmatpush1.bf16.xpose.msra.mxu0 0
  %1581 = vmatprep.subr.bf16.mxu0 0
  %1582 = vmatpush1.bf16.xpose.msra.mxu0 0
  %1583 = vmatprep.subr.bf16.mxu0 0
  %1584 = vmatpush1.bf16.xpose.msra.mxu0 0
  %1585 = vmatprep.subr.bf16.mxu0 0
  %1586 = vmatpush1.bf16.xpose.msra.mxu0 0
  %1587 = vmatprep.subr.bf16.mxu0 0
  %1588 = vmatpush1.bf16.xpose.msra.mxu0 0
  %1589 = vmatprep.subr.bf16.mxu0 0
  %1590 = vmatpush1.bf16.xpose.msra.mxu0 0
  %1591 = vmatprep.subr.bf16.mxu0 0
  %1592 = vmatpush1.bf16.xpose.msra.mxu0 0
  %1593 = vmatprep.subr.bf16.mxu0 0
  %1594 = vmatpush1.bf16.xpose.msra.mxu0 0
  %1595 = vmatprep.subr.bf16.mxu0 0
  %1596 = vmatpush1.bf16.xpose.msra.mxu0 0
  %1597 = vmatprep.subr.bf16.mxu0 0
  %1598 = vmatpush1.bf16.xpose.msra.mxu0 0
  %1599 = vmatprep.subr.bf16.mxu0 0
  %1600 = vmatpush1.bf16.xpose.msra.mxu0 0
  %1601 = vmatprep.subr.bf16.mxu0 0
  %1602 = vmatpush1.bf16.xpose.msra.mxu0 0
  %1603 = vmatprep.subr.bf16.mxu0 0
  %1604 = vmatpush1.bf16.xpose.msra.mxu0 0
  %1605 = vmatprep.subr.bf16.mxu0 0
  %1606 = vmatpush1.bf16.xpose.msra.mxu0 0
  %1607 = vmatprep.subr.bf16.mxu0 0
  %1608 = vmatpush1.bf16.xpose.msra.mxu0 0
  %1609 = vmatprep.mubr.bf16.mxu0 0
  %1610 = vmatmul.mubr.bf16.gmra.mrb[0].mxu0 %v1572
  %v1611 = vpop.f32.mrb[0].mxu0
  %v1612 = vadd.f32 0.0, %v1611
  %v1613 = vpop.f32.mrb[0].mxu0
  %v1614 = vpop.f32.mrb[0].mxu0
  %v1615 = vpop.f32.mrb[0].mxu0
  %1616 = vdwg.mxu0
  %v1617 = vmul.f32 %v1612, 0.35355338
  %v1618 = vsel %vm314, %v1617, -inf
  %1619 = vmax.xlane.f32.xlu0 %v1618
  %v1620 = vpop.xlane.xlu0 %1619
  %v1621 = vsub.f32 %v1617, %v1620
  %v1622 = vmul.f32 %v1621, 1.442695
  %v1623 = vpow.pop %v1622
  %v1624 = vsel %vm314, %v1623, 0.0
  %1625 = vadd.xlane.f32.xlu0 %v1624
  %v1626 = vpop.xlane.xlu0 %1625
  %v1627 = vrcp.pop %v1626
  %v1628 = vmul.f32 %v1623, %v1627
  %v1629 = vpack.c.bf16 %v1628, %v1628
  %s1630 = scalar_lea.vmem %s6, 36
  %v1631 = vld [vmem:[%s1630] sm:$0x3]
  %v1632 = vsel %vm329, %v1629, %v1631
  %1633 = vst [vmem:[%s1630] sm:$0x3] %v1632
  %1634 = vrot.lane.b32.xlu0 %v1566, 120
  %v1635 = vpop.permute.xlu0 %1634
  %1636 = vrot.lane.b32.xlu0 %v1570, 120
  %v1637 = vpop.permute.xlu0 %1636
  %v1639 = vsel %vm266, %v1635, 0
  %v1642 = vsel %vm266, %v1637, 0
  %1644 = vmatprep.subr.bf16.mxu0 0
  %1645 = vmatpush1.bf16.xpose.msra.mxu0 %v1642
  %1646 = vmatprep.subr.bf16.mxu0 0
  %1647 = vmatpush1.bf16.xpose.msra.mxu0 0
  %1648 = vmatprep.subr.bf16.mxu0 0
  %1649 = vmatpush1.bf16.xpose.msra.mxu0 0
  %1650 = vmatprep.subr.bf16.mxu0 0
  %1651 = vmatpush1.bf16.xpose.msra.mxu0 0
  %1652 = vmatprep.subr.bf16.mxu0 0
  %1653 = vmatpush1.bf16.xpose.msra.mxu0 0
  %1654 = vmatprep.subr.bf16.mxu0 0
  %1655 = vmatpush1.bf16.xpose.msra.mxu0 0
  %1656 = vmatprep.subr.bf16.mxu0 0
  %1657 = vmatpush1.bf16.xpose.msra.mxu0 0
  %1658 = vmatprep.subr.bf16.mxu0 0
  %1659 = vmatpush1.bf16.xpose.msra.mxu0 0
  %1660 = vmatprep.subr.bf16.mxu0 0
  %1661 = vmatpush1.bf16.xpose.msra.mxu0 0
  %1662 = vmatprep.subr.bf16.mxu0 0
  %1663 = vmatpush1.bf16.xpose.msra.mxu0 0
  %1664 = vmatprep.subr.bf16.mxu0 0
  %1665 = vmatpush1.bf16.xpose.msra.mxu0 0
  %1666 = vmatprep.subr.bf16.mxu0 0
  %1667 = vmatpush1.bf16.xpose.msra.mxu0 0
  %1668 = vmatprep.subr.bf16.mxu0 0
  %1669 = vmatpush1.bf16.xpose.msra.mxu0 0
  %1670 = vmatprep.subr.bf16.mxu0 0
  %1671 = vmatpush1.bf16.xpose.msra.mxu0 0
  %1672 = vmatprep.subr.bf16.mxu0 0
  %1673 = vmatpush1.bf16.xpose.msra.mxu0 0
  %1674 = vmatprep.subr.bf16.mxu0 0
  %1675 = vmatpush1.bf16.xpose.msra.mxu0 0
  %1676 = vmatprep.mubr.bf16.mxu0 0
  %1677 = vmatmul.mubr.bf16.gmra.mrb[0].mxu0 %v1639
  %v1678 = vpop.f32.mrb[0].mxu0
  %v1679 = vadd.f32 0.0, %v1678
  %v1680 = vpop.f32.mrb[0].mxu0
  %v1681 = vpop.f32.mrb[0].mxu0
  %v1682 = vpop.f32.mrb[0].mxu0
  %1683 = vdwg.mxu0
  %v1684 = vmul.f32 %v1679, 0.35355338
  %v1685 = vsel %vm314, %v1684, -inf
  %1686 = vmax.xlane.f32.xlu0 %v1685
  %v1687 = vpop.xlane.xlu0 %1686
  %v1688 = vsub.f32 %v1684, %v1687
  %v1689 = vmul.f32 %v1688, 1.442695
  %v1690 = vpow.pop %v1689
  %v1691 = vsel %vm314, %v1690, 0.0
  %1692 = vadd.xlane.f32.xlu0 %v1691
  %v1693 = vpop.xlane.xlu0 %1692
  %v1694 = vrcp.pop %v1693
  %v1695 = vmul.f32 %v1690, %v1694
  %v1696 = vpack.c.bf16 %v1695, %v1695
  %s1697 = scalar_lea.vmem %s6, 38
  %v1698 = vld [vmem:[%s1697] sm:$0x3]
  %v1699 = vsel %vm329, %v1696, %v1698
  %1700 = vst [vmem:[%s1697] sm:$0x3] %v1699
  // Predicated region
  $region26: #{prepare_static.5} parent=0 // pred_check
    _
  $region27: #{prepare_static.5} parent=0 // pred_check_branch
    %1702 = sbr.rel (0) target = $region29
  $region28: #{prepare_static.5} parent=0 // pred_region
    _
  $region29: #{prepare_static.5} parent=0 // pred_fallthru
    _
  // Predicated region
  $region30: #{prepare_static.5} parent=0 // pred_check
    _
  $region31: #{prepare_static.5} parent=0 // pred_check_branch
    %1704 = sbr.rel (0) target = $region33
  $region32: #{prepare_static.5} parent=0 // pred_region
    _
  $region33: #{prepare_static.5} parent=0 // pred_fallthru
    _

</llo_original>
